<compile_context>
chip_gen: v7x
topology: tpu7x:2x2x1
jax: 0.10.0
libtpu: 0.0.40
codegen_flags: <defaults>
</compile_context>

<pallas_src>
import jax
import jax.numpy as jnp
from jax import lax
from jax.experimental import pallas as pl
from jax.experimental.pallas import tpu as pltpu

EPS = 1e-5


# ----------------------------------------------------------------------------
# Fused Pallas kernel: whole forward for one batch element, resident in VMEM
# ----------------------------------------------------------------------------
def fused_cnn_kernel(x_ref,
                     w1_ref, a1_ref, s1_ref,
                     w2_ref, a2_ref, s2_ref,
                     w3_ref, a3_ref, s3_ref,
                     w4_ref, a4_ref, s4_ref,
                     w5_ref, a5_ref, s5_ref,
                     wf1_ref, bf1_ref, wf2_ref, bf2_ref,
                     o_ref,
                     pad_ref, im_ref):
    """Whole ComplexCNN forward for one batch element.

    x_ref   : (1, L0, 1)        raw input signal (NLC layout)
    w1_ref  : (5, C1)           layer-1 taps (Cin == 1) -> VPU path
    wN_ref  : (5*Cin, Cout)     im2col conv weights, row index = tap*Cin + cin   (N = 2..5)
    aN/sN   : (1, Cout)         folded BatchNorm scale / shift (conv bias folded into shift)
    wf1_ref : (L5, C5, H)       fc1 weight pre-sliced per spatial position (PyTorch (C,L) flatten)
    bf1_ref : (1, H)   wf2_ref : (H, NC)   bf2_ref : (1, NC)
    o_ref   : (1, 1, NC)
    pad_ref : VMEM scratch      zero-padded conv input of the current layer
    im_ref  : VMEM scratch      im2col patches of the current layer
    """
    f32 = jnp.float32
    l0 = x_ref.shape[1]
    c1 = w1_ref.shape[1]

    def bn_relu_pool(y, a_ref, s_ref):
        rows, cols = y.shape
        y = jnp.maximum(y * a_ref[...] + s_ref[...], 0.0)     # fused conv-bias + BN + ReLU
        return jnp.max(y.reshape(rows // 2, 2, cols), axis=1)  # MaxPool1d(kernel=2, stride=2)

    # ---- layer 1: Cin == 1 -> keep it on the VPU (5 scalar-weighted shifted adds) ----
    pad_ref[0:2, 0:1] = jnp.zeros((2, 1), f32)
    pad_ref[2 + l0:4 + l0, 0:1] = jnp.zeros((2, 1), f32)
    pad_ref[2:2 + l0, 0:1] = x_ref[0]                          # (L0, 1)
    y = jnp.zeros((l0, c1), f32)
    for t in range(5):
        y = y + pad_ref[t:t + l0, 0:1] * w1_ref[t:t + 1, :]    # (L0,1)*(1,C1) broadcast
    act = bn_relu_pool(y, a1_ref, s1_ref)

    # ---- layers 2..5: in-VMEM 'same' padding + im2col + single MXU matmul each ----
    def conv_block(act, w_ref, a_ref, s_ref):
        rows, cin = act.shape
        pad_ref[0:2, 0:cin] = jnp.zeros((2, cin), f32)
        pad_ref[2 + rows:4 + rows, 0:cin] = jnp.zeros((2, cin), f32)
        pad_ref[2:2 + rows, 0:cin] = act
        for t in range(5):                                     # gather the 5 taps lane-adjacent
            im_ref[0:rows, t * cin:(t + 1) * cin] = pad_ref[t:t + rows, 0:cin]
        y = jnp.dot(im_ref[0:rows, 0:5 * cin], w_ref[...],     # one (L,5Cin)@(5Cin,Cout) matmul
                    preferred_element_type=f32)
        return bn_relu_pool(y, a_ref, s_ref)

    act = conv_block(act, w2_ref, a2_ref, s2_ref)
    act = conv_block(act, w3_ref, a3_ref, s3_ref)
    act = conv_block(act, w4_ref, a4_ref, s4_ref)
    act = conv_block(act, w5_ref, a5_ref, s5_ref)

    # ---- fc1 (PyTorch (C, L)-order flatten via pre-sliced weight) -> dropout(eval) -> fc2 ----
    # TODO(synk): Dropout(p=0.5) runs in eval mode (identity); torch train-mode RNG masks omitted.
    l5 = wf1_ref.shape[0]
    h = bf1_ref[...]                                           # (1, H)
    for l in range(l5):
        h = h + jnp.dot(act[l:l + 1, :], wf1_ref[l], preferred_element_type=f32)
    o = jnp.dot(h, wf2_ref[...], preferred_element_type=f32) + bf2_ref[...]
    o_ref[0] = o.astype(o_ref.dtype)


# ----------------------------------------------------------------------------
# Wrapper: one pallas_call for the whole network
# ----------------------------------------------------------------------------
_WEIGHT_ORDER = ("w1", "a1", "s1", "w2", "a2", "s2", "w3", "a3", "s3",
                 "w4", "a4", "s4", "w5", "a5", "s5",
                 "wf1", "bf1", "wf2", "bf2")


def _round_up(x, m):
    return ((x + m - 1) // m) * m


def _full_spec(arr):
    nd = arr.ndim

    def index_map(b):
        return (0,) * nd

    return pl.BlockSpec(arr.shape, index_map)


def fused_cnn(x_nl1, prepped):
    """x_nl1: (N, L0, 1) input in NLC layout. Returns (N, num_classes)."""
    n, l0, _ = x_nl1.shape
    weights = [prepped[k] for k in _WEIGHT_ORDER]
    c_max = prepped["w5"].shape[0] // 5            # widest conv-input channel count
    num_classes = prepped["wf2"].shape[1]

    pad_rows = _round_up(l0 + 4, 8)
    pad_cols = _round_up(max(c_max, 1), 128)
    im_rows = _round_up(max(l0 // 2, 1), 8)
    im_cols = _round_up(5 * c_max, 128)

    out = pl.pallas_call(
        fused_cnn_kernel,
        out_shape=jax.ShapeDtypeStruct((n, 1, num_classes), jnp.float32),
        grid=(n,),
        in_specs=[pl.BlockSpec((1, l0, 1), lambda b: (b, 0, 0))]
                 + [_full_spec(w) for w in weights],
        out_specs=pl.BlockSpec((1, 1, num_classes), lambda b: (b, 0, 0)),
        scratch_shapes=[pltpu.VMEM((pad_rows, pad_cols), jnp.float32),
                        pltpu.VMEM((im_rows, im_cols), jnp.float32)],
        compiler_params=pltpu.CompilerParams(
            dimension_semantics=("parallel",)),
    )(x_nl1, *weights)
    return out[:, 0, :]


@jax.jit
def complex_cnn_forward(x_ncl, prepped):
    """Pallas forward. x_ncl: (N, 1, input_size), PyTorch NCL layout."""
    x_nl1 = jnp.transpose(x_ncl, (0, 2, 1))        # NCL -> NLC (Cin = 1)
    return fused_cnn(x_nl1, prepped)


# ----------------------------------------------------------------------------
# One-time weight preprocessing (outside the per-call forward)
# ----------------------------------------------------------------------------
def prepare_params(params, input_size):
    prepped = {}
    convs = params["convs"]

    # layer 1 (Cin == 1): tap-major (5, C1) weights for the VPU path
    w, b, gamma, beta, mean, var = convs[0]
    scale = gamma / jnp.sqrt(var + EPS)
    prepped["w1"] = jnp.transpose(w[:, 0, :], (1, 0))                  # (5, C1)
    prepped["a1"] = scale.reshape(1, -1)
    prepped["s1"] = ((b - mean) * scale + beta).reshape(1, -1)

    # layers 2..5: im2col weights, row index = tap*Cin + cin
    for i in range(1, 5):
        w, b, gamma, beta, mean, var = convs[i]
        c_out, c_in, k = w.shape
        scale = gamma / jnp.sqrt(var + EPS)
        prepped[f"w{i + 1}"] = jnp.transpose(w, (2, 1, 0)).reshape(k * c_in, c_out)
        prepped[f"a{i + 1}"] = scale.reshape(1, -1)
        prepped[f"s{i + 1}"] = ((b - mean) * scale + beta).reshape(1, -1)

    # fc1: PyTorch flattens (N, C, L) -> flat[c*L + l]; pre-slice the weight per position l
    w1, b1, w2, b2 = params["w1"], params["b1"], params["w2"], params["b2"]
    hdim = w1.shape[0]
    l5 = input_size // 2 ** 5
    c5 = w1.shape[1] // l5
    prepped["wf1"] = jnp.transpose(w1.reshape(hdim, c5, l5), (2, 1, 0))  # (L5, C5, H)
    prepped["bf1"] = b1.reshape(1, -1)
    prepped["wf2"] = w2.T                                               # (H, NC)
    prepped["bf2"] = b2.reshape(1, -1)
    return prepped


# ----------------------------------------------------------------------------
# Pure-JAX reference (mirrors the PyTorch module in eval mode)
# ----------------------------------------------------------------------------
def reference_forward(x_ncl, params):
    out = x_ncl
    for (w, b, gamma, beta, mean, var) in params["convs"]:
        out = lax.conv_general_dilated(
            out, w, window_strides=(1,), padding=((2, 2),),
            dimension_numbers=("NCH", "OIH", "NCH"))
        out = out + b[None, :, None]
        scale = gamma / jnp.sqrt(var + EPS)
        out = (out - mean[None, :, None]) * scale[None, :, None] + beta[None, :, None]
        out = jnp.maximum(out, 0.0)
        n, c, l = out.shape
        out = out.reshape(n, c, l // 2, 2).max(axis=3)
    flat = out.reshape(out.shape[0], -1)
    h = flat @ params["w1"].T + params["b1"]
    return h @ params["w2"].T + params["b2"]


# ----------------------------------------------------------------------------
# Deterministic parameter construction (synthetic, matches module __init__ shapes)
# ----------------------------------------------------------------------------
def make_params(key, input_size, hidden_size, num_classes):
    convs = []
    c_in = 1
    for i in range(5):
        c_out = hidden_size * (2 ** i)
        key, kw, kb, kg, kbe, km, kv = jax.random.split(key, 7)
        w = 0.1 * jax.random.normal(kw, (c_out, c_in, 5), jnp.float32)
        b = 0.1 * jax.random.normal(kb, (c_out,), jnp.float32)
        gamma = 1.0 + 0.1 * jax.random.normal(kg, (c_out,), jnp.float32)
        beta = 0.1 * jax.random.normal(kbe, (c_out,), jnp.float32)
        mean = 0.1 * jax.random.normal(km, (c_out,), jnp.float32)
        var = 0.5 + jnp.abs(jax.random.normal(kv, (c_out,), jnp.float32)) * 0.5
        convs.append((w, b, gamma, beta, mean, var))
        c_in = c_out

    fc_in = hidden_size * 16 * (input_size // 2 ** 5)
    key, k1, k2, k3, k4 = jax.random.split(key, 5)
    w1 = 0.05 * jax.random.normal(k1, (hidden_size * 8, fc_in), jnp.float32)
    b1 = 0.1 * jax.random.normal(k2, (hidden_size * 8,), jnp.float32)
    w2 = 0.05 * jax.random.normal(k3, (num_classes, hidden_size * 8), jnp.float32)
    b2 = 0.1 * jax.random.normal(k4, (num_classes,), jnp.float32)
    return {"convs": convs, "w1": w1, "b1": b1, "w2": w2, "b2": b2}


if __name__ == "__main__":
    batch = 2
    input_size = 64        # divisible by 2**5
    hidden_size = 8
    num_classes = 10

    key = jax.random.PRNGKey(0)
    key, kx = jax.random.split(key)
    x = jax.random.normal(kx, (batch, 1, input_size), jnp.float32)   # PyTorch NCL layout
    params = make_params(key, input_size, hidden_size, num_classes)

    prepped = prepare_params(params, input_size)   # one-time weight-side preprocessing

    out = complex_cnn_forward(x, prepped)
    out = jax.block_until_ready(out)

    ref = reference_forward(x, params)
    assert out.shape == (batch, num_classes), out.shape
    assert jnp.allclose(out, ref, rtol=2e-4, atol=2e-4), (
        f"max abs diff {jnp.max(jnp.abs(out - ref))}")

    print("KERNEL_OK")
</pallas_src>

<mosaic_0001>
module attributes {stable_mosaic.version = 11 : i64} {
  func.func @fused_cnn_kernel(%arg0: i32, %arg1: memref<1x64x1xf32, #tpu.memory_space<vmem>>, %arg2: memref<5x8xf32, #tpu.memory_space<vmem>>, %arg3: memref<1x8xf32, #tpu.memory_space<vmem>>, %arg4: memref<1x8xf32, #tpu.memory_space<vmem>>, %arg5: memref<40x16xf32, #tpu.memory_space<vmem>>, %arg6: memref<1x16xf32, #tpu.memory_space<vmem>>, %arg7: memref<1x16xf32, #tpu.memory_space<vmem>>, %arg8: memref<80x32xf32, #tpu.memory_space<vmem>>, %arg9: memref<1x32xf32, #tpu.memory_space<vmem>>, %arg10: memref<1x32xf32, #tpu.memory_space<vmem>>, %arg11: memref<160x64xf32, #tpu.memory_space<vmem>>, %arg12: memref<1x64xf32, #tpu.memory_space<vmem>>, %arg13: memref<1x64xf32, #tpu.memory_space<vmem>>, %arg14: memref<320x128xf32, #tpu.memory_space<vmem>>, %arg15: memref<1x128xf32, #tpu.memory_space<vmem>>, %arg16: memref<1x128xf32, #tpu.memory_space<vmem>>, %arg17: memref<2x128x64xf32, #tpu.memory_space<vmem>>, %arg18: memref<1x64xf32, #tpu.memory_space<vmem>>, %arg19: memref<64x10xf32, #tpu.memory_space<vmem>>, %arg20: memref<1x10xf32, #tpu.memory_space<vmem>>, %arg21: memref<1x1x10xf32, #tpu.memory_space<vmem>>, %arg22: memref<72x128xf32, #tpu.memory_space<vmem>>, %arg23: memref<32x384xf32, #tpu.memory_space<vmem>>) attributes {dimension_semantics = [#tpu.dimension_semantics<parallel>], iteration_bounds = array<i64: 2>, scalar_prefetch = 0 : i64, scratch_operands = 2 : i64, tpu.core_type = #tpu.core_type<tc>, window_params = [{transform_indices = @transform_0, window_bounds = array<i64: 1, 64, 1>}, {pipeline_mode = #tpu.pipeline_mode<synchronous>, transform_indices = @transform_1, window_bounds = array<i64: 5, 8>}, {pipeline_mode = #tpu.pipeline_mode<synchronous>, transform_indices = @transform_2, window_bounds = array<i64: 1, 8>}, {pipeline_mode = #tpu.pipeline_mode<synchronous>, transform_indices = @transform_3, window_bounds = array<i64: 1, 8>}, {pipeline_mode = #tpu.pipeline_mode<synchronous>, transform_indices = @transform_4, window_bounds = array<i64: 40, 16>}, {pipeline_mode = #tpu.pipeline_mode<synchronous>, transform_indices = @transform_5, window_bounds = array<i64: 1, 16>}, {pipeline_mode = #tpu.pipeline_mode<synchronous>, transform_indices = @transform_6, window_bounds = array<i64: 1, 16>}, {pipeline_mode = #tpu.pipeline_mode<synchronous>, transform_indices = @transform_7, window_bounds = array<i64: 80, 32>}, {pipeline_mode = #tpu.pipeline_mode<synchronous>, transform_indices = @transform_8, window_bounds = array<i64: 1, 32>}, {pipeline_mode = #tpu.pipeline_mode<synchronous>, transform_indices = @transform_9, window_bounds = array<i64: 1, 32>}, {pipeline_mode = #tpu.pipeline_mode<synchronous>, transform_indices = @transform_10, window_bounds = array<i64: 160, 64>}, {pipeline_mode = #tpu.pipeline_mode<synchronous>, transform_indices = @transform_11, window_bounds = array<i64: 1, 64>}, {pipeline_mode = #tpu.pipeline_mode<synchronous>, transform_indices = @transform_12, window_bounds = array<i64: 1, 64>}, {pipeline_mode = #tpu.pipeline_mode<synchronous>, transform_indices = @transform_13, window_bounds = array<i64: 320, 128>}, {pipeline_mode = #tpu.pipeline_mode<synchronous>, transform_indices = @transform_14, window_bounds = array<i64: 1, 128>}, {pipeline_mode = #tpu.pipeline_mode<synchronous>, transform_indices = @transform_15, window_bounds = array<i64: 1, 128>}, {pipeline_mode = #tpu.pipeline_mode<synchronous>, transform_indices = @transform_16, window_bounds = array<i64: 2, 128, 64>}, {pipeline_mode = #tpu.pipeline_mode<synchronous>, transform_indices = @transform_17, window_bounds = array<i64: 1, 64>}, {pipeline_mode = #tpu.pipeline_mode<synchronous>, transform_indices = @transform_18, window_bounds = array<i64: 64, 10>}, {pipeline_mode = #tpu.pipeline_mode<synchronous>, transform_indices = @transform_19, window_bounds = array<i64: 1, 10>}, {transform_indices = @transform_20, window_bounds = array<i64: 1, 1, 10>}]} {
    %cst = arith.constant 0.000000e+00 : f32
    %0 = vector.broadcast %cst : f32 to vector<2x1xf32>
    %c0 = arith.constant 0 : index
    %c0_0 = arith.constant 0 : index
    %1 = vector.load %arg22[%c0, %c0_0] : memref<72x128xf32, #tpu.memory_space<vmem>>, vector<2x1xf32>
    tpu.vector_store %arg22[%c0, %c0_0], %0 {strides = array<i32>} : memref<72x128xf32, #tpu.memory_space<vmem>>, vector<2x1xf32>,
    %cst_1 = arith.constant 0.000000e+00 : f32
    %2 = vector.broadcast %cst_1 : f32 to vector<2x1xf32>
    %c66 = arith.constant 66 : index
    %c0_2 = arith.constant 0 : index
    %3 = vector.load %arg22[%c66, %c0_2] : memref<72x128xf32, #tpu.memory_space<vmem>>, vector<2x1xf32>
    tpu.vector_store %arg22[%c66, %c0_2], %2 {strides = array<i32>} : memref<72x128xf32, #tpu.memory_space<vmem>>, vector<2x1xf32>,
    %c0_3 = arith.constant 0 : index
    %c0_4 = arith.constant 0 : index
    %c0_5 = arith.constant 0 : index
    %4 = vector.load %arg1[%c0_3, %c0_4, %c0_5] : memref<1x64x1xf32, #tpu.memory_space<vmem>>, vector<1x64x1xf32>
    %5 = vector.shape_cast %4 : vector<1x64x1xf32> to vector<64x1xf32>
    %c2 = arith.constant 2 : index
    %c0_6 = arith.constant 0 : index
    %6 = vector.load %arg22[%c2, %c0_6] : memref<72x128xf32, #tpu.memory_space<vmem>>, vector<64x1xf32>
    tpu.vector_store %arg22[%c2, %c0_6], %5 {strides = array<i32>} : memref<72x128xf32, #tpu.memory_space<vmem>>, vector<64x1xf32>,
    %cst_7 = arith.constant 0.000000e+00 : f32
    %7 = vector.broadcast %cst_7 : f32 to vector<64x8xf32>
    %c0_8 = arith.constant 0 : index
    %c0_9 = arith.constant 0 : index
    %8 = vector.load %arg22[%c0_8, %c0_9] : memref<72x128xf32, #tpu.memory_space<vmem>>, vector<64x1xf32>
    %c0_10 = arith.constant 0 : index
    %c0_11 = arith.constant 0 : index
    %9 = vector.load %arg2[%c0_10, %c0_11] : memref<5x8xf32, #tpu.memory_space<vmem>>, vector<1x8xf32>
    %10 = vector.broadcast %8 : vector<64x1xf32> to vector<64x8xf32>
    %11 = vector.broadcast %9 : vector<1x8xf32> to vector<64x8xf32>
    %12 = arith.mulf %10, %11 : vector<64x8xf32>
    %13 = arith.addf %7, %12 : vector<64x8xf32>
    %c1 = arith.constant 1 : index
    %c0_12 = arith.constant 0 : index
    %14 = vector.load %arg22[%c1, %c0_12] : memref<72x128xf32, #tpu.memory_space<vmem>>, vector<64x1xf32>
    %c1_13 = arith.constant 1 : index
    %c0_14 = arith.constant 0 : index
    %15 = vector.load %arg2[%c1_13, %c0_14] : memref<5x8xf32, #tpu.memory_space<vmem>>, vector<1x8xf32>
    %16 = vector.broadcast %14 : vector<64x1xf32> to vector<64x8xf32>
    %17 = vector.broadcast %15 : vector<1x8xf32> to vector<64x8xf32>
    %18 = arith.mulf %16, %17 : vector<64x8xf32>
    %19 = arith.addf %13, %18 : vector<64x8xf32>
    %c2_15 = arith.constant 2 : index
    %c0_16 = arith.constant 0 : index
    %20 = vector.load %arg22[%c2_15, %c0_16] : memref<72x128xf32, #tpu.memory_space<vmem>>, vector<64x1xf32>
    %c2_17 = arith.constant 2 : index
    %c0_18 = arith.constant 0 : index
    %21 = vector.load %arg2[%c2_17, %c0_18] : memref<5x8xf32, #tpu.memory_space<vmem>>, vector<1x8xf32>
    %22 = vector.broadcast %20 : vector<64x1xf32> to vector<64x8xf32>
    %23 = vector.broadcast %21 : vector<1x8xf32> to vector<64x8xf32>
    %24 = arith.mulf %22, %23 : vector<64x8xf32>
    %25 = arith.addf %19, %24 : vector<64x8xf32>
    %c3 = arith.constant 3 : index
    %c0_19 = arith.constant 0 : index
    %26 = vector.load %arg22[%c3, %c0_19] : memref<72x128xf32, #tpu.memory_space<vmem>>, vector<64x1xf32>
    %c3_20 = arith.constant 3 : index
    %c0_21 = arith.constant 0 : index
    %27 = vector.load %arg2[%c3_20, %c0_21] : memref<5x8xf32, #tpu.memory_space<vmem>>, vector<1x8xf32>
    %28 = vector.broadcast %26 : vector<64x1xf32> to vector<64x8xf32>
    %29 = vector.broadcast %27 : vector<1x8xf32> to vector<64x8xf32>
    %30 = arith.mulf %28, %29 : vector<64x8xf32>
    %31 = arith.addf %25, %30 : vector<64x8xf32>
    %c4 = arith.constant 4 : index
    %c0_22 = arith.constant 0 : index
    %32 = vector.load %arg22[%c4, %c0_22] : memref<72x128xf32, #tpu.memory_space<vmem>>, vector<64x1xf32>
    %c4_23 = arith.constant 4 : index
    %c0_24 = arith.constant 0 : index
    %33 = vector.load %arg2[%c4_23, %c0_24] : memref<5x8xf32, #tpu.memory_space<vmem>>, vector<1x8xf32>
    %34 = vector.broadcast %32 : vector<64x1xf32> to vector<64x8xf32>
    %35 = vector.broadcast %33 : vector<1x8xf32> to vector<64x8xf32>
    %36 = arith.mulf %34, %35 : vector<64x8xf32>
    %37 = arith.addf %31, %36 : vector<64x8xf32>
    %c0_25 = arith.constant 0 : index
    %c0_26 = arith.constant 0 : index
    %38 = vector.load %arg3[%c0_25, %c0_26] : memref<1x8xf32, #tpu.memory_space<vmem>>, vector<1x8xf32>
    %39 = vector.broadcast %38 : vector<1x8xf32> to vector<64x8xf32>
    %40 = arith.mulf %37, %39 : vector<64x8xf32>
    %c0_27 = arith.constant 0 : index
    %c0_28 = arith.constant 0 : index
    %41 = vector.load %arg4[%c0_27, %c0_28] : memref<1x8xf32, #tpu.memory_space<vmem>>, vector<1x8xf32>
    %42 = vector.broadcast %41 : vector<1x8xf32> to vector<64x8xf32>
    %43 = arith.addf %40, %42 : vector<64x8xf32>
    %cst_29 = arith.constant 0.000000e+00 : f32
    %44 = vector.broadcast %cst_29 : f32 to vector<64x8xf32>
    %45 = arith.maximumf %43, %44 : vector<64x8xf32>
    %46 = vector.shape_cast %45 : vector<64x8xf32> to vector<32x2x8xf32>
    %cst_30 = arith.constant dense<0xFF800000> : vector<32x8xf32>
    %47 = vector.multi_reduction <maximumf>, %46, %cst_30 [1] : vector<32x2x8xf32> to vector<32x8xf32>
    %cst_31 = arith.constant 0.000000e+00 : f32
    %48 = vector.broadcast %cst_31 : f32 to vector<2x8xf32>
    %c0_32 = arith.constant 0 : index
    %c0_33 = arith.constant 0 : index
    %49 = vector.load %arg22[%c0_32, %c0_33] : memref<72x128xf32, #tpu.memory_space<vmem>>, vector<2x8xf32>
    tpu.vector_store %arg22[%c0_32, %c0_33], %48 {strides = array<i32>} : memref<72x128xf32, #tpu.memory_space<vmem>>, vector<2x8xf32>,
    %cst_34 = arith.constant 0.000000e+00 : f32
    %50 = vector.broadcast %cst_34 : f32 to vector<2x8xf32>
    %c34 = arith.constant 34 : index
    %c0_35 = arith.constant 0 : index
    %51 = vector.load %arg22[%c34, %c0_35] : memref<72x128xf32, #tpu.memory_space<vmem>>, vector<2x8xf32>
    tpu.vector_store %arg22[%c34, %c0_35], %50 {strides = array<i32>} : memref<72x128xf32, #tpu.memory_space<vmem>>, vector<2x8xf32>,
    %c2_36 = arith.constant 2 : index
    %c0_37 = arith.constant 0 : index
    %52 = vector.load %arg22[%c2_36, %c0_37] : memref<72x128xf32, #tpu.memory_space<vmem>>, vector<32x8xf32>
    tpu.vector_store %arg22[%c2_36, %c0_37], %47 {strides = array<i32>} : memref<72x128xf32, #tpu.memory_space<vmem>>, vector<32x8xf32>,
    %c0_38 = arith.constant 0 : index
    %c0_39 = arith.constant 0 : index
    %53 = vector.load %arg22[%c0_38, %c0_39] : memref<72x128xf32, #tpu.memory_space<vmem>>, vector<32x8xf32>
    %c0_40 = arith.constant 0 : index
    %c0_41 = arith.constant 0 : index
    %54 = vector.load %arg23[%c0_40, %c0_41] : memref<32x384xf32, #tpu.memory_space<vmem>>, vector<32x8xf32>
    tpu.vector_store %arg23[%c0_40, %c0_41], %53 {strides = array<i32>} : memref<32x384xf32, #tpu.memory_space<vmem>>, vector<32x8xf32>,
    %c1_42 = arith.constant 1 : index
    %c0_43 = arith.constant 0 : index
    %55 = vector.load %arg22[%c1_42, %c0_43] : memref<72x128xf32, #tpu.memory_space<vmem>>, vector<32x8xf32>
    %c0_44 = arith.constant 0 : index
    %c8 = arith.constant 8 : index
    %56 = vector.load %arg23[%c0_44, %c8] : memref<32x384xf32, #tpu.memory_space<vmem>>, vector<32x8xf32>
    tpu.vector_store %arg23[%c0_44, %c8], %55 {strides = array<i32>} : memref<32x384xf32, #tpu.memory_space<vmem>>, vector<32x8xf32>,
    %c2_45 = arith.constant 2 : index
    %c0_46 = arith.constant 0 : index
    %57 = vector.load %arg22[%c2_45, %c0_46] : memref<72x128xf32, #tpu.memory_space<vmem>>, vector<32x8xf32>
    %c0_47 = arith.constant 0 : index
    %c16 = arith.constant 16 : index
    %58 = vector.load %arg23[%c0_47, %c16] : memref<32x384xf32, #tpu.memory_space<vmem>>, vector<32x8xf32>
    tpu.vector_store %arg23[%c0_47, %c16], %57 {strides = array<i32>} : memref<32x384xf32, #tpu.memory_space<vmem>>, vector<32x8xf32>,
    %c3_48 = arith.constant 3 : index
    %c0_49 = arith.constant 0 : index
    %59 = vector.load %arg22[%c3_48, %c0_49] : memref<72x128xf32, #tpu.memory_space<vmem>>, vector<32x8xf32>
    %c0_50 = arith.constant 0 : index
    %c24 = arith.constant 24 : index
    %60 = vector.load %arg23[%c0_50, %c24] : memref<32x384xf32, #tpu.memory_space<vmem>>, vector<32x8xf32>
    tpu.vector_store %arg23[%c0_50, %c24], %59 {strides = array<i32>} : memref<32x384xf32, #tpu.memory_space<vmem>>, vector<32x8xf32>,
    %c4_51 = arith.constant 4 : index
    %c0_52 = arith.constant 0 : index
    %61 = vector.load %arg22[%c4_51, %c0_52] : memref<72x128xf32, #tpu.memory_space<vmem>>, vector<32x8xf32>
    %c0_53 = arith.constant 0 : index
    %c32 = arith.constant 32 : index
    %62 = vector.load %arg23[%c0_53, %c32] : memref<32x384xf32, #tpu.memory_space<vmem>>, vector<32x8xf32>
    tpu.vector_store %arg23[%c0_53, %c32], %61 {strides = array<i32>} : memref<32x384xf32, #tpu.memory_space<vmem>>, vector<32x8xf32>,
    %c0_54 = arith.constant 0 : index
    %c0_55 = arith.constant 0 : index
    %63 = vector.load %arg23[%c0_54, %c0_55] : memref<32x384xf32, #tpu.memory_space<vmem>>, vector<32x40xf32>
    %c0_56 = arith.constant 0 : index
    %c0_57 = arith.constant 0 : index
    %64 = vector.load %arg5[%c0_56, %c0_57] : memref<40x16xf32, #tpu.memory_space<vmem>>, vector<40x16xf32>
    %cst_58 = arith.constant dense<0.000000e+00> : vector<32x16xf32>
    %65 = tpu.matmul %63, %64, %cst_58 {dimension_numbers = #tpu.dot_dimension_numbers<[1], [0], [0], [1], [0, 0, 1, 1], [], []>} : vector<32x40xf32>, vector<40x16xf32>, vector<32x16xf32> -> vector<32x16xf32>
    %c0_59 = arith.constant 0 : index
    %c0_60 = arith.constant 0 : index
    %66 = vector.load %arg6[%c0_59, %c0_60] : memref<1x16xf32, #tpu.memory_space<vmem>>, vector<1x16xf32>
    %67 = vector.broadcast %66 : vector<1x16xf32> to vector<32x16xf32>
    %68 = arith.mulf %65, %67 : vector<32x16xf32>
    %c0_61 = arith.constant 0 : index
    %c0_62 = arith.constant 0 : index
    %69 = vector.load %arg7[%c0_61, %c0_62] : memref<1x16xf32, #tpu.memory_space<vmem>>, vector<1x16xf32>
    %70 = vector.broadcast %69 : vector<1x16xf32> to vector<32x16xf32>
    %71 = arith.addf %68, %70 : vector<32x16xf32>
    %cst_63 = arith.constant 0.000000e+00 : f32
    %72 = vector.broadcast %cst_63 : f32 to vector<32x16xf32>
    %73 = arith.maximumf %71, %72 : vector<32x16xf32>
    %74 = vector.shape_cast %73 : vector<32x16xf32> to vector<16x2x16xf32>
    %cst_64 = arith.constant dense<0xFF800000> : vector<16x16xf32>
    %75 = vector.multi_reduction <maximumf>, %74, %cst_64 [1] : vector<16x2x16xf32> to vector<16x16xf32>
    %cst_65 = arith.constant 0.000000e+00 : f32
    %76 = vector.broadcast %cst_65 : f32 to vector<2x16xf32>
    %c0_66 = arith.constant 0 : index
    %c0_67 = arith.constant 0 : index
    %77 = vector.load %arg22[%c0_66, %c0_67] : memref<72x128xf32, #tpu.memory_space<vmem>>, vector<2x16xf32>
    tpu.vector_store %arg22[%c0_66, %c0_67], %76 {strides = array<i32>} : memref<72x128xf32, #tpu.memory_space<vmem>>, vector<2x16xf32>,
    %cst_68 = arith.constant 0.000000e+00 : f32
    %78 = vector.broadcast %cst_68 : f32 to vector<2x16xf32>
    %c18 = arith.constant 18 : index
    %c0_69 = arith.constant 0 : index
    %79 = vector.load %arg22[%c18, %c0_69] : memref<72x128xf32, #tpu.memory_space<vmem>>, vector<2x16xf32>
    tpu.vector_store %arg22[%c18, %c0_69], %78 {strides = array<i32>} : memref<72x128xf32, #tpu.memory_space<vmem>>, vector<2x16xf32>,
    %c2_70 = arith.constant 2 : index
    %c0_71 = arith.constant 0 : index
    %80 = vector.load %arg22[%c2_70, %c0_71] : memref<72x128xf32, #tpu.memory_space<vmem>>, vector<16x16xf32>
    tpu.vector_store %arg22[%c2_70, %c0_71], %75 {strides = array<i32>} : memref<72x128xf32, #tpu.memory_space<vmem>>, vector<16x16xf32>,
    %c0_72 = arith.constant 0 : index
    %c0_73 = arith.constant 0 : index
    %81 = vector.load %arg22[%c0_72, %c0_73] : memref<72x128xf32, #tpu.memory_space<vmem>>, vector<16x16xf32>
    %c0_74 = arith.constant 0 : index
    %c0_75 = arith.constant 0 : index
    %82 = vector.load %arg23[%c0_74, %c0_75] : memref<32x384xf32, #tpu.memory_space<vmem>>, vector<16x16xf32>
    tpu.vector_store %arg23[%c0_74, %c0_75], %81 {strides = array<i32>} : memref<32x384xf32, #tpu.memory_space<vmem>>, vector<16x16xf32>,
    %c1_76 = arith.constant 1 : index
    %c0_77 = arith.constant 0 : index
    %83 = vector.load %arg22[%c1_76, %c0_77] : memref<72x128xf32, #tpu.memory_space<vmem>>, vector<16x16xf32>
    %c0_78 = arith.constant 0 : index
    %c16_79 = arith.constant 16 : index
    %84 = vector.load %arg23[%c0_78, %c16_79] : memref<32x384xf32, #tpu.memory_space<vmem>>, vector<16x16xf32>
    tpu.vector_store %arg23[%c0_78, %c16_79], %83 {strides = array<i32>} : memref<32x384xf32, #tpu.memory_space<vmem>>, vector<16x16xf32>,
    %c2_80 = arith.constant 2 : index
    %c0_81 = arith.constant 0 : index
    %85 = vector.load %arg22[%c2_80, %c0_81] : memref<72x128xf32, #tpu.memory_space<vmem>>, vector<16x16xf32>
    %c0_82 = arith.constant 0 : index
    %c32_83 = arith.constant 32 : index
    %86 = vector.load %arg23[%c0_82, %c32_83] : memref<32x384xf32, #tpu.memory_space<vmem>>, vector<16x16xf32>
    tpu.vector_store %arg23[%c0_82, %c32_83], %85 {strides = array<i32>} : memref<32x384xf32, #tpu.memory_space<vmem>>, vector<16x16xf32>,
    %c3_84 = arith.constant 3 : index
    %c0_85 = arith.constant 0 : index
    %87 = vector.load %arg22[%c3_84, %c0_85] : memref<72x128xf32, #tpu.memory_space<vmem>>, vector<16x16xf32>
    %c0_86 = arith.constant 0 : index
    %c48 = arith.constant 48 : index
    %88 = vector.load %arg23[%c0_86, %c48] : memref<32x384xf32, #tpu.memory_space<vmem>>, vector<16x16xf32>
    tpu.vector_store %arg23[%c0_86, %c48], %87 {strides = array<i32>} : memref<32x384xf32, #tpu.memory_space<vmem>>, vector<16x16xf32>,
    %c4_87 = arith.constant 4 : index
    %c0_88 = arith.constant 0 : index
    %89 = vector.load %arg22[%c4_87, %c0_88] : memref<72x128xf32, #tpu.memory_space<vmem>>, vector<16x16xf32>
    %c0_89 = arith.constant 0 : index
    %c64 = arith.constant 64 : index
    %90 = vector.load %arg23[%c0_89, %c64] : memref<32x384xf32, #tpu.memory_space<vmem>>, vector<16x16xf32>
    tpu.vector_store %arg23[%c0_89, %c64], %89 {strides = array<i32>} : memref<32x384xf32, #tpu.memory_space<vmem>>, vector<16x16xf32>,
    %c0_90 = arith.constant 0 : index
    %c0_91 = arith.constant 0 : index
    %91 = vector.load %arg23[%c0_90, %c0_91] : memref<32x384xf32, #tpu.memory_space<vmem>>, vector<16x80xf32>
    %c0_92 = arith.constant 0 : index
    %c0_93 = arith.constant 0 : index
    %92 = vector.load %arg8[%c0_92, %c0_93] : memref<80x32xf32, #tpu.memory_space<vmem>>, vector<80x32xf32>
    %cst_94 = arith.constant dense<0.000000e+00> : vector<16x32xf32>
    %93 = tpu.matmul %91, %92, %cst_94 {dimension_numbers = #tpu.dot_dimension_numbers<[1], [0], [0], [1], [0, 0, 1, 1], [], []>} : vector<16x80xf32>, vector<80x32xf32>, vector<16x32xf32> -> vector<16x32xf32>
    %c0_95 = arith.constant 0 : index
    %c0_96 = arith.constant 0 : index
    %94 = vector.load %arg9[%c0_95, %c0_96] : memref<1x32xf32, #tpu.memory_space<vmem>>, vector<1x32xf32>
    %95 = vector.broadcast %94 : vector<1x32xf32> to vector<16x32xf32>
    %96 = arith.mulf %93, %95 : vector<16x32xf32>
    %c0_97 = arith.constant 0 : index
    %c0_98 = arith.constant 0 : index
    %97 = vector.load %arg10[%c0_97, %c0_98] : memref<1x32xf32, #tpu.memory_space<vmem>>, vector<1x32xf32>
    %98 = vector.broadcast %97 : vector<1x32xf32> to vector<16x32xf32>
    %99 = arith.addf %96, %98 : vector<16x32xf32>
    %cst_99 = arith.constant 0.000000e+00 : f32
    %100 = vector.broadcast %cst_99 : f32 to vector<16x32xf32>
    %101 = arith.maximumf %99, %100 : vector<16x32xf32>
    %102 = vector.shape_cast %101 : vector<16x32xf32> to vector<8x2x32xf32>
    %cst_100 = arith.constant dense<0xFF800000> : vector<8x32xf32>
    %103 = vector.multi_reduction <maximumf>, %102, %cst_100 [1] : vector<8x2x32xf32> to vector<8x32xf32>
    %cst_101 = arith.constant 0.000000e+00 : f32
    %104 = vector.broadcast %cst_101 : f32 to vector<2x32xf32>
    %c0_102 = arith.constant 0 : index
    %c0_103 = arith.constant 0 : index
    %105 = vector.load %arg22[%c0_102, %c0_103] : memref<72x128xf32, #tpu.memory_space<vmem>>, vector<2x32xf32>
    tpu.vector_store %arg22[%c0_102, %c0_103], %104 {strides = array<i32>} : memref<72x128xf32, #tpu.memory_space<vmem>>, vector<2x32xf32>,
    %cst_104 = arith.constant 0.000000e+00 : f32
    %106 = vector.broadcast %cst_104 : f32 to vector<2x32xf32>
    %c10 = arith.constant 10 : index
    %c0_105 = arith.constant 0 : index
    %107 = vector.load %arg22[%c10, %c0_105] : memref<72x128xf32, #tpu.memory_space<vmem>>, vector<2x32xf32>
    tpu.vector_store %arg22[%c10, %c0_105], %106 {strides = array<i32>} : memref<72x128xf32, #tpu.memory_space<vmem>>, vector<2x32xf32>,
    %c2_106 = arith.constant 2 : index
    %c0_107 = arith.constant 0 : index
    %108 = vector.load %arg22[%c2_106, %c0_107] : memref<72x128xf32, #tpu.memory_space<vmem>>, vector<8x32xf32>
    tpu.vector_store %arg22[%c2_106, %c0_107], %103 {strides = array<i32>} : memref<72x128xf32, #tpu.memory_space<vmem>>, vector<8x32xf32>,
    %c0_108 = arith.constant 0 : index
    %c0_109 = arith.constant 0 : index
    %109 = vector.load %arg22[%c0_108, %c0_109] : memref<72x128xf32, #tpu.memory_space<vmem>>, vector<8x32xf32>
    %c0_110 = arith.constant 0 : index
    %c0_111 = arith.constant 0 : index
    %110 = vector.load %arg23[%c0_110, %c0_111] : memref<32x384xf32, #tpu.memory_space<vmem>>, vector<8x32xf32>
    tpu.vector_store %arg23[%c0_110, %c0_111], %109 {strides = array<i32>} : memref<32x384xf32, #tpu.memory_space<vmem>>, vector<8x32xf32>,
    %c1_112 = arith.constant 1 : index
    %c0_113 = arith.constant 0 : index
    %111 = vector.load %arg22[%c1_112, %c0_113] : memref<72x128xf32, #tpu.memory_space<vmem>>, vector<8x32xf32>
    %c0_114 = arith.constant 0 : index
    %c32_115 = arith.constant 32 : index
    %112 = vector.load %arg23[%c0_114, %c32_115] : memref<32x384xf32, #tpu.memory_space<vmem>>, vector<8x32xf32>
    tpu.vector_store %arg23[%c0_114, %c32_115], %111 {strides = array<i32>} : memref<32x384xf32, #tpu.memory_space<vmem>>, vector<8x32xf32>,
    %c2_116 = arith.constant 2 : index
    %c0_117 = arith.constant 0 : index
    %113 = vector.load %arg22[%c2_116, %c0_117] : memref<72x128xf32, #tpu.memory_space<vmem>>, vector<8x32xf32>
    %c0_118 = arith.constant 0 : index
    %c64_119 = arith.constant 64 : index
    %114 = vector.load %arg23[%c0_118, %c64_119] : memref<32x384xf32, #tpu.memory_space<vmem>>, vector<8x32xf32>
    tpu.vector_store %arg23[%c0_118, %c64_119], %113 {strides = array<i32>} : memref<32x384xf32, #tpu.memory_space<vmem>>, vector<8x32xf32>,
    %c3_120 = arith.constant 3 : index
    %c0_121 = arith.constant 0 : index
    %115 = vector.load %arg22[%c3_120, %c0_121] : memref<72x128xf32, #tpu.memory_space<vmem>>, vector<8x32xf32>
    %c0_122 = arith.constant 0 : index
    %c96 = arith.constant 96 : index
    %116 = vector.load %arg23[%c0_122, %c96] : memref<32x384xf32, #tpu.memory_space<vmem>>, vector<8x32xf32>
    tpu.vector_store %arg23[%c0_122, %c96], %115 {strides = array<i32>} : memref<32x384xf32, #tpu.memory_space<vmem>>, vector<8x32xf32>,
    %c4_123 = arith.constant 4 : index
    %c0_124 = arith.constant 0 : index
    %117 = vector.load %arg22[%c4_123, %c0_124] : memref<72x128xf32, #tpu.memory_space<vmem>>, vector<8x32xf32>
    %c0_125 = arith.constant 0 : index
    %c128 = arith.constant 128 : index
    %118 = vector.load %arg23[%c0_125, %c128] : memref<32x384xf32, #tpu.memory_space<vmem>>, vector<8x32xf32>
    tpu.vector_store %arg23[%c0_125, %c128], %117 {strides = array<i32>} : memref<32x384xf32, #tpu.memory_space<vmem>>, vector<8x32xf32>,
    %c0_126 = arith.constant 0 : index
    %c0_127 = arith.constant 0 : index
    %119 = vector.load %arg23[%c0_126, %c0_127] : memref<32x384xf32, #tpu.memory_space<vmem>>, vector<8x160xf32>
    %c0_128 = arith.constant 0 : index
    %c0_129 = arith.constant 0 : index
    %120 = vector.load %arg11[%c0_128, %c0_129] : memref<160x64xf32, #tpu.memory_space<vmem>>, vector<160x64xf32>
    %cst_130 = arith.constant dense<0.000000e+00> : vector<8x64xf32>
    %121 = tpu.matmul %119, %120, %cst_130 {dimension_numbers = #tpu.dot_dimension_numbers<[1], [0], [0], [1], [0, 0, 1, 1], [], []>} : vector<8x160xf32>, vector<160x64xf32>, vector<8x64xf32> -> vector<8x64xf32>
    %c0_131 = arith.constant 0 : index
    %c0_132 = arith.constant 0 : index
    %122 = vector.load %arg12[%c0_131, %c0_132] : memref<1x64xf32, #tpu.memory_space<vmem>>, vector<1x64xf32>
    %123 = vector.broadcast %122 : vector<1x64xf32> to vector<8x64xf32>
    %124 = arith.mulf %121, %123 : vector<8x64xf32>
    %c0_133 = arith.constant 0 : index
    %c0_134 = arith.constant 0 : index
    %125 = vector.load %arg13[%c0_133, %c0_134] : memref<1x64xf32, #tpu.memory_space<vmem>>, vector<1x64xf32>
    %126 = vector.broadcast %125 : vector<1x64xf32> to vector<8x64xf32>
    %127 = arith.addf %124, %126 : vector<8x64xf32>
    %cst_135 = arith.constant 0.000000e+00 : f32
    %128 = vector.broadcast %cst_135 : f32 to vector<8x64xf32>
    %129 = arith.maximumf %127, %128 : vector<8x64xf32>
    %130 = vector.shape_cast %129 : vector<8x64xf32> to vector<4x2x64xf32>
    %cst_136 = arith.constant dense<0xFF800000> : vector<4x64xf32>
    %131 = vector.multi_reduction <maximumf>, %130, %cst_136 [1] : vector<4x2x64xf32> to vector<4x64xf32>
    %cst_137 = arith.constant 0.000000e+00 : f32
    %132 = vector.broadcast %cst_137 : f32 to vector<2x64xf32>
    %c0_138 = arith.constant 0 : index
    %c0_139 = arith.constant 0 : index
    %133 = vector.load %arg22[%c0_138, %c0_139] : memref<72x128xf32, #tpu.memory_space<vmem>>, vector<2x64xf32>
    tpu.vector_store %arg22[%c0_138, %c0_139], %132 {strides = array<i32>} : memref<72x128xf32, #tpu.memory_space<vmem>>, vector<2x64xf32>,
    %cst_140 = arith.constant 0.000000e+00 : f32
    %134 = vector.broadcast %cst_140 : f32 to vector<2x64xf32>
    %c6 = arith.constant 6 : index
    %c0_141 = arith.constant 0 : index
    %135 = vector.load %arg22[%c6, %c0_141] : memref<72x128xf32, #tpu.memory_space<vmem>>, vector<2x64xf32>
    tpu.vector_store %arg22[%c6, %c0_141], %134 {strides = array<i32>} : memref<72x128xf32, #tpu.memory_space<vmem>>, vector<2x64xf32>,
    %c2_142 = arith.constant 2 : index
    %c0_143 = arith.constant 0 : index
    %136 = vector.load %arg22[%c2_142, %c0_143] : memref<72x128xf32, #tpu.memory_space<vmem>>, vector<4x64xf32>
    tpu.vector_store %arg22[%c2_142, %c0_143], %131 {strides = array<i32>} : memref<72x128xf32, #tpu.memory_space<vmem>>, vector<4x64xf32>,
    %c0_144 = arith.constant 0 : index
    %c0_145 = arith.constant 0 : index
    %137 = vector.load %arg22[%c0_144, %c0_145] : memref<72x128xf32, #tpu.memory_space<vmem>>, vector<4x64xf32>
    %c0_146 = arith.constant 0 : index
    %c0_147 = arith.constant 0 : index
    %138 = vector.load %arg23[%c0_146, %c0_147] : memref<32x384xf32, #tpu.memory_space<vmem>>, vector<4x64xf32>
    tpu.vector_store %arg23[%c0_146, %c0_147], %137 {strides = array<i32>} : memref<32x384xf32, #tpu.memory_space<vmem>>, vector<4x64xf32>,
    %c1_148 = arith.constant 1 : index
    %c0_149 = arith.constant 0 : index
    %139 = vector.load %arg22[%c1_148, %c0_149] : memref<72x128xf32, #tpu.memory_space<vmem>>, vector<4x64xf32>
    %c0_150 = arith.constant 0 : index
    %c64_151 = arith.constant 64 : index
    %140 = vector.load %arg23[%c0_150, %c64_151] : memref<32x384xf32, #tpu.memory_space<vmem>>, vector<4x64xf32>
    tpu.vector_store %arg23[%c0_150, %c64_151], %139 {strides = array<i32>} : memref<32x384xf32, #tpu.memory_space<vmem>>, vector<4x64xf32>,
    %c2_152 = arith.constant 2 : index
    %c0_153 = arith.constant 0 : index
    %141 = vector.load %arg22[%c2_152, %c0_153] : memref<72x128xf32, #tpu.memory_space<vmem>>, vector<4x64xf32>
    %c0_154 = arith.constant 0 : index
    %c128_155 = arith.constant 128 : index
    %142 = vector.load %arg23[%c0_154, %c128_155] : memref<32x384xf32, #tpu.memory_space<vmem>>, vector<4x64xf32>
    tpu.vector_store %arg23[%c0_154, %c128_155], %141 {strides = array<i32>} : memref<32x384xf32, #tpu.memory_space<vmem>>, vector<4x64xf32>,
    %c3_156 = arith.constant 3 : index
    %c0_157 = arith.constant 0 : index
    %143 = vector.load %arg22[%c3_156, %c0_157] : memref<72x128xf32, #tpu.memory_space<vmem>>, vector<4x64xf32>
    %c0_158 = arith.constant 0 : index
    %c192 = arith.constant 192 : index
    %144 = vector.load %arg23[%c0_158, %c192] : memref<32x384xf32, #tpu.memory_space<vmem>>, vector<4x64xf32>
    tpu.vector_store %arg23[%c0_158, %c192], %143 {strides = array<i32>} : memref<32x384xf32, #tpu.memory_space<vmem>>, vector<4x64xf32>,
    %c4_159 = arith.constant 4 : index
    %c0_160 = arith.constant 0 : index
    %145 = vector.load %arg22[%c4_159, %c0_160] : memref<72x128xf32, #tpu.memory_space<vmem>>, vector<4x64xf32>
    %c0_161 = arith.constant 0 : index
    %c256 = arith.constant 256 : index
    %146 = vector.load %arg23[%c0_161, %c256] : memref<32x384xf32, #tpu.memory_space<vmem>>, vector<4x64xf32>
    tpu.vector_store %arg23[%c0_161, %c256], %145 {strides = array<i32>} : memref<32x384xf32, #tpu.memory_space<vmem>>, vector<4x64xf32>,
    %c0_162 = arith.constant 0 : index
    %c0_163 = arith.constant 0 : index
    %147 = vector.load %arg23[%c0_162, %c0_163] : memref<32x384xf32, #tpu.memory_space<vmem>>, vector<4x320xf32>
    %c0_164 = arith.constant 0 : index
    %c0_165 = arith.constant 0 : index
    %148 = vector.load %arg14[%c0_164, %c0_165] : memref<320x128xf32, #tpu.memory_space<vmem>>, vector<320x128xf32>
    %cst_166 = arith.constant dense<0.000000e+00> : vector<4x128xf32>
    %149 = tpu.matmul %147, %148, %cst_166 {dimension_numbers = #tpu.dot_dimension_numbers<[1], [0], [0], [1], [0, 0, 1, 1], [], []>} : vector<4x320xf32>, vector<320x128xf32>, vector<4x128xf32> -> vector<4x128xf32>
    %c0_167 = arith.constant 0 : index
    %c0_168 = arith.constant 0 : index
    %150 = vector.load %arg15[%c0_167, %c0_168] : memref<1x128xf32, #tpu.memory_space<vmem>>, vector<1x128xf32>
    %151 = vector.broadcast %150 : vector<1x128xf32> to vector<4x128xf32>
    %152 = arith.mulf %149, %151 : vector<4x128xf32>
    %c0_169 = arith.constant 0 : index
    %c0_170 = arith.constant 0 : index
    %153 = vector.load %arg16[%c0_169, %c0_170] : memref<1x128xf32, #tpu.memory_space<vmem>>, vector<1x128xf32>
    %154 = vector.broadcast %153 : vector<1x128xf32> to vector<4x128xf32>
    %155 = arith.addf %152, %154 : vector<4x128xf32>
    %cst_171 = arith.constant 0.000000e+00 : f32
    %156 = vector.broadcast %cst_171 : f32 to vector<4x128xf32>
    %157 = arith.maximumf %155, %156 : vector<4x128xf32>
    %158 = vector.shape_cast %157 : vector<4x128xf32> to vector<2x2x128xf32>
    %cst_172 = arith.constant dense<0xFF800000> : vector<2x128xf32>
    %159 = vector.multi_reduction <maximumf>, %158, %cst_172 [1] : vector<2x2x128xf32> to vector<2x128xf32>
    %c0_173 = arith.constant 0 : index
    %c0_174 = arith.constant 0 : index
    %160 = vector.load %arg18[%c0_173, %c0_174] : memref<1x64xf32, #tpu.memory_space<vmem>>, vector<1x64xf32>
    %161 = vector.extract_strided_slice %159 {offsets = [0, 0], sizes = [1, 128], strides = [1, 1]} : vector<2x128xf32> to vector<1x128xf32>
    %c0_175 = arith.constant 0 : index
    %c0_176 = arith.constant 0 : index
    %c0_177 = arith.constant 0 : index
    %162 = vector.load %arg17[%c0_175, %c0_176, %c0_177] : memref<2x128x64xf32, #tpu.memory_space<vmem>>, vector<1x128x64xf32>
    %163 = vector.shape_cast %162 : vector<1x128x64xf32> to vector<128x64xf32>
    %cst_178 = arith.constant dense<0.000000e+00> : vector<1x64xf32>
    %164 = tpu.matmul %161, %163, %cst_178 {dimension_numbers = #tpu.dot_dimension_numbers<[1], [0], [0], [1], [0, 0, 1, 1], [], []>} : vector<1x128xf32>, vector<128x64xf32>, vector<1x64xf32> -> vector<1x64xf32>
    %165 = arith.addf %160, %164 : vector<1x64xf32>
    %166 = vector.extract_strided_slice %159 {offsets = [1, 0], sizes = [1, 128], strides = [1, 1]} : vector<2x128xf32> to vector<1x128xf32>
    %c1_179 = arith.constant 1 : index
    %c0_180 = arith.constant 0 : index
    %c0_181 = arith.constant 0 : index
    %167 = vector.load %arg17[%c1_179, %c0_180, %c0_181] : memref<2x128x64xf32, #tpu.memory_space<vmem>>, vector<1x128x64xf32>
    %168 = vector.shape_cast %167 : vector<1x128x64xf32> to vector<128x64xf32>
    %cst_182 = arith.constant dense<0.000000e+00> : vector<1x64xf32>
    %169 = tpu.matmul %166, %168, %cst_182 {dimension_numbers = #tpu.dot_dimension_numbers<[1], [0], [0], [1], [0, 0, 1, 1], [], []>} : vector<1x128xf32>, vector<128x64xf32>, vector<1x64xf32> -> vector<1x64xf32>
    %170 = arith.addf %165, %169 : vector<1x64xf32>
    %c0_183 = arith.constant 0 : index
    %c0_184 = arith.constant 0 : index
    %171 = vector.load %arg19[%c0_183, %c0_184] : memref<64x10xf32, #tpu.memory_space<vmem>>, vector<64x10xf32>
    %cst_185 = arith.constant dense<0.000000e+00> : vector<1x10xf32>
    %172 = tpu.matmul %170, %171, %cst_185 {dimension_numbers = #tpu.dot_dimension_numbers<[1], [0], [0], [1], [0, 0, 1, 1], [], []>} : vector<1x64xf32>, vector<64x10xf32>, vector<1x10xf32> -> vector<1x10xf32>
    %c0_186 = arith.constant 0 : index
    %c0_187 = arith.constant 0 : index
    %173 = vector.load %arg20[%c0_186, %c0_187] : memref<1x10xf32, #tpu.memory_space<vmem>>, vector<1x10xf32>
    %174 = arith.addf %172, %173 : vector<1x10xf32>
    %c0_188 = arith.constant 0 : index
    %c0_189 = arith.constant 0 : index
    %c0_190 = arith.constant 0 : index
    %175 = vector.load %arg21[%c0_188, %c0_189, %c0_190] : memref<1x1x10xf32, #tpu.memory_space<vmem>>, vector<1x1x10xf32>
    %176 = vector.shape_cast %175 : vector<1x1x10xf32> to vector<1x10xf32>
    %177 = vector.shape_cast %174 : vector<1x10xf32> to vector<1x1x10xf32>
    tpu.vector_store %arg21[%c0_188, %c0_189, %c0_190], %177 {strides = array<i32>} : memref<1x1x10xf32, #tpu.memory_space<vmem>>, vector<1x1x10xf32>,
    return
  }
  func.func @transform_0(%arg0: i32) -> (i32, i32, i32) {
    %c0_i32 = arith.constant 0 : i32
    %c0_i32_0 = arith.constant 0 : i32
    %c0_i32_1 = arith.constant 0 : i32
    return %arg0, %c0_i32, %c0_i32_0 : i32, i32, i32
  }
  func.func @transform_1(%arg0: i32) -> (i32, i32) {
    %c0_i32 = arith.constant 0 : i32
    %c0_i32_0 = arith.constant 0 : i32
    %c0_i32_1 = arith.constant 0 : i32
    return %c0_i32, %c0_i32_0 : i32, i32
  }
  func.func @transform_2(%arg0: i32) -> (i32, i32) {
    %c0_i32 = arith.constant 0 : i32
    %c0_i32_0 = arith.constant 0 : i32
    %c0_i32_1 = arith.constant 0 : i32
    return %c0_i32, %c0_i32_0 : i32, i32
  }
  func.func @transform_3(%arg0: i32) -> (i32, i32) {
    %c0_i32 = arith.constant 0 : i32
    %c0_i32_0 = arith.constant 0 : i32
    %c0_i32_1 = arith.constant 0 : i32
    return %c0_i32, %c0_i32_0 : i32, i32
  }
  func.func @transform_4(%arg0: i32) -> (i32, i32) {
    %c0_i32 = arith.constant 0 : i32
    %c0_i32_0 = arith.constant 0 : i32
    %c0_i32_1 = arith.constant 0 : i32
    return %c0_i32, %c0_i32_0 : i32, i32
  }
  func.func @transform_5(%arg0: i32) -> (i32, i32) {
    %c0_i32 = arith.constant 0 : i32
    %c0_i32_0 = arith.constant 0 : i32
    %c0_i32_1 = arith.constant 0 : i32
    return %c0_i32, %c0_i32_0 : i32, i32
  }
  func.func @transform_6(%arg0: i32) -> (i32, i32) {
    %c0_i32 = arith.constant 0 : i32
    %c0_i32_0 = arith.constant 0 : i32
    %c0_i32_1 = arith.constant 0 : i32
    return %c0_i32, %c0_i32_0 : i32, i32
  }
  func.func @transform_7(%arg0: i32) -> (i32, i32) {
    %c0_i32 = arith.constant 0 : i32
    %c0_i32_0 = arith.constant 0 : i32
    %c0_i32_1 = arith.constant 0 : i32
    return %c0_i32, %c0_i32_0 : i32, i32
  }
  func.func @transform_8(%arg0: i32) -> (i32, i32) {
    %c0_i32 = arith.constant 0 : i32
    %c0_i32_0 = arith.constant 0 : i32
    %c0_i32_1 = arith.constant 0 : i32
    return %c0_i32, %c0_i32_0 : i32, i32
  }
  func.func @transform_9(%arg0: i32) -> (i32, i32) {
    %c0_i32 = arith.constant 0 : i32
    %c0_i32_0 = arith.constant 0 : i32
    %c0_i32_1 = arith.constant 0 : i32
    return %c0_i32, %c0_i32_0 : i32, i32
  }
  func.func @transform_10(%arg0: i32) -> (i32, i32) {
    %c0_i32 = arith.constant 0 : i32
    %c0_i32_0 = arith.constant 0 : i32
    %c0_i32_1 = arith.constant 0 : i32
    return %c0_i32, %c0_i32_0 : i32, i32
  }
  func.func @transform_11(%arg0: i32) -> (i32, i32) {
    %c0_i32 = arith.constant 0 : i32
    %c0_i32_0 = arith.constant 0 : i32
    %c0_i32_1 = arith.constant 0 : i32
    return %c0_i32, %c0_i32_0 : i32, i32
  }
  func.func @transform_12(%arg0: i32) -> (i32, i32) {
    %c0_i32 = arith.constant 0 : i32
    %c0_i32_0 = arith.constant 0 : i32
    %c0_i32_1 = arith.constant 0 : i32
    return %c0_i32, %c0_i32_0 : i32, i32
  }
  func.func @transform_13(%arg0: i32) -> (i32, i32) {
    %c0_i32 = arith.constant 0 : i32
    %c0_i32_0 = arith.constant 0 : i32
    %c0_i32_1 = arith.constant 0 : i32
    return %c0_i32, %c0_i32_0 : i32, i32
  }
  func.func @transform_14(%arg0: i32) -> (i32, i32) {
    %c0_i32 = arith.constant 0 : i32
    %c0_i32_0 = arith.constant 0 : i32
    %c0_i32_1 = arith.constant 0 : i32
    return %c0_i32, %c0_i32_0 : i32, i32
  }
  func.func @transform_15(%arg0: i32) -> (i32, i32) {
    %c0_i32 = arith.constant 0 : i32
    %c0_i32_0 = arith.constant 0 : i32
    %c0_i32_1 = arith.constant 0 : i32
    return %c0_i32, %c0_i32_0 : i32, i32
  }
  func.func @transform_16(%arg0: i32) -> (i32, i32, i32) {
    %c0_i32 = arith.constant 0 : i32
    %c0_i32_0 = arith.constant 0 : i32
    %c0_i32_1 = arith.constant 0 : i32
    %c0_i32_2 = arith.constant 0 : i32
    return %c0_i32, %c0_i32_0, %c0_i32_1 : i32, i32, i32
  }
  func.func @transform_17(%arg0: i32) -> (i32, i32) {
    %c0_i32 = arith.constant 0 : i32
    %c0_i32_0 = arith.constant 0 : i32
    %c0_i32_1 = arith.constant 0 : i32
    return %c0_i32, %c0_i32_0 : i32, i32
  }
  func.func @transform_18(%arg0: i32) -> (i32, i32) {
    %c0_i32 = arith.constant 0 : i32
    %c0_i32_0 = arith.constant 0 : i32
    %c0_i32_1 = arith.constant 0 : i32
    return %c0_i32, %c0_i32_0 : i32, i32
  }
  func.func @transform_19(%arg0: i32) -> (i32, i32) {
    %c0_i32 = arith.constant 0 : i32
    %c0_i32_0 = arith.constant 0 : i32
    %c0_i32_1 = arith.constant 0 : i32
    return %c0_i32, %c0_i32_0 : i32, i32
  }
  func.func @transform_20(%arg0: i32) -> (i32, i32, i32) {
    %c0_i32 = arith.constant 0 : i32
    %c0_i32_0 = arith.constant 0 : i32
    %c0_i32_1 = arith.constant 0 : i32
    return %arg0, %c0_i32, %c0_i32_0 : i32, i32, i32
  }
}

</mosaic_0001>

<llo_original>
// kernel: complex_cnn_forward.1
$region0: #{complex_cnn_forward.1}
  #allocation0 [shape = 'u32[]', space=smem, size = 0x4, offset = 0x4, fixed_abs, tag = 'smem constant byte address 0x4 - core index']
  #allocation1 [shape = 'u32[144,128]{1,0:T(1,128)}', space=vmem, size = 0x12000, scoped, tag = 'internal scratch']
  #allocation2 [shape = 'f32[72,128]{1,0:T(8,128)}', space=vmem, size = 0x9000, scoped, tag = 'scratch operand']
  #allocation3 [shape = 'f32[32,384]{1,0:T(8,128)}', space=vmem, size = 0xc000, scoped, tag = 'scratch operand']
  %s0 = inlined_call_operand.vmem [shape: f32[2,64,1], index: 0, kind: input, shape index: {}]
  %s1 = inlined_call_operand.vmem [shape: f32[5,8], index: 1, kind: input, shape index: {}]
  %s2 = inlined_call_operand.vmem [shape: f32[1,8], index: 2, kind: input, shape index: {}]
  %s3 = inlined_call_operand.vmem [shape: f32[1,8], index: 3, kind: input, shape index: {}]
  %s4 = inlined_call_operand.vmem [shape: f32[40,16], index: 4, kind: input, shape index: {}]
  %s5 = inlined_call_operand.vmem [shape: f32[1,16], index: 5, kind: input, shape index: {}]
  %s6 = inlined_call_operand.vmem [shape: f32[1,16], index: 6, kind: input, shape index: {}]
  %s7 = inlined_call_operand.vmem [shape: f32[80,32], index: 7, kind: input, shape index: {}]
  %s8 = inlined_call_operand.vmem [shape: f32[1,32], index: 8, kind: input, shape index: {}]
  %s9 = inlined_call_operand.vmem [shape: f32[1,32], index: 9, kind: input, shape index: {}]
  %s10 = inlined_call_operand.vmem [shape: f32[160,64], index: 10, kind: input, shape index: {}]
  %s11 = inlined_call_operand.vmem [shape: f32[1,64], index: 11, kind: input, shape index: {}]
  %s12 = inlined_call_operand.vmem [shape: f32[1,64], index: 12, kind: input, shape index: {}]
  %s13 = inlined_call_operand.vmem [shape: f32[320,128], index: 13, kind: input, shape index: {}]
  %s14 = inlined_call_operand.vmem [shape: f32[1,128], index: 14, kind: input, shape index: {}]
  %s15 = inlined_call_operand.vmem [shape: f32[1,128], index: 15, kind: input, shape index: {}]
  %s16 = inlined_call_operand.vmem [shape: f32[2,128,64], index: 16, kind: input, shape index: {}]
  %s17 = inlined_call_operand.vmem [shape: f32[1,64], index: 17, kind: input, shape index: {}]
  %s18 = inlined_call_operand.vmem [shape: f32[64,10], index: 18, kind: input, shape index: {}]
  %s19 = inlined_call_operand.vmem [shape: f32[1,10], index: 19, kind: input, shape index: {}]
  %s20 = inlined_call_operand.hbm [shape: f32[2,1,10], index: 20, kind: output, shape index: {}]
  %s21 = sld [smem:[#allocation0]]
  $region113: #{complex_cnn_forward.1} parent=0
    _
  %s23 = ssub.s32 1, %s21
  %s24 = scalar_select 0, %s23, %s21
  $region1: #{complex_cnn_forward.1} parent=0
    #allocation4 [shape = 'u8[1024]{0}', space=vmem, size = 0x400, scoped, tag = 'output window, operand 0']
    #allocation5 [shape = 's32[2]{0}', space=sflag, size = 0x8, scoped, tag = 'scoped memory for complex_cnn_forward.1']
    %25 = vsyncpa [#allocation5], 0
    %s26 = scalar_lea.sflag [#allocation5], 1
    %27 = vsyncpa %s26, 0
    loop: start=0, step=1, limit=4
    $region2: #{complex_cnn_forward.1} parent=1 // loop_pre_header
      _
    $region3: #{complex_cnn_forward.1} parent=1 // loop_header
      %s29 = sphi 0, %s33
      %p30 = scmp.ge.s32.totalorder %s29, 4
      %s39 = sphi 0, %s41
      %s42 = sphi 0, %s39
      %s43 = sphi 0, %s42
      %s59 = sphi 0, %s43
      %s63 = sphi 0, %s63
      %s65 = sphi 0, %s63
      %s66 = sphi 0, %s65
      %s80 = sphi 0, %s66
      %s84 = sphi 0, %s84
      %s86 = sphi 0, %s84
      %s87 = sphi 0, %s86
      %s101 = sphi 0, %s87
      %s105 = sphi 0, %s105
      %s107 = sphi 0, %s105
      %s108 = sphi 0, %s107
      %s122 = sphi 0, %s108
      %s126 = sphi 0, %s126
      %s128 = sphi 0, %s126
      %s129 = sphi 0, %s128
      %s143 = sphi 0, %s129
      %s147 = sphi 0, %s147
      %s149 = sphi 0, %s147
      %s150 = sphi 0, %s149
      %s164 = sphi 0, %s150
      %s168 = sphi 0, %s168
      %s170 = sphi 0, %s168
      %s171 = sphi 0, %s170
      %s185 = sphi 0, %s171
      %s189 = sphi 0, %s189
      %s191 = sphi 0, %s189
      %s192 = sphi 0, %s191
      %s206 = sphi 0, %s192
      %s210 = sphi 0, %s210
      %s212 = sphi 0, %s210
      %s213 = sphi 0, %s212
      %s227 = sphi 0, %s213
      %s231 = sphi 0, %s231
      %s233 = sphi 0, %s231
      %s234 = sphi 0, %s233
      %s248 = sphi 0, %s234
      %s252 = sphi 0, %s252
      %s254 = sphi 0, %s252
      %s255 = sphi 0, %s254
      %s269 = sphi 0, %s255
      %s273 = sphi 0, %s273
      %s275 = sphi 0, %s273
      %s276 = sphi 0, %s275
      %s290 = sphi 0, %s276
      %s294 = sphi 0, %s294
      %s296 = sphi 0, %s294
      %s297 = sphi 0, %s296
      %s311 = sphi 0, %s297
      %s315 = sphi 0, %s315
      %s317 = sphi 0, %s315
      %s318 = sphi 0, %s317
      %s332 = sphi 0, %s318
      %s336 = sphi 0, %s336
      %s338 = sphi 0, %s336
      %s339 = sphi 0, %s338
      %s353 = sphi 0, %s339
      %s357 = sphi 0, %s357
      %s359 = sphi 0, %s357
      %s360 = sphi 0, %s359
      %s374 = sphi 0, %s360
      %s378 = sphi 0, %s378
      %s380 = sphi 0, %s378
      %s381 = sphi 0, %s380
      %s395 = sphi 0, %s381
      %s399 = sphi 0, %s399
      %s401 = sphi 0, %s399
      %s402 = sphi 0, %s401
      %s416 = sphi 0, %s402
      %s420 = sphi 0, %s420
      %s422 = sphi 0, %s420
      %s423 = sphi 0, %s422
      %s437 = sphi 0, %s423
      %s441 = sphi 0, %s441
      %s443 = sphi 0, %s441
      %s444 = sphi 0, %s443
      %s458 = sphi 0, %s444
      %s464 = sphi 0, %s466
      %s467 = sphi 0, %s464
      %s468 = sphi 0, %s467
      %s484 = sphi 0, %s468
    $region4: #{complex_cnn_forward.1} parent=1 // loop_header_branch
      %32 = sbr.rel (%p30) target = $region8
    $region5: #{complex_cnn_forward.1} parent=1 // loop_body
      %s34 = ssub.s32 %s29, 1
      %s35 = ssub.s32 %s29, 2
      %s36 = sadd.s32 %s29, 1
      %s37 = ssub.s32 %s29, %s36
      %p38 = scmp.eq.s32.totalorder %s37, 0
      %s40 = sadd.s32 %s39, 1
      %s41 = scalar_select %p38, %s39, %s40
      %p44 = pneg %p38
      %p45 = scmp.eq.s32.totalorder %s29, 1
      %p46 = por %p44, %p45
      %p47 = scmp.ne.s32.totalorder %s39, %s42
      %p48 = scmp.eq.s32.totalorder %s29, 0
      %p49 = por %p47, %p48
      %p50 = scmp.ne.s32.totalorder %s39, %s42
      %p51 = scmp.eq.s32.totalorder %s34, 1
      %p52 = por %p50, %p51
      %p53 = scmp.ne.s32.totalorder %s42, %s43
      %p54 = scmp.eq.s32.totalorder %s34, 0
      %p55 = por %p53, %p54
      %p56 = scmp.ne.s32.totalorder %s42, %s43
      %p57 = scmp.eq.s32.totalorder %s35, 1
      %p58 = por %p56, %p57
      %p60 = scmp.ne.s32.totalorder %s43, %s59
      %p61 = scmp.eq.s32.totalorder %s35, 0
      %p62 = por %p60, %p61
      %s64 = sadd.s32 %s63, 1
      %p67 = scmp.eq.s32.totalorder %s29, 1
      %p68 = scmp.ne.s32.totalorder %s63, %s65
      %p69 = scmp.eq.s32.totalorder %s29, 0
      %p70 = por %p68, %p69
      %p71 = scmp.ne.s32.totalorder %s63, %s65
      %p72 = scmp.eq.s32.totalorder %s34, 1
      %p73 = por %p71, %p72
      %p74 = scmp.ne.s32.totalorder %s65, %s66
      %p75 = scmp.eq.s32.totalorder %s34, 0
      %p76 = por %p74, %p75
      %p77 = scmp.ne.s32.totalorder %s65, %s66
      %p78 = scmp.eq.s32.totalorder %s35, 1
      %p79 = por %p77, %p78
      %p81 = scmp.ne.s32.totalorder %s66, %s80
      %p82 = scmp.eq.s32.totalorder %s35, 0
      %p83 = por %p81, %p82
      %s85 = sadd.s32 %s84, 1
      %p88 = scmp.eq.s32.totalorder %s29, 1
      %p89 = scmp.ne.s32.totalorder %s84, %s86
      %p90 = scmp.eq.s32.totalorder %s29, 0
      %p91 = por %p89, %p90
      %p92 = scmp.ne.s32.totalorder %s84, %s86
      %p93 = scmp.eq.s32.totalorder %s34, 1
      %p94 = por %p92, %p93
      %p95 = scmp.ne.s32.totalorder %s86, %s87
      %p96 = scmp.eq.s32.totalorder %s34, 0
      %p97 = por %p95, %p96
      %p98 = scmp.ne.s32.totalorder %s86, %s87
      %p99 = scmp.eq.s32.totalorder %s35, 1
      %p100 = por %p98, %p99
      %p102 = scmp.ne.s32.totalorder %s87, %s101
      %p103 = scmp.eq.s32.totalorder %s35, 0
      %p104 = por %p102, %p103
      %s106 = sadd.s32 %s105, 1
      %p109 = scmp.eq.s32.totalorder %s29, 1
      %p110 = scmp.ne.s32.totalorder %s105, %s107
      %p111 = scmp.eq.s32.totalorder %s29, 0
      %p112 = por %p110, %p111
      %p113 = scmp.ne.s32.totalorder %s105, %s107
      %p114 = scmp.eq.s32.totalorder %s34, 1
      %p115 = por %p113, %p114
      %p116 = scmp.ne.s32.totalorder %s107, %s108
      %p117 = scmp.eq.s32.totalorder %s34, 0
      %p118 = por %p116, %p117
      %p119 = scmp.ne.s32.totalorder %s107, %s108
      %p120 = scmp.eq.s32.totalorder %s35, 1
      %p121 = por %p119, %p120
      %p123 = scmp.ne.s32.totalorder %s108, %s122
      %p124 = scmp.eq.s32.totalorder %s35, 0
      %p125 = por %p123, %p124
      %s127 = sadd.s32 %s126, 1
      %p130 = scmp.eq.s32.totalorder %s29, 1
      %p131 = scmp.ne.s32.totalorder %s126, %s128
      %p132 = scmp.eq.s32.totalorder %s29, 0
      %p133 = por %p131, %p132
      %p134 = scmp.ne.s32.totalorder %s126, %s128
      %p135 = scmp.eq.s32.totalorder %s34, 1
      %p136 = por %p134, %p135
      %p137 = scmp.ne.s32.totalorder %s128, %s129
      %p138 = scmp.eq.s32.totalorder %s34, 0
      %p139 = por %p137, %p138
      %p140 = scmp.ne.s32.totalorder %s128, %s129
      %p141 = scmp.eq.s32.totalorder %s35, 1
      %p142 = por %p140, %p141
      %p144 = scmp.ne.s32.totalorder %s129, %s143
      %p145 = scmp.eq.s32.totalorder %s35, 0
      %p146 = por %p144, %p145
      %s148 = sadd.s32 %s147, 1
      %p151 = scmp.eq.s32.totalorder %s29, 1
      %p152 = scmp.ne.s32.totalorder %s147, %s149
      %p153 = scmp.eq.s32.totalorder %s29, 0
      %p154 = por %p152, %p153
      %p155 = scmp.ne.s32.totalorder %s147, %s149
      %p156 = scmp.eq.s32.totalorder %s34, 1
      %p157 = por %p155, %p156
      %p158 = scmp.ne.s32.totalorder %s149, %s150
      %p159 = scmp.eq.s32.totalorder %s34, 0
      %p160 = por %p158, %p159
      %p161 = scmp.ne.s32.totalorder %s149, %s150
      %p162 = scmp.eq.s32.totalorder %s35, 1
      %p163 = por %p161, %p162
      %p165 = scmp.ne.s32.totalorder %s150, %s164
      %p166 = scmp.eq.s32.totalorder %s35, 0
      %p167 = por %p165, %p166
      %s169 = sadd.s32 %s168, 1
      %p172 = scmp.eq.s32.totalorder %s29, 1
      %p173 = scmp.ne.s32.totalorder %s168, %s170
      %p174 = scmp.eq.s32.totalorder %s29, 0
      %p175 = por %p173, %p174
      %p176 = scmp.ne.s32.totalorder %s168, %s170
      %p177 = scmp.eq.s32.totalorder %s34, 1
      %p178 = por %p176, %p177
      %p179 = scmp.ne.s32.totalorder %s170, %s171
      %p180 = scmp.eq.s32.totalorder %s34, 0
      %p181 = por %p179, %p180
      %p182 = scmp.ne.s32.totalorder %s170, %s171
      %p183 = scmp.eq.s32.totalorder %s35, 1
      %p184 = por %p182, %p183
      %p186 = scmp.ne.s32.totalorder %s171, %s185
      %p187 = scmp.eq.s32.totalorder %s35, 0
      %p188 = por %p186, %p187
      %s190 = sadd.s32 %s189, 1
      %p193 = scmp.eq.s32.totalorder %s29, 1
      %p194 = scmp.ne.s32.totalorder %s189, %s191
      %p195 = scmp.eq.s32.totalorder %s29, 0
      %p196 = por %p194, %p195
      %p197 = scmp.ne.s32.totalorder %s189, %s191
      %p198 = scmp.eq.s32.totalorder %s34, 1
      %p199 = por %p197, %p198
      %p200 = scmp.ne.s32.totalorder %s191, %s192
      %p201 = scmp.eq.s32.totalorder %s34, 0
      %p202 = por %p200, %p201
      %p203 = scmp.ne.s32.totalorder %s191, %s192
      %p204 = scmp.eq.s32.totalorder %s35, 1
      %p205 = por %p203, %p204
      %p207 = scmp.ne.s32.totalorder %s192, %s206
      %p208 = scmp.eq.s32.totalorder %s35, 0
      %p209 = por %p207, %p208
      %s211 = sadd.s32 %s210, 1
      %p214 = scmp.eq.s32.totalorder %s29, 1
      %p215 = scmp.ne.s32.totalorder %s210, %s212
      %p216 = scmp.eq.s32.totalorder %s29, 0
      %p217 = por %p215, %p216
      %p218 = scmp.ne.s32.totalorder %s210, %s212
      %p219 = scmp.eq.s32.totalorder %s34, 1
      %p220 = por %p218, %p219
      %p221 = scmp.ne.s32.totalorder %s212, %s213
      %p222 = scmp.eq.s32.totalorder %s34, 0
      %p223 = por %p221, %p222
      %p224 = scmp.ne.s32.totalorder %s212, %s213
      %p225 = scmp.eq.s32.totalorder %s35, 1
      %p226 = por %p224, %p225
      %p228 = scmp.ne.s32.totalorder %s213, %s227
      %p229 = scmp.eq.s32.totalorder %s35, 0
      %p230 = por %p228, %p229
      %s232 = sadd.s32 %s231, 1
      %p235 = scmp.eq.s32.totalorder %s29, 1
      %p236 = scmp.ne.s32.totalorder %s231, %s233
      %p237 = scmp.eq.s32.totalorder %s29, 0
      %p238 = por %p236, %p237
      %p239 = scmp.ne.s32.totalorder %s231, %s233
      %p240 = scmp.eq.s32.totalorder %s34, 1
      %p241 = por %p239, %p240
      %p242 = scmp.ne.s32.totalorder %s233, %s234
      %p243 = scmp.eq.s32.totalorder %s34, 0
      %p244 = por %p242, %p243
      %p245 = scmp.ne.s32.totalorder %s233, %s234
      %p246 = scmp.eq.s32.totalorder %s35, 1
      %p247 = por %p245, %p246
      %p249 = scmp.ne.s32.totalorder %s234, %s248
      %p250 = scmp.eq.s32.totalorder %s35, 0
      %p251 = por %p249, %p250
      %s253 = sadd.s32 %s252, 1
      %p256 = scmp.eq.s32.totalorder %s29, 1
      %p257 = scmp.ne.s32.totalorder %s252, %s254
      %p258 = scmp.eq.s32.totalorder %s29, 0
      %p259 = por %p257, %p258
      %p260 = scmp.ne.s32.totalorder %s252, %s254
      %p261 = scmp.eq.s32.totalorder %s34, 1
      %p262 = por %p260, %p261
      %p263 = scmp.ne.s32.totalorder %s254, %s255
      %p264 = scmp.eq.s32.totalorder %s34, 0
      %p265 = por %p263, %p264
      %p266 = scmp.ne.s32.totalorder %s254, %s255
      %p267 = scmp.eq.s32.totalorder %s35, 1
      %p268 = por %p266, %p267
      %p270 = scmp.ne.s32.totalorder %s255, %s269
      %p271 = scmp.eq.s32.totalorder %s35, 0
      %p272 = por %p270, %p271
      %s274 = sadd.s32 %s273, 1
      %p277 = scmp.eq.s32.totalorder %s29, 1
      %p278 = scmp.ne.s32.totalorder %s273, %s275
      %p279 = scmp.eq.s32.totalorder %s29, 0
      %p280 = por %p278, %p279
      %p281 = scmp.ne.s32.totalorder %s273, %s275
      %p282 = scmp.eq.s32.totalorder %s34, 1
      %p283 = por %p281, %p282
      %p284 = scmp.ne.s32.totalorder %s275, %s276
      %p285 = scmp.eq.s32.totalorder %s34, 0
      %p286 = por %p284, %p285
      %p287 = scmp.ne.s32.totalorder %s275, %s276
      %p288 = scmp.eq.s32.totalorder %s35, 1
      %p289 = por %p287, %p288
      %p291 = scmp.ne.s32.totalorder %s276, %s290
      %p292 = scmp.eq.s32.totalorder %s35, 0
      %p293 = por %p291, %p292
      %s295 = sadd.s32 %s294, 1
      %p298 = scmp.eq.s32.totalorder %s29, 1
      %p299 = scmp.ne.s32.totalorder %s294, %s296
      %p300 = scmp.eq.s32.totalorder %s29, 0
      %p301 = por %p299, %p300
      %p302 = scmp.ne.s32.totalorder %s294, %s296
      %p303 = scmp.eq.s32.totalorder %s34, 1
      %p304 = por %p302, %p303
      %p305 = scmp.ne.s32.totalorder %s296, %s297
      %p306 = scmp.eq.s32.totalorder %s34, 0
      %p307 = por %p305, %p306
      %p308 = scmp.ne.s32.totalorder %s296, %s297
      %p309 = scmp.eq.s32.totalorder %s35, 1
      %p310 = por %p308, %p309
      %p312 = scmp.ne.s32.totalorder %s297, %s311
      %p313 = scmp.eq.s32.totalorder %s35, 0
      %p314 = por %p312, %p313
      %s316 = sadd.s32 %s315, 1
      %p319 = scmp.eq.s32.totalorder %s29, 1
      %p320 = scmp.ne.s32.totalorder %s315, %s317
      %p321 = scmp.eq.s32.totalorder %s29, 0
      %p322 = por %p320, %p321
      %p323 = scmp.ne.s32.totalorder %s315, %s317
      %p324 = scmp.eq.s32.totalorder %s34, 1
      %p325 = por %p323, %p324
      %p326 = scmp.ne.s32.totalorder %s317, %s318
      %p327 = scmp.eq.s32.totalorder %s34, 0
      %p328 = por %p326, %p327
      %p329 = scmp.ne.s32.totalorder %s317, %s318
      %p330 = scmp.eq.s32.totalorder %s35, 1
      %p331 = por %p329, %p330
      %p333 = scmp.ne.s32.totalorder %s318, %s332
      %p334 = scmp.eq.s32.totalorder %s35, 0
      %p335 = por %p333, %p334
      %s337 = sadd.s32 %s336, 1
      %p340 = scmp.eq.s32.totalorder %s29, 1
      %p341 = scmp.ne.s32.totalorder %s336, %s338
      %p342 = scmp.eq.s32.totalorder %s29, 0
      %p343 = por %p341, %p342
      %p344 = scmp.ne.s32.totalorder %s336, %s338
      %p345 = scmp.eq.s32.totalorder %s34, 1
      %p346 = por %p344, %p345
      %p347 = scmp.ne.s32.totalorder %s338, %s339
      %p348 = scmp.eq.s32.totalorder %s34, 0
      %p349 = por %p347, %p348
      %p350 = scmp.ne.s32.totalorder %s338, %s339
      %p351 = scmp.eq.s32.totalorder %s35, 1
      %p352 = por %p350, %p351
      %p354 = scmp.ne.s32.totalorder %s339, %s353
      %p355 = scmp.eq.s32.totalorder %s35, 0
      %p356 = por %p354, %p355
      %s358 = sadd.s32 %s357, 1
      %p361 = scmp.eq.s32.totalorder %s29, 1
      %p362 = scmp.ne.s32.totalorder %s357, %s359
      %p363 = scmp.eq.s32.totalorder %s29, 0
      %p364 = por %p362, %p363
      %p365 = scmp.ne.s32.totalorder %s357, %s359
      %p366 = scmp.eq.s32.totalorder %s34, 1
      %p367 = por %p365, %p366
      %p368 = scmp.ne.s32.totalorder %s359, %s360
      %p369 = scmp.eq.s32.totalorder %s34, 0
      %p370 = por %p368, %p369
      %p371 = scmp.ne.s32.totalorder %s359, %s360
      %p372 = scmp.eq.s32.totalorder %s35, 1
      %p373 = por %p371, %p372
      %p375 = scmp.ne.s32.totalorder %s360, %s374
      %p376 = scmp.eq.s32.totalorder %s35, 0
      %p377 = por %p375, %p376
      %s379 = sadd.s32 %s378, 1
      %p382 = scmp.eq.s32.totalorder %s29, 1
      %p383 = scmp.ne.s32.totalorder %s378, %s380
      %p384 = scmp.eq.s32.totalorder %s29, 0
      %p385 = por %p383, %p384
      %p386 = scmp.ne.s32.totalorder %s378, %s380
      %p387 = scmp.eq.s32.totalorder %s34, 1
      %p388 = por %p386, %p387
      %p389 = scmp.ne.s32.totalorder %s380, %s381
      %p390 = scmp.eq.s32.totalorder %s34, 0
      %p391 = por %p389, %p390
      %p392 = scmp.ne.s32.totalorder %s380, %s381
      %p393 = scmp.eq.s32.totalorder %s35, 1
      %p394 = por %p392, %p393
      %p396 = scmp.ne.s32.totalorder %s381, %s395
      %p397 = scmp.eq.s32.totalorder %s35, 0
      %p398 = por %p396, %p397
      %s400 = sadd.s32 %s399, 1
      %p403 = scmp.eq.s32.totalorder %s29, 1
      %p404 = scmp.ne.s32.totalorder %s399, %s401
      %p405 = scmp.eq.s32.totalorder %s29, 0
      %p406 = por %p404, %p405
      %p407 = scmp.ne.s32.totalorder %s399, %s401
      %p408 = scmp.eq.s32.totalorder %s34, 1
      %p409 = por %p407, %p408
      %p410 = scmp.ne.s32.totalorder %s401, %s402
      %p411 = scmp.eq.s32.totalorder %s34, 0
      %p412 = por %p410, %p411
      %p413 = scmp.ne.s32.totalorder %s401, %s402
      %p414 = scmp.eq.s32.totalorder %s35, 1
      %p415 = por %p413, %p414
      %p417 = scmp.ne.s32.totalorder %s402, %s416
      %p418 = scmp.eq.s32.totalorder %s35, 0
      %p419 = por %p417, %p418
      %s421 = sadd.s32 %s420, 1
      %p424 = scmp.eq.s32.totalorder %s29, 1
      %p425 = scmp.ne.s32.totalorder %s420, %s422
      %p426 = scmp.eq.s32.totalorder %s29, 0
      %p427 = por %p425, %p426
      %p428 = scmp.ne.s32.totalorder %s420, %s422
      %p429 = scmp.eq.s32.totalorder %s34, 1
      %p430 = por %p428, %p429
      %p431 = scmp.ne.s32.totalorder %s422, %s423
      %p432 = scmp.eq.s32.totalorder %s34, 0
      %p433 = por %p431, %p432
      %p434 = scmp.ne.s32.totalorder %s422, %s423
      %p435 = scmp.eq.s32.totalorder %s35, 1
      %p436 = por %p434, %p435
      %p438 = scmp.ne.s32.totalorder %s423, %s437
      %p439 = scmp.eq.s32.totalorder %s35, 0
      %p440 = por %p438, %p439
      %s442 = sadd.s32 %s441, 1
      %p445 = scmp.eq.s32.totalorder %s29, 1
      %p446 = scmp.ne.s32.totalorder %s441, %s443
      %p447 = scmp.eq.s32.totalorder %s29, 0
      %p448 = por %p446, %p447
      %p449 = scmp.ne.s32.totalorder %s441, %s443
      %p450 = scmp.eq.s32.totalorder %s34, 1
      %p451 = por %p449, %p450
      %p452 = scmp.ne.s32.totalorder %s443, %s444
      %p453 = scmp.eq.s32.totalorder %s34, 0
      %p454 = por %p452, %p453
      %p455 = scmp.ne.s32.totalorder %s443, %s444
      %p456 = scmp.eq.s32.totalorder %s35, 1
      %p457 = por %p455, %p456
      %p459 = scmp.ne.s32.totalorder %s444, %s458
      %p460 = scmp.eq.s32.totalorder %s35, 0
      %p461 = por %p459, %p460
      %s462 = ssub.s32 %s29, %s36
      %p463 = scmp.eq.s32.totalorder %s462, 0
      %s465 = sadd.s32 %s464, 1
      %s466 = scalar_select %p463, %s464, %s465
      %p469 = pneg %p463
      %p470 = scmp.eq.s32.totalorder %s29, 1
      %p471 = por %p469, %p470
      %p472 = scmp.ne.s32.totalorder %s464, %s467
      %p473 = scmp.eq.s32.totalorder %s29, 0
      %p474 = por %p472, %p473
      %p475 = scmp.ne.s32.totalorder %s464, %s467
      %p476 = scmp.eq.s32.totalorder %s34, 1
      %p477 = por %p475, %p476
      %p478 = scmp.ne.s32.totalorder %s467, %s468
      %p479 = scmp.eq.s32.totalorder %s34, 0
      %p480 = por %p478, %p479
      %p481 = scmp.ne.s32.totalorder %s467, %s468
      %p482 = scmp.eq.s32.totalorder %s35, 1
      %p483 = por %p481, %p482
      %p485 = scmp.ne.s32.totalorder %s468, %s484
      %p486 = scmp.eq.s32.totalorder %s35, 0
      %p487 = por %p485, %p486
      %p488 = scmp.le.s32.totalorder 1, %s29
      %p489 = scmp.lt.s32.totalorder %s29, 3
      %p490 = pnand %p488, %p489
      %p491 = pneg %p490
      // Predicated region
      $region9: #{complex_cnn_forward.1} parent=5 // pred_check
        _
      $region10: #{complex_cnn_forward.1} parent=5 // pred_check_branch
        %493 = sbr.rel (%p490) target = $region12
      $region11: #{complex_cnn_forward.1} parent=5 // pred_region
        %s494 = ssub.s32 %s29, 1
        // Predicated region
        $region13: #{complex_cnn_forward.1} parent=11 // pred_check
          %p495 = pneg %p76
        $region14: #{complex_cnn_forward.1} parent=11 // pred_check_branch
          %497 = sbr.rel (%p495) target = $region16
        $region15: #{complex_cnn_forward.1} parent=11 // pred_region
          _
        $region16: #{complex_cnn_forward.1} parent=11 // pred_fallthru
          _
        // Predicated region
        $region17: #{complex_cnn_forward.1} parent=11 // pred_check
          %p498 = pneg %p97
        $region18: #{complex_cnn_forward.1} parent=11 // pred_check_branch
          %500 = sbr.rel (%p498) target = $region20
        $region19: #{complex_cnn_forward.1} parent=11 // pred_region
          _
        $region20: #{complex_cnn_forward.1} parent=11 // pred_fallthru
          _
        // Predicated region
        $region21: #{complex_cnn_forward.1} parent=11 // pred_check
          %p501 = pneg %p118
        $region22: #{complex_cnn_forward.1} parent=11 // pred_check_branch
          %503 = sbr.rel (%p501) target = $region24
        $region23: #{complex_cnn_forward.1} parent=11 // pred_region
          _
        $region24: #{complex_cnn_forward.1} parent=11 // pred_fallthru
          _
        // Predicated region
        $region25: #{complex_cnn_forward.1} parent=11 // pred_check
          %p504 = pneg %p139
        $region26: #{complex_cnn_forward.1} parent=11 // pred_check_branch
          %506 = sbr.rel (%p504) target = $region28
        $region27: #{complex_cnn_forward.1} parent=11 // pred_region
          _
        $region28: #{complex_cnn_forward.1} parent=11 // pred_fallthru
          _
        // Predicated region
        $region29: #{complex_cnn_forward.1} parent=11 // pred_check
          %p507 = pneg %p160
        $region30: #{complex_cnn_forward.1} parent=11 // pred_check_branch
          %509 = sbr.rel (%p507) target = $region32
        $region31: #{complex_cnn_forward.1} parent=11 // pred_region
          _
        $region32: #{complex_cnn_forward.1} parent=11 // pred_fallthru
          _
        // Predicated region
        $region33: #{complex_cnn_forward.1} parent=11 // pred_check
          %p510 = pneg %p181
        $region34: #{complex_cnn_forward.1} parent=11 // pred_check_branch
          %512 = sbr.rel (%p510) target = $region36
        $region35: #{complex_cnn_forward.1} parent=11 // pred_region
          _
        $region36: #{complex_cnn_forward.1} parent=11 // pred_fallthru
          _
        // Predicated region
        $region37: #{complex_cnn_forward.1} parent=11 // pred_check
          %p513 = pneg %p202
        $region38: #{complex_cnn_forward.1} parent=11 // pred_check_branch
          %515 = sbr.rel (%p513) target = $region40
        $region39: #{complex_cnn_forward.1} parent=11 // pred_region
          _
        $region40: #{complex_cnn_forward.1} parent=11 // pred_fallthru
          _
        // Predicated region
        $region41: #{complex_cnn_forward.1} parent=11 // pred_check
          %p516 = pneg %p223
        $region42: #{complex_cnn_forward.1} parent=11 // pred_check_branch
          %518 = sbr.rel (%p516) target = $region44
        $region43: #{complex_cnn_forward.1} parent=11 // pred_region
          _
        $region44: #{complex_cnn_forward.1} parent=11 // pred_fallthru
          _
        // Predicated region
        $region45: #{complex_cnn_forward.1} parent=11 // pred_check
          %p519 = pneg %p244
        $region46: #{complex_cnn_forward.1} parent=11 // pred_check_branch
          %521 = sbr.rel (%p519) target = $region48
        $region47: #{complex_cnn_forward.1} parent=11 // pred_region
          _
        $region48: #{complex_cnn_forward.1} parent=11 // pred_fallthru
          _
        // Predicated region
        $region49: #{complex_cnn_forward.1} parent=11 // pred_check
          %p522 = pneg %p265
        $region50: #{complex_cnn_forward.1} parent=11 // pred_check_branch
          %524 = sbr.rel (%p522) target = $region52
        $region51: #{complex_cnn_forward.1} parent=11 // pred_region
          _
        $region52: #{complex_cnn_forward.1} parent=11 // pred_fallthru
          _
        // Predicated region
        $region53: #{complex_cnn_forward.1} parent=11 // pred_check
          %p525 = pneg %p286
        $region54: #{complex_cnn_forward.1} parent=11 // pred_check_branch
          %527 = sbr.rel (%p525) target = $region56
        $region55: #{complex_cnn_forward.1} parent=11 // pred_region
          _
        $region56: #{complex_cnn_forward.1} parent=11 // pred_fallthru
          _
        // Predicated region
        $region57: #{complex_cnn_forward.1} parent=11 // pred_check
          %p528 = pneg %p307
        $region58: #{complex_cnn_forward.1} parent=11 // pred_check_branch
          %530 = sbr.rel (%p528) target = $region60
        $region59: #{complex_cnn_forward.1} parent=11 // pred_region
          _
        $region60: #{complex_cnn_forward.1} parent=11 // pred_fallthru
          _
        // Predicated region
        $region61: #{complex_cnn_forward.1} parent=11 // pred_check
          %p531 = pneg %p328
        $region62: #{complex_cnn_forward.1} parent=11 // pred_check_branch
          %533 = sbr.rel (%p531) target = $region64
        $region63: #{complex_cnn_forward.1} parent=11 // pred_region
          _
        $region64: #{complex_cnn_forward.1} parent=11 // pred_fallthru
          _
        // Predicated region
        $region65: #{complex_cnn_forward.1} parent=11 // pred_check
          %p534 = pneg %p349
        $region66: #{complex_cnn_forward.1} parent=11 // pred_check_branch
          %536 = sbr.rel (%p534) target = $region68
        $region67: #{complex_cnn_forward.1} parent=11 // pred_region
          _
        $region68: #{complex_cnn_forward.1} parent=11 // pred_fallthru
          _
        // Predicated region
        $region69: #{complex_cnn_forward.1} parent=11 // pred_check
          %p537 = pneg %p370
        $region70: #{complex_cnn_forward.1} parent=11 // pred_check_branch
          %539 = sbr.rel (%p537) target = $region72
        $region71: #{complex_cnn_forward.1} parent=11 // pred_region
          _
        $region72: #{complex_cnn_forward.1} parent=11 // pred_fallthru
          _
        // Predicated region
        $region73: #{complex_cnn_forward.1} parent=11 // pred_check
          %p540 = pneg %p391
        $region74: #{complex_cnn_forward.1} parent=11 // pred_check_branch
          %542 = sbr.rel (%p540) target = $region76
        $region75: #{complex_cnn_forward.1} parent=11 // pred_region
          _
        $region76: #{complex_cnn_forward.1} parent=11 // pred_fallthru
          _
        // Predicated region
        $region77: #{complex_cnn_forward.1} parent=11 // pred_check
          %p543 = pneg %p412
        $region78: #{complex_cnn_forward.1} parent=11 // pred_check_branch
          %545 = sbr.rel (%p543) target = $region80
        $region79: #{complex_cnn_forward.1} parent=11 // pred_region
          _
        $region80: #{complex_cnn_forward.1} parent=11 // pred_fallthru
          _
        // Predicated region
        $region81: #{complex_cnn_forward.1} parent=11 // pred_check
          %p546 = pneg %p433
        $region82: #{complex_cnn_forward.1} parent=11 // pred_check_branch
          %548 = sbr.rel (%p546) target = $region84
        $region83: #{complex_cnn_forward.1} parent=11 // pred_region
          _
        $region84: #{complex_cnn_forward.1} parent=11 // pred_fallthru
          _
        // Predicated region
        $region85: #{complex_cnn_forward.1} parent=11 // pred_check
          %p549 = pneg %p454
        $region86: #{complex_cnn_forward.1} parent=11 // pred_check_branch
          %551 = sbr.rel (%p549) target = $region88
        $region87: #{complex_cnn_forward.1} parent=11 // pred_region
          _
        $region88: #{complex_cnn_forward.1} parent=11 // pred_fallthru
          _
      $region12: #{complex_cnn_forward.1} parent=5 // pred_fallthru
        _
      %p552 = scmp.lt.s32.totalorder %s29, 2
      // Predicated region
      $region89: #{complex_cnn_forward.1} parent=5 // pred_check
        %p553 = pneg %p552
      $region90: #{complex_cnn_forward.1} parent=5 // pred_check_branch
        %555 = sbr.rel (%p553) target = $region92
      $region91: #{complex_cnn_forward.1} parent=5 // pred_region
        // Predicated region
        $region93: #{complex_cnn_forward.1} parent=91 // pred_check
          %p556 = pneg %p49
        $region94: #{complex_cnn_forward.1} parent=91 // pred_check_branch
          %558 = sbr.rel (%p556) target = $region96
        $region95: #{complex_cnn_forward.1} parent=91 // pred_region
          %p559 = scmp.lt.s32.totalorder %s29, 1
          %s560 = scalar_select %p559, %s29, 1
          %s561 = smul.addr %s560, 8
          %s562 = smul.addr %s561, 8
          %s563 = scalar_lea.vmem %s0, %s562
        $region96: #{complex_cnn_forward.1} parent=91 // pred_fallthru
          _
      $region92: #{complex_cnn_forward.1} parent=5 // pred_fallthru
        _
      %p564 = scmp.le.s32.totalorder 1, %s29
      %p565 = scmp.lt.s32.totalorder %s29, 3
      %p566 = pnand %p564, %p565
      %p567 = pneg %p566
      // Predicated region
      $region97: #{complex_cnn_forward.1} parent=5 // pred_check
        _
      $region98: #{complex_cnn_forward.1} parent=5 // pred_check_branch
        %569 = sbr.rel (%p566) target = $region100
      $region99: #{complex_cnn_forward.1} parent=5 // pred_region
        %s570 = ssub.s32 %s29, 1
        %p571 = scmp.lt.s32.totalorder %s34, 1
        %s572 = scalar_select %p571, %s34, 1
        %s573 = smul.addr %s572, 8
        %s574 = smul.addr %s573, 8
        %s575 = scalar_lea.vmem %s0, %s574
        %p576 = pneg %p55
        %p577 = pneg %p52
        %p578 = pneg %p76
        %p579 = pneg %p73
        %p580 = pneg %p97
        %p581 = pneg %p94
        %p582 = pneg %p118
        %p583 = pneg %p115
        %p584 = pneg %p139
        %p585 = pneg %p136
        %p586 = pneg %p160
        %p587 = pneg %p157
        %p588 = pneg %p181
        %p589 = pneg %p178
        %p590 = pneg %p202
        %p591 = pneg %p199
        %p592 = pneg %p223
        %p593 = pneg %p220
        %p594 = pneg %p244
        %p595 = pneg %p241
        %p596 = pneg %p265
        %p597 = pneg %p262
        %p598 = pneg %p286
        %p599 = pneg %p283
        %p600 = pneg %p307
        %p601 = pneg %p304
        %p602 = pneg %p328
        %p603 = pneg %p325
        %p604 = pneg %p349
        %p605 = pneg %p346
        %p606 = pneg %p370
        %p607 = pneg %p367
        %p608 = pneg %p391
        %p609 = pneg %p388
        %p610 = pneg %p412
        %p611 = pneg %p409
        %p612 = pneg %p433
        %p613 = pneg %p430
        %p614 = pneg %p454
        %p615 = pneg %p451
        %p616 = pneg %p480
        %p617 = pneg %p477
        %s618 = sand.u32 %s467, 1
        %s619 = scalar_lea.sflag [#allocation5], %s618
        %s620 = sand.u32 %s467, 1
        %s621 = scalar_lea.vmem [#allocation4], %s620
        %p622 = scmp.lt.s32.totalorder %s34, 1
        %s623 = scalar_select %p622, %s34, 1
        %s624 = smul.addr %s623, 8
        %s625 = smul.addr %s624, 8
        %s626 = scalar_lea.vmem %s0, %s625
        %vm627 = vcmask 1024
        %628 = vst.msk [vmem:[#allocation2] sm:$0x3] %vm627, 0.0
        %629 = vst.msk [vmem:[#allocation2 + $0x42] sm:$0x3] %vm627, 0.0
        %v630 = vld [vmem:[%s626] sm:$0xff]
        %v631 = vld [vmem:[%s626 + $0x8] sm:$0xff]
        %v632 = vld [vmem:[%s626 + $0x10] sm:$0xff]
        %v633 = vld [vmem:[%s626 + $0x18] sm:$0xff]
        %v634 = vld [vmem:[%s626 + $0x20] sm:$0xff]
        %v635 = vld [vmem:[%s626 + $0x28] sm:$0xff]
        %v636 = vld [vmem:[%s626 + $0x30] sm:$0xff]
        %v637 = vld [vmem:[%s626 + $0x38] sm:$0xff]
        %vm638 = vcmask 7168
        %639 = vst.msk [vmem:[#allocation2 + $0x2] sm:$0xff] %vm638, %v630
        %640 = vst.msk [vmem:[#allocation2 + $0xa] sm:$0xff] %vm638, %v631
        %641 = vst.msk [vmem:[#allocation2 + $0x12] sm:$0xff] %vm638, %v632
        %642 = vst.msk [vmem:[#allocation2 + $0x1a] sm:$0xff] %vm638, %v633
        %643 = vst.msk [vmem:[#allocation2 + $0x22] sm:$0xff] %vm638, %v634
        %644 = vst.msk [vmem:[#allocation2 + $0x2a] sm:$0xff] %vm638, %v635
        %645 = vst.msk [vmem:[#allocation2 + $0x32] sm:$0xff] %vm638, %v636
        %646 = vst.msk [vmem:[#allocation2 + $0x3a] sm:$0xff] %vm638, %v637
        %v647 = vld [vmem:[#allocation2] sm:$0xff]
        %v648 = vld [vmem:[#allocation2 + $0x8] sm:$0xff]
        %v649 = vld [vmem:[#allocation2 + $0x10] sm:$0xff]
        %v650 = vld [vmem:[#allocation2 + $0x18] sm:$0xff]
        %v651 = vld [vmem:[#allocation2 + $0x20] sm:$0xff]
        %v652 = vld [vmem:[#allocation2 + $0x28] sm:$0xff]
        %v653 = vld [vmem:[#allocation2 + $0x30] sm:$0xff]
        %v654 = vld [vmem:[#allocation2 + $0x38] sm:$0xff]
        %v655 = vld [vmem:[%s1] sm:$0x1]
        %657 = vset.pattern.permute.xlu0 0
        %658 = vperm.xlu0 %657, %v647
        %v659 = vpop.permute.xlu0 %658
        %662 = vset.pattern.permute.xlu0 0
        %663 = vperm.xlu0 %662, %v648
        %v664 = vpop.permute.xlu0 %663
        %667 = vset.pattern.permute.xlu0 0
        %668 = vperm.xlu0 %667, %v649
        %v669 = vpop.permute.xlu0 %668
        %672 = vset.pattern.permute.xlu0 0
        %673 = vperm.xlu0 %672, %v650
        %v674 = vpop.permute.xlu0 %673
        %677 = vset.pattern.permute.xlu0 0
        %678 = vperm.xlu0 %677, %v651
        %v679 = vpop.permute.xlu0 %678
        %682 = vset.pattern.permute.xlu0 0
        %683 = vperm.xlu0 %682, %v652
        %v684 = vpop.permute.xlu0 %683
        %687 = vset.pattern.permute.xlu0 0
        %688 = vperm.xlu0 %687, %v653
        %v689 = vpop.permute.xlu0 %688
        %692 = vset.pattern.permute.xlu0 0
        %693 = vperm.xlu0 %692, %v654
        %v694 = vpop.permute.xlu0 %693
        %v696 = vlaneseq
        %v697 = vshrl.u32 %v696, 7
        %v698 = vsub.s32 0, %v697
        %v699 = vrot.slane %v655, %v698
        %v700 = vmul.f32 %v659, %v699
        %v701 = vmul.f32 %v664, %v699
        %v702 = vmul.f32 %v669, %v699
        %v703 = vmul.f32 %v674, %v699
        %v704 = vmul.f32 %v679, %v699
        %v705 = vmul.f32 %v684, %v699
        %v706 = vmul.f32 %v689, %v699
        %v707 = vmul.f32 %v694, %v699
        %v708 = vadd.f32 %v700, 0.0
        %v709 = vadd.f32 %v701, 0.0
        %v710 = vadd.f32 %v702, 0.0
        %v711 = vadd.f32 %v703, 0.0
        %v712 = vadd.f32 %v704, 0.0
        %v713 = vadd.f32 %v705, 0.0
        %v714 = vadd.f32 %v706, 0.0
        %v715 = vadd.f32 %v707, 0.0
        %v716 = vld [vmem:[#allocation2 + $0x1] sm:$0xff]
        %v717 = vld [vmem:[#allocation2 + $0x9] sm:$0xff]
        %v718 = vld [vmem:[#allocation2 + $0x11] sm:$0xff]
        %v719 = vld [vmem:[#allocation2 + $0x19] sm:$0xff]
        %v720 = vld [vmem:[#allocation2 + $0x21] sm:$0xff]
        %v721 = vld [vmem:[#allocation2 + $0x29] sm:$0xff]
        %v722 = vld [vmem:[#allocation2 + $0x31] sm:$0xff]
        %v723 = vld [vmem:[#allocation2 + $0x39] sm:$0xff]
        %v724 = vld [vmem:[%s1 + $0x1] sm:$0x1]
        %726 = vset.pattern.permute.xlu0 0
        %727 = vperm.xlu0 %726, %v716
        %v728 = vpop.permute.xlu0 %727
        %731 = vset.pattern.permute.xlu0 0
        %732 = vperm.xlu0 %731, %v717
        %v733 = vpop.permute.xlu0 %732
        %736 = vset.pattern.permute.xlu0 0
        %737 = vperm.xlu0 %736, %v718
        %v738 = vpop.permute.xlu0 %737
        %741 = vset.pattern.permute.xlu0 0
        %742 = vperm.xlu0 %741, %v719
        %v743 = vpop.permute.xlu0 %742
        %746 = vset.pattern.permute.xlu0 0
        %747 = vperm.xlu0 %746, %v720
        %v748 = vpop.permute.xlu0 %747
        %751 = vset.pattern.permute.xlu0 0
        %752 = vperm.xlu0 %751, %v721
        %v753 = vpop.permute.xlu0 %752
        %756 = vset.pattern.permute.xlu0 0
        %757 = vperm.xlu0 %756, %v722
        %v758 = vpop.permute.xlu0 %757
        %761 = vset.pattern.permute.xlu0 0
        %762 = vperm.xlu0 %761, %v723
        %v763 = vpop.permute.xlu0 %762
        %v765 = vlaneseq
        %v766 = vshrl.u32 %v765, 7
        %v767 = vsub.s32 0, %v766
        %v768 = vrot.slane %v724, %v767
        %v769 = vmul.f32 %v728, %v768
        %v770 = vmul.f32 %v733, %v768
        %v771 = vmul.f32 %v738, %v768
        %v772 = vmul.f32 %v743, %v768
        %v773 = vmul.f32 %v748, %v768
        %v774 = vmul.f32 %v753, %v768
        %v775 = vmul.f32 %v758, %v768
        %v776 = vmul.f32 %v763, %v768
        %v777 = vadd.f32 %v708, %v769
        %v778 = vadd.f32 %v709, %v770
        %v779 = vadd.f32 %v710, %v771
        %v780 = vadd.f32 %v711, %v772
        %v781 = vadd.f32 %v712, %v773
        %v782 = vadd.f32 %v713, %v774
        %v783 = vadd.f32 %v714, %v775
        %v784 = vadd.f32 %v715, %v776
        %v785 = vld [vmem:[#allocation2 + $0x2] sm:$0xff]
        %v786 = vld [vmem:[#allocation2 + $0xa] sm:$0xff]
        %v787 = vld [vmem:[#allocation2 + $0x12] sm:$0xff]
        %v788 = vld [vmem:[#allocation2 + $0x1a] sm:$0xff]
        %v789 = vld [vmem:[#allocation2 + $0x22] sm:$0xff]
        %v790 = vld [vmem:[#allocation2 + $0x2a] sm:$0xff]
        %v791 = vld [vmem:[#allocation2 + $0x32] sm:$0xff]
        %v792 = vld [vmem:[#allocation2 + $0x3a] sm:$0xff]
        %v793 = vld [vmem:[%s1 + $0x2] sm:$0x1]
        %795 = vset.pattern.permute.xlu0 0
        %796 = vperm.xlu0 %795, %v785
        %v797 = vpop.permute.xlu0 %796
        %800 = vset.pattern.permute.xlu0 0
        %801 = vperm.xlu0 %800, %v786
        %v802 = vpop.permute.xlu0 %801
        %805 = vset.pattern.permute.xlu0 0
        %806 = vperm.xlu0 %805, %v787
        %v807 = vpop.permute.xlu0 %806
        %810 = vset.pattern.permute.xlu0 0
        %811 = vperm.xlu0 %810, %v788
        %v812 = vpop.permute.xlu0 %811
        %815 = vset.pattern.permute.xlu0 0
        %816 = vperm.xlu0 %815, %v789
        %v817 = vpop.permute.xlu0 %816
        %820 = vset.pattern.permute.xlu0 0
        %821 = vperm.xlu0 %820, %v790
        %v822 = vpop.permute.xlu0 %821
        %825 = vset.pattern.permute.xlu0 0
        %826 = vperm.xlu0 %825, %v791
        %v827 = vpop.permute.xlu0 %826
        %830 = vset.pattern.permute.xlu0 0
        %831 = vperm.xlu0 %830, %v792
        %v832 = vpop.permute.xlu0 %831
        %v834 = vlaneseq
        %v835 = vshrl.u32 %v834, 7
        %v836 = vsub.s32 0, %v835
        %v837 = vrot.slane %v793, %v836
        %v838 = vmul.f32 %v797, %v837
        %v839 = vmul.f32 %v802, %v837
        %v840 = vmul.f32 %v807, %v837
        %v841 = vmul.f32 %v812, %v837
        %v842 = vmul.f32 %v817, %v837
        %v843 = vmul.f32 %v822, %v837
        %v844 = vmul.f32 %v827, %v837
        %v845 = vmul.f32 %v832, %v837
        %v846 = vadd.f32 %v777, %v838
        %v847 = vadd.f32 %v778, %v839
        %v848 = vadd.f32 %v779, %v840
        %v849 = vadd.f32 %v780, %v841
        %v850 = vadd.f32 %v781, %v842
        %v851 = vadd.f32 %v782, %v843
        %v852 = vadd.f32 %v783, %v844
        %v853 = vadd.f32 %v784, %v845
        %v854 = vld [vmem:[#allocation2 + $0x3] sm:$0xff]
        %v855 = vld [vmem:[#allocation2 + $0xb] sm:$0xff]
        %v856 = vld [vmem:[#allocation2 + $0x13] sm:$0xff]
        %v857 = vld [vmem:[#allocation2 + $0x1b] sm:$0xff]
        %v858 = vld [vmem:[#allocation2 + $0x23] sm:$0xff]
        %v859 = vld [vmem:[#allocation2 + $0x2b] sm:$0xff]
        %v860 = vld [vmem:[#allocation2 + $0x33] sm:$0xff]
        %v861 = vld [vmem:[#allocation2 + $0x3b] sm:$0xff]
        %v862 = vld [vmem:[%s1 + $0x3] sm:$0x1]
        %864 = vset.pattern.permute.xlu0 0
        %865 = vperm.xlu0 %864, %v854
        %v866 = vpop.permute.xlu0 %865
        %869 = vset.pattern.permute.xlu0 0
        %870 = vperm.xlu0 %869, %v855
        %v871 = vpop.permute.xlu0 %870
        %874 = vset.pattern.permute.xlu0 0
        %875 = vperm.xlu0 %874, %v856
        %v876 = vpop.permute.xlu0 %875
        %879 = vset.pattern.permute.xlu0 0
        %880 = vperm.xlu0 %879, %v857
        %v881 = vpop.permute.xlu0 %880
        %884 = vset.pattern.permute.xlu0 0
        %885 = vperm.xlu0 %884, %v858
        %v886 = vpop.permute.xlu0 %885
        %889 = vset.pattern.permute.xlu0 0
        %890 = vperm.xlu0 %889, %v859
        %v891 = vpop.permute.xlu0 %890
        %894 = vset.pattern.permute.xlu0 0
        %895 = vperm.xlu0 %894, %v860
        %v896 = vpop.permute.xlu0 %895
        %899 = vset.pattern.permute.xlu0 0
        %900 = vperm.xlu0 %899, %v861
        %v901 = vpop.permute.xlu0 %900
        %v903 = vlaneseq
        %v904 = vshrl.u32 %v903, 7
        %v905 = vsub.s32 0, %v904
        %v906 = vrot.slane %v862, %v905
        %v907 = vmul.f32 %v866, %v906
        %v908 = vmul.f32 %v871, %v906
        %v909 = vmul.f32 %v876, %v906
        %v910 = vmul.f32 %v881, %v906
        %v911 = vmul.f32 %v886, %v906
        %v912 = vmul.f32 %v891, %v906
        %v913 = vmul.f32 %v896, %v906
        %v914 = vmul.f32 %v901, %v906
        %v915 = vadd.f32 %v846, %v907
        %v916 = vadd.f32 %v847, %v908
        %v917 = vadd.f32 %v848, %v909
        %v918 = vadd.f32 %v849, %v910
        %v919 = vadd.f32 %v850, %v911
        %v920 = vadd.f32 %v851, %v912
        %v921 = vadd.f32 %v852, %v913
        %v922 = vadd.f32 %v853, %v914
        %v923 = vld [vmem:[#allocation2 + $0x4] sm:$0xff]
        %v924 = vld [vmem:[#allocation2 + $0xc] sm:$0xff]
        %v925 = vld [vmem:[#allocation2 + $0x14] sm:$0xff]
        %v926 = vld [vmem:[#allocation2 + $0x1c] sm:$0xff]
        %v927 = vld [vmem:[#allocation2 + $0x24] sm:$0xff]
        %v928 = vld [vmem:[#allocation2 + $0x2c] sm:$0xff]
        %v929 = vld [vmem:[#allocation2 + $0x34] sm:$0xff]
        %v930 = vld [vmem:[#allocation2 + $0x3c] sm:$0xff]
        %v931 = vld [vmem:[%s1 + $0x4] sm:$0x1]
        %933 = vset.pattern.permute.xlu0 0
        %934 = vperm.xlu0 %933, %v923
        %v935 = vpop.permute.xlu0 %934
        %938 = vset.pattern.permute.xlu0 0
        %939 = vperm.xlu0 %938, %v924
        %v940 = vpop.permute.xlu0 %939
        %943 = vset.pattern.permute.xlu0 0
        %944 = vperm.xlu0 %943, %v925
        %v945 = vpop.permute.xlu0 %944
        %948 = vset.pattern.permute.xlu0 0
        %949 = vperm.xlu0 %948, %v926
        %v950 = vpop.permute.xlu0 %949
        %953 = vset.pattern.permute.xlu0 0
        %954 = vperm.xlu0 %953, %v927
        %v955 = vpop.permute.xlu0 %954
        %958 = vset.pattern.permute.xlu0 0
        %959 = vperm.xlu0 %958, %v928
        %v960 = vpop.permute.xlu0 %959
        %963 = vset.pattern.permute.xlu0 0
        %964 = vperm.xlu0 %963, %v929
        %v965 = vpop.permute.xlu0 %964
        %968 = vset.pattern.permute.xlu0 0
        %969 = vperm.xlu0 %968, %v930
        %v970 = vpop.permute.xlu0 %969
        %v972 = vlaneseq
        %v973 = vshrl.u32 %v972, 7
        %v974 = vsub.s32 0, %v973
        %v975 = vrot.slane %v931, %v974
        %v976 = vmul.f32 %v935, %v975
        %v977 = vmul.f32 %v940, %v975
        %v978 = vmul.f32 %v945, %v975
        %v979 = vmul.f32 %v950, %v975
        %v980 = vmul.f32 %v955, %v975
        %v981 = vmul.f32 %v960, %v975
        %v982 = vmul.f32 %v965, %v975
        %v983 = vmul.f32 %v970, %v975
        %v984 = vadd.f32 %v915, %v976
        %v985 = vadd.f32 %v916, %v977
        %v986 = vadd.f32 %v917, %v978
        %v987 = vadd.f32 %v918, %v979
        %v988 = vadd.f32 %v919, %v980
        %v989 = vadd.f32 %v920, %v981
        %v990 = vadd.f32 %v921, %v982
        %v991 = vadd.f32 %v922, %v983
        %v992 = vld [vmem:[%s2] sm:$0x1]
        %v994 = vlaneseq
        %v995 = vshrl.u32 %v994, 7
        %v996 = vsub.s32 0, %v995
        %v997 = vrot.slane %v992, %v996
        %v999 = vmul.f32 %v984, %v997
        %v1000 = vmul.f32 %v985, %v997
        %v1001 = vmul.f32 %v986, %v997
        %v1002 = vmul.f32 %v987, %v997
        %v1003 = vmul.f32 %v988, %v997
        %v1004 = vmul.f32 %v989, %v997
        %v1005 = vmul.f32 %v990, %v997
        %v1006 = vmul.f32 %v991, %v997
        %v1007 = vld [vmem:[%s3] sm:$0x1]
        %v1009 = vlaneseq
        %v1010 = vshrl.u32 %v1009, 7
        %v1011 = vsub.s32 0, %v1010
        %v1012 = vrot.slane %v1007, %v1011
        %v1014 = vadd.f32 %v999, %v1012
        %v1015 = vadd.f32 %v1000, %v1012
        %v1016 = vadd.f32 %v1001, %v1012
        %v1017 = vadd.f32 %v1002, %v1012
        %v1018 = vadd.f32 %v1003, %v1012
        %v1019 = vadd.f32 %v1004, %v1012
        %v1020 = vadd.f32 %v1005, %v1012
        %v1021 = vadd.f32 %v1006, %v1012
        %v1022 = vmax.f32 %v1014, 0.0
        %v1023 = vmax.f32 %v1015, 0.0
        %v1024 = vmax.f32 %v1016, 0.0
        %v1025 = vmax.f32 %v1017, 0.0
        %v1026 = vmax.f32 %v1018, 0.0
        %v1027 = vmax.f32 %v1019, 0.0
        %v1028 = vmax.f32 %v1020, 0.0
        %v1029 = vmax.f32 %v1021, 0.0
        %v1038 = vcombine.high %v1022, %v1022
        %v1040 = vunpack.c.l.s4 1983009808
        %v1041 = vunpack.c.0.s8 %v1040
        %v1042 = vlaneseq
        %v1043 = vshrl.u32 %v1042, 7
        %v1044 = vsub.s32 %v1041, %v1043
        %v1045 = vrot.slane %v1022, %v1044
        %v1047 = vunpack.c.l.s4 1983009808
        %v1048 = vunpack.c.0.s8 %v1047
        %v1049 = vlaneseq
        %v1050 = vshrl.u32 %v1049, 7
        %v1051 = vsub.s32 %v1048, %v1050
        %v1052 = vrot.slane %v1038, %v1051
        %v1053 = vcombine.high %v1045, %v1045
        %v1054 = vcombine.high %v1052, %v1052
        %v1055 = vcombine.high %v1023, %v1023
        %v1057 = vunpack.c.l.s4 1983009808
        %v1058 = vunpack.c.0.s8 %v1057
        %v1059 = vlaneseq
        %v1060 = vshrl.u32 %v1059, 7
        %v1061 = vsub.s32 %v1058, %v1060
        %v1062 = vrot.slane %v1023, %v1061
        %v1064 = vunpack.c.l.s4 1983009808
        %v1065 = vunpack.c.0.s8 %v1064
        %v1066 = vlaneseq
        %v1067 = vshrl.u32 %v1066, 7
        %v1068 = vsub.s32 %v1065, %v1067
        %v1069 = vrot.slane %v1055, %v1068
        %v1070 = vcombine.high %v1062, %v1062
        %v1071 = vcombine.high %v1069, %v1069
        %v1072 = vcombine.high %v1024, %v1024
        %v1074 = vunpack.c.l.s4 1983009808
        %v1075 = vunpack.c.0.s8 %v1074
        %v1076 = vlaneseq
        %v1077 = vshrl.u32 %v1076, 7
        %v1078 = vsub.s32 %v1075, %v1077
        %v1079 = vrot.slane %v1024, %v1078
        %v1081 = vunpack.c.l.s4 1983009808
        %v1082 = vunpack.c.0.s8 %v1081
        %v1083 = vlaneseq
        %v1084 = vshrl.u32 %v1083, 7
        %v1085 = vsub.s32 %v1082, %v1084
        %v1086 = vrot.slane %v1072, %v1085
        %v1087 = vcombine.high %v1079, %v1079
        %v1088 = vcombine.high %v1086, %v1086
        %v1089 = vcombine.high %v1025, %v1025
        %v1091 = vunpack.c.l.s4 1983009808
        %v1092 = vunpack.c.0.s8 %v1091
        %v1093 = vlaneseq
        %v1094 = vshrl.u32 %v1093, 7
        %v1095 = vsub.s32 %v1092, %v1094
        %v1096 = vrot.slane %v1025, %v1095
        %v1098 = vunpack.c.l.s4 1983009808
        %v1099 = vunpack.c.0.s8 %v1098
        %v1100 = vlaneseq
        %v1101 = vshrl.u32 %v1100, 7
        %v1102 = vsub.s32 %v1099, %v1101
        %v1103 = vrot.slane %v1089, %v1102
        %v1104 = vcombine.high %v1096, %v1096
        %v1105 = vcombine.high %v1103, %v1103
        %v1106 = vcombine.high %v1026, %v1026
        %v1108 = vunpack.c.l.s4 1983009808
        %v1109 = vunpack.c.0.s8 %v1108
        %v1110 = vlaneseq
        %v1111 = vshrl.u32 %v1110, 7
        %v1112 = vsub.s32 %v1109, %v1111
        %v1113 = vrot.slane %v1026, %v1112
        %v1115 = vunpack.c.l.s4 1983009808
        %v1116 = vunpack.c.0.s8 %v1115
        %v1117 = vlaneseq
        %v1118 = vshrl.u32 %v1117, 7
        %v1119 = vsub.s32 %v1116, %v1118
        %v1120 = vrot.slane %v1106, %v1119
        %v1121 = vcombine.high %v1113, %v1113
        %v1122 = vcombine.high %v1120, %v1120
        %v1123 = vcombine.high %v1027, %v1027
        %v1125 = vunpack.c.l.s4 1983009808
        %v1126 = vunpack.c.0.s8 %v1125
        %v1127 = vlaneseq
        %v1128 = vshrl.u32 %v1127, 7
        %v1129 = vsub.s32 %v1126, %v1128
        %v1130 = vrot.slane %v1027, %v1129
        %v1132 = vunpack.c.l.s4 1983009808
        %v1133 = vunpack.c.0.s8 %v1132
        %v1134 = vlaneseq
        %v1135 = vshrl.u32 %v1134, 7
        %v1136 = vsub.s32 %v1133, %v1135
        %v1137 = vrot.slane %v1123, %v1136
        %v1138 = vcombine.high %v1130, %v1130
        %v1139 = vcombine.high %v1137, %v1137
        %v1140 = vcombine.high %v1028, %v1028
        %v1142 = vunpack.c.l.s4 1983009808
        %v1143 = vunpack.c.0.s8 %v1142
        %v1144 = vlaneseq
        %v1145 = vshrl.u32 %v1144, 7
        %v1146 = vsub.s32 %v1143, %v1145
        %v1147 = vrot.slane %v1028, %v1146
        %v1149 = vunpack.c.l.s4 1983009808
        %v1150 = vunpack.c.0.s8 %v1149
        %v1151 = vlaneseq
        %v1152 = vshrl.u32 %v1151, 7
        %v1153 = vsub.s32 %v1150, %v1152
        %v1154 = vrot.slane %v1140, %v1153
        %v1155 = vcombine.high %v1147, %v1147
        %v1156 = vcombine.high %v1154, %v1154
        %v1157 = vcombine.high %v1029, %v1029
        %v1159 = vunpack.c.l.s4 1983009808
        %v1160 = vunpack.c.0.s8 %v1159
        %v1161 = vlaneseq
        %v1162 = vshrl.u32 %v1161, 7
        %v1163 = vsub.s32 %v1160, %v1162
        %v1164 = vrot.slane %v1029, %v1163
        %v1166 = vunpack.c.l.s4 1983009808
        %v1167 = vunpack.c.0.s8 %v1166
        %v1168 = vlaneseq
        %v1169 = vshrl.u32 %v1168, 7
        %v1170 = vsub.s32 %v1167, %v1169
        %v1171 = vrot.slane %v1157, %v1170
        %v1172 = vcombine.high %v1164, %v1164
        %v1173 = vcombine.high %v1171, %v1171
        %vm1206 = vcmask 58368
        %v1207 = vsel %vm1206, %v1045, -inf
        %v1208 = vrot.slane %v1207, 4
        %v1209 = vmax.f32 %v1207, %v1208
        %v1210 = vrot.slane %v1209, 2
        %v1211 = vmax.f32 %v1209, %v1210
        %v1212 = vrot.slane %v1211, 1
        %v1213 = vmax.f32 %v1211, %v1212
        %v1214 = vsel %vm1206, %v1053, -inf
        %v1215 = vrot.slane %v1214, 4
        %v1216 = vmax.f32 %v1214, %v1215
        %v1217 = vrot.slane %v1216, 2
        %v1218 = vmax.f32 %v1216, %v1217
        %v1219 = vrot.slane %v1218, 1
        %v1220 = vmax.f32 %v1218, %v1219
        %v1221 = vsel %vm1206, %v1052, -inf
        %v1222 = vrot.slane %v1221, 4
        %v1223 = vmax.f32 %v1221, %v1222
        %v1224 = vrot.slane %v1223, 2
        %v1225 = vmax.f32 %v1223, %v1224
        %v1226 = vrot.slane %v1225, 1
        %v1227 = vmax.f32 %v1225, %v1226
        %v1228 = vsel %vm1206, %v1054, -inf
        %v1229 = vrot.slane %v1228, 4
        %v1230 = vmax.f32 %v1228, %v1229
        %v1231 = vrot.slane %v1230, 2
        %v1232 = vmax.f32 %v1230, %v1231
        %v1233 = vrot.slane %v1232, 1
        %v1234 = vmax.f32 %v1232, %v1233
        %v1235 = vsel %vm1206, %v1062, -inf
        %v1236 = vrot.slane %v1235, 4
        %v1237 = vmax.f32 %v1235, %v1236
        %v1238 = vrot.slane %v1237, 2
        %v1239 = vmax.f32 %v1237, %v1238
        %v1240 = vrot.slane %v1239, 1
        %v1241 = vmax.f32 %v1239, %v1240
        %v1242 = vsel %vm1206, %v1070, -inf
        %v1243 = vrot.slane %v1242, 4
        %v1244 = vmax.f32 %v1242, %v1243
        %v1245 = vrot.slane %v1244, 2
        %v1246 = vmax.f32 %v1244, %v1245
        %v1247 = vrot.slane %v1246, 1
        %v1248 = vmax.f32 %v1246, %v1247
        %v1249 = vsel %vm1206, %v1069, -inf
        %v1250 = vrot.slane %v1249, 4
        %v1251 = vmax.f32 %v1249, %v1250
        %v1252 = vrot.slane %v1251, 2
        %v1253 = vmax.f32 %v1251, %v1252
        %v1254 = vrot.slane %v1253, 1
        %v1255 = vmax.f32 %v1253, %v1254
        %v1256 = vsel %vm1206, %v1071, -inf
        %v1257 = vrot.slane %v1256, 4
        %v1258 = vmax.f32 %v1256, %v1257
        %v1259 = vrot.slane %v1258, 2
        %v1260 = vmax.f32 %v1258, %v1259
        %v1261 = vrot.slane %v1260, 1
        %v1262 = vmax.f32 %v1260, %v1261
        %v1263 = vsel %vm1206, %v1079, -inf
        %v1264 = vrot.slane %v1263, 4
        %v1265 = vmax.f32 %v1263, %v1264
        %v1266 = vrot.slane %v1265, 2
        %v1267 = vmax.f32 %v1265, %v1266
        %v1268 = vrot.slane %v1267, 1
        %v1269 = vmax.f32 %v1267, %v1268
        %v1270 = vsel %vm1206, %v1087, -inf
        %v1271 = vrot.slane %v1270, 4
        %v1272 = vmax.f32 %v1270, %v1271
        %v1273 = vrot.slane %v1272, 2
        %v1274 = vmax.f32 %v1272, %v1273
        %v1275 = vrot.slane %v1274, 1
        %v1276 = vmax.f32 %v1274, %v1275
        %v1277 = vsel %vm1206, %v1086, -inf
        %v1278 = vrot.slane %v1277, 4
        %v1279 = vmax.f32 %v1277, %v1278
        %v1280 = vrot.slane %v1279, 2
        %v1281 = vmax.f32 %v1279, %v1280
        %v1282 = vrot.slane %v1281, 1
        %v1283 = vmax.f32 %v1281, %v1282
        %v1284 = vsel %vm1206, %v1088, -inf
        %v1285 = vrot.slane %v1284, 4
        %v1286 = vmax.f32 %v1284, %v1285
        %v1287 = vrot.slane %v1286, 2
        %v1288 = vmax.f32 %v1286, %v1287
        %v1289 = vrot.slane %v1288, 1
        %v1290 = vmax.f32 %v1288, %v1289
        %v1291 = vsel %vm1206, %v1096, -inf
        %v1292 = vrot.slane %v1291, 4
        %v1293 = vmax.f32 %v1291, %v1292
        %v1294 = vrot.slane %v1293, 2
        %v1295 = vmax.f32 %v1293, %v1294
        %v1296 = vrot.slane %v1295, 1
        %v1297 = vmax.f32 %v1295, %v1296
        %v1298 = vsel %vm1206, %v1104, -inf
        %v1299 = vrot.slane %v1298, 4
        %v1300 = vmax.f32 %v1298, %v1299
        %v1301 = vrot.slane %v1300, 2
        %v1302 = vmax.f32 %v1300, %v1301
        %v1303 = vrot.slane %v1302, 1
        %v1304 = vmax.f32 %v1302, %v1303
        %v1305 = vsel %vm1206, %v1103, -inf
        %v1306 = vrot.slane %v1305, 4
        %v1307 = vmax.f32 %v1305, %v1306
        %v1308 = vrot.slane %v1307, 2
        %v1309 = vmax.f32 %v1307, %v1308
        %v1310 = vrot.slane %v1309, 1
        %v1311 = vmax.f32 %v1309, %v1310
        %v1312 = vsel %vm1206, %v1105, -inf
        %v1313 = vrot.slane %v1312, 4
        %v1314 = vmax.f32 %v1312, %v1313
        %v1315 = vrot.slane %v1314, 2
        %v1316 = vmax.f32 %v1314, %v1315
        %v1317 = vrot.slane %v1316, 1
        %v1318 = vmax.f32 %v1316, %v1317
        %v1319 = vsel %vm1206, %v1113, -inf
        %v1320 = vrot.slane %v1319, 4
        %v1321 = vmax.f32 %v1319, %v1320
        %v1322 = vrot.slane %v1321, 2
        %v1323 = vmax.f32 %v1321, %v1322
        %v1324 = vrot.slane %v1323, 1
        %v1325 = vmax.f32 %v1323, %v1324
        %v1326 = vsel %vm1206, %v1121, -inf
        %v1327 = vrot.slane %v1326, 4
        %v1328 = vmax.f32 %v1326, %v1327
        %v1329 = vrot.slane %v1328, 2
        %v1330 = vmax.f32 %v1328, %v1329
        %v1331 = vrot.slane %v1330, 1
        %v1332 = vmax.f32 %v1330, %v1331
        %v1333 = vsel %vm1206, %v1120, -inf
        %v1334 = vrot.slane %v1333, 4
        %v1335 = vmax.f32 %v1333, %v1334
        %v1336 = vrot.slane %v1335, 2
        %v1337 = vmax.f32 %v1335, %v1336
        %v1338 = vrot.slane %v1337, 1
        %v1339 = vmax.f32 %v1337, %v1338
        %v1340 = vsel %vm1206, %v1122, -inf
        %v1341 = vrot.slane %v1340, 4
        %v1342 = vmax.f32 %v1340, %v1341
        %v1343 = vrot.slane %v1342, 2
        %v1344 = vmax.f32 %v1342, %v1343
        %v1345 = vrot.slane %v1344, 1
        %v1346 = vmax.f32 %v1344, %v1345
        %v1347 = vsel %vm1206, %v1130, -inf
        %v1348 = vrot.slane %v1347, 4
        %v1349 = vmax.f32 %v1347, %v1348
        %v1350 = vrot.slane %v1349, 2
        %v1351 = vmax.f32 %v1349, %v1350
        %v1352 = vrot.slane %v1351, 1
        %v1353 = vmax.f32 %v1351, %v1352
        %v1354 = vsel %vm1206, %v1138, -inf
        %v1355 = vrot.slane %v1354, 4
        %v1356 = vmax.f32 %v1354, %v1355
        %v1357 = vrot.slane %v1356, 2
        %v1358 = vmax.f32 %v1356, %v1357
        %v1359 = vrot.slane %v1358, 1
        %v1360 = vmax.f32 %v1358, %v1359
        %v1361 = vsel %vm1206, %v1137, -inf
        %v1362 = vrot.slane %v1361, 4
        %v1363 = vmax.f32 %v1361, %v1362
        %v1364 = vrot.slane %v1363, 2
        %v1365 = vmax.f32 %v1363, %v1364
        %v1366 = vrot.slane %v1365, 1
        %v1367 = vmax.f32 %v1365, %v1366
        %v1368 = vsel %vm1206, %v1139, -inf
        %v1369 = vrot.slane %v1368, 4
        %v1370 = vmax.f32 %v1368, %v1369
        %v1371 = vrot.slane %v1370, 2
        %v1372 = vmax.f32 %v1370, %v1371
        %v1373 = vrot.slane %v1372, 1
        %v1374 = vmax.f32 %v1372, %v1373
        %v1375 = vsel %vm1206, %v1147, -inf
        %v1376 = vrot.slane %v1375, 4
        %v1377 = vmax.f32 %v1375, %v1376
        %v1378 = vrot.slane %v1377, 2
        %v1379 = vmax.f32 %v1377, %v1378
        %v1380 = vrot.slane %v1379, 1
        %v1381 = vmax.f32 %v1379, %v1380
        %v1382 = vsel %vm1206, %v1155, -inf
        %v1383 = vrot.slane %v1382, 4
        %v1384 = vmax.f32 %v1382, %v1383
        %v1385 = vrot.slane %v1384, 2
        %v1386 = vmax.f32 %v1384, %v1385
        %v1387 = vrot.slane %v1386, 1
        %v1388 = vmax.f32 %v1386, %v1387
        %v1389 = vsel %vm1206, %v1154, -inf
        %v1390 = vrot.slane %v1389, 4
        %v1391 = vmax.f32 %v1389, %v1390
        %v1392 = vrot.slane %v1391, 2
        %v1393 = vmax.f32 %v1391, %v1392
        %v1394 = vrot.slane %v1393, 1
        %v1395 = vmax.f32 %v1393, %v1394
        %v1396 = vsel %vm1206, %v1156, -inf
        %v1397 = vrot.slane %v1396, 4
        %v1398 = vmax.f32 %v1396, %v1397
        %v1399 = vrot.slane %v1398, 2
        %v1400 = vmax.f32 %v1398, %v1399
        %v1401 = vrot.slane %v1400, 1
        %v1402 = vmax.f32 %v1400, %v1401
        %v1403 = vsel %vm1206, %v1164, -inf
        %v1404 = vrot.slane %v1403, 4
        %v1405 = vmax.f32 %v1403, %v1404
        %v1406 = vrot.slane %v1405, 2
        %v1407 = vmax.f32 %v1405, %v1406
        %v1408 = vrot.slane %v1407, 1
        %v1409 = vmax.f32 %v1407, %v1408
        %v1410 = vsel %vm1206, %v1172, -inf
        %v1411 = vrot.slane %v1410, 4
        %v1412 = vmax.f32 %v1410, %v1411
        %v1413 = vrot.slane %v1412, 2
        %v1414 = vmax.f32 %v1412, %v1413
        %v1415 = vrot.slane %v1414, 1
        %v1416 = vmax.f32 %v1414, %v1415
        %v1417 = vsel %vm1206, %v1171, -inf
        %v1418 = vrot.slane %v1417, 4
        %v1419 = vmax.f32 %v1417, %v1418
        %v1420 = vrot.slane %v1419, 2
        %v1421 = vmax.f32 %v1419, %v1420
        %v1422 = vrot.slane %v1421, 1
        %v1423 = vmax.f32 %v1421, %v1422
        %v1424 = vsel %vm1206, %v1173, -inf
        %v1425 = vrot.slane %v1424, 4
        %v1426 = vmax.f32 %v1424, %v1425
        %v1427 = vrot.slane %v1426, 2
        %v1428 = vmax.f32 %v1426, %v1427
        %v1429 = vrot.slane %v1428, 1
        %v1430 = vmax.f32 %v1428, %v1429
        %1431 = vst.msk [vmem:[#allocation2] sm:$0x3] %vm1206, 0.0
        %1432 = vst.msk [vmem:[#allocation2 + $0x22] sm:$0x3] %vm1206, 0.0
        %vm1465 = vcmask 1041409
        %v1466 = vsel %vm1465, %v1220, %v1213
        %vm1467 = vcmask 1042434
        %v1468 = vsel %vm1467, %v1227, %v1466
        %vm1469 = vcmask 1043459
        %v1470 = vsel %vm1469, %v1234, %v1468
        %vm1471 = vcmask 1044484
        %v1472 = vsel %vm1471, %v1241, %v1470
        %vm1473 = vcmask 1045509
        %v1474 = vsel %vm1473, %v1248, %v1472
        %vm1475 = vcmask 1046534
        %v1476 = vsel %vm1475, %v1255, %v1474
        %vm1477 = vcmask 1047559
        %v1478 = vsel %vm1477, %v1262, %v1476
        %v1479 = vsel %vm1465, %v1276, %v1269
        %v1480 = vsel %vm1467, %v1283, %v1479
        %v1481 = vsel %vm1469, %v1290, %v1480
        %v1482 = vsel %vm1471, %v1297, %v1481
        %v1483 = vsel %vm1473, %v1304, %v1482
        %v1484 = vsel %vm1475, %v1311, %v1483
        %v1485 = vsel %vm1477, %v1318, %v1484
        %v1486 = vsel %vm1465, %v1332, %v1325
        %v1487 = vsel %vm1467, %v1339, %v1486
        %v1488 = vsel %vm1469, %v1346, %v1487
        %v1489 = vsel %vm1471, %v1353, %v1488
        %v1490 = vsel %vm1473, %v1360, %v1489
        %v1491 = vsel %vm1475, %v1367, %v1490
        %v1492 = vsel %vm1477, %v1374, %v1491
        %v1493 = vsel %vm1465, %v1388, %v1381
        %v1494 = vsel %vm1467, %v1395, %v1493
        %v1495 = vsel %vm1469, %v1402, %v1494
        %v1496 = vsel %vm1471, %v1409, %v1495
        %v1497 = vsel %vm1473, %v1416, %v1496
        %v1498 = vsel %vm1475, %v1423, %v1497
        %v1499 = vsel %vm1477, %v1430, %v1498
        %vm1504 = vcmask 64512
        %1505 = vst.msk [vmem:[#allocation2 + $0x2] sm:$0xff] %vm1504, %v1478
        %1506 = vst.msk [vmem:[#allocation2 + $0xa] sm:$0xff] %vm1504, %v1485
        %1507 = vst.msk [vmem:[#allocation2 + $0x12] sm:$0xff] %vm1504, %v1492
        %1508 = vst.msk [vmem:[#allocation2 + $0x1a] sm:$0xff] %vm1504, %v1499
        %v1509 = vld [vmem:[#allocation2] sm:$0xff]
        %v1510 = vld [vmem:[#allocation2 + $0x8] sm:$0xff]
        %v1511 = vld [vmem:[#allocation2 + $0x10] sm:$0xff]
        %v1512 = vld [vmem:[#allocation2 + $0x18] sm:$0xff]
        %1513 = vst.msk [vmem:[#allocation3] sm:$0xff] %vm1504, %v1509
        %1514 = vst.msk [vmem:[#allocation3 + $0x18] sm:$0xff] %vm1504, %v1510
        %1515 = vst.msk [vmem:[#allocation3 + $0x30] sm:$0xff] %vm1504, %v1511
        %1516 = vst.msk [vmem:[#allocation3 + $0x48] sm:$0xff] %vm1504, %v1512
        %v1517 = vld [vmem:[#allocation2 + $0x1] sm:$0xff]
        %v1518 = vld [vmem:[#allocation2 + $0x9] sm:$0xff]
        %v1519 = vld [vmem:[#allocation2 + $0x11] sm:$0xff]
        %v1520 = vld [vmem:[#allocation2 + $0x19] sm:$0xff]
        %1525 = vrot.lane.b32.xlu0 %v1517, 8
        %v1526 = vpop.permute.xlu0 %1525
        %1527 = vrot.lane.b32.xlu0 %v1518, 8
        %v1528 = vpop.permute.xlu0 %1527
        %1529 = vrot.lane.b32.xlu0 %v1519, 8
        %v1530 = vpop.permute.xlu0 %1529
        %1531 = vrot.lane.b32.xlu0 %v1520, 8
        %v1532 = vpop.permute.xlu0 %1531
        %vm1537 = vcmask 130112
        %1538 = vst.msk [vmem:[#allocation3] sm:$0xff] %vm1537, %v1526
        %1539 = vst.msk [vmem:[#allocation3 + $0x18] sm:$0xff] %vm1537, %v1528
        %1540 = vst.msk [vmem:[#allocation3 + $0x30] sm:$0xff] %vm1537, %v1530
        %1541 = vst.msk [vmem:[#allocation3 + $0x48] sm:$0xff] %vm1537, %v1532
        %v1542 = vld [vmem:[#allocation2 + $0x2] sm:$0xff]
        %v1543 = vld [vmem:[#allocation2 + $0xa] sm:$0xff]
        %v1544 = vld [vmem:[#allocation2 + $0x12] sm:$0xff]
        %v1545 = vld [vmem:[#allocation2 + $0x1a] sm:$0xff]
        %1550 = vrot.lane.b32.xlu0 %v1542, 16
        %v1551 = vpop.permute.xlu0 %1550
        %1552 = vrot.lane.b32.xlu0 %v1543, 16
        %v1553 = vpop.permute.xlu0 %1552
        %1554 = vrot.lane.b32.xlu0 %v1544, 16
        %v1555 = vpop.permute.xlu0 %1554
        %1556 = vrot.lane.b32.xlu0 %v1545, 16
        %v1557 = vpop.permute.xlu0 %1556
        %vm1562 = vcmask 195712
        %1563 = vst.msk [vmem:[#allocation3] sm:$0xff] %vm1562, %v1551
        %1564 = vst.msk [vmem:[#allocation3 + $0x18] sm:$0xff] %vm1562, %v1553
        %1565 = vst.msk [vmem:[#allocation3 + $0x30] sm:$0xff] %vm1562, %v1555
        %1566 = vst.msk [vmem:[#allocation3 + $0x48] sm:$0xff] %vm1562, %v1557
        %v1567 = vld [vmem:[#allocation2 + $0x3] sm:$0xff]
        %v1568 = vld [vmem:[#allocation2 + $0xb] sm:$0xff]
        %v1569 = vld [vmem:[#allocation2 + $0x13] sm:$0xff]
        %v1570 = vld [vmem:[#allocation2 + $0x1b] sm:$0xff]
        %1575 = vrot.lane.b32.xlu0 %v1567, 24
        %v1576 = vpop.permute.xlu0 %1575
        %1577 = vrot.lane.b32.xlu0 %v1568, 24
        %v1578 = vpop.permute.xlu0 %1577
        %1579 = vrot.lane.b32.xlu0 %v1569, 24
        %v1580 = vpop.permute.xlu0 %1579
        %1581 = vrot.lane.b32.xlu0 %v1570, 24
        %v1582 = vpop.permute.xlu0 %1581
        %vm1587 = vcmask 261312
        %1588 = vst.msk [vmem:[#allocation3] sm:$0xff] %vm1587, %v1576
        %1589 = vst.msk [vmem:[#allocation3 + $0x18] sm:$0xff] %vm1587, %v1578
        %1590 = vst.msk [vmem:[#allocation3 + $0x30] sm:$0xff] %vm1587, %v1580
        %1591 = vst.msk [vmem:[#allocation3 + $0x48] sm:$0xff] %vm1587, %v1582
        %v1592 = vld [vmem:[#allocation2 + $0x4] sm:$0xff]
        %v1593 = vld [vmem:[#allocation2 + $0xc] sm:$0xff]
        %v1594 = vld [vmem:[#allocation2 + $0x14] sm:$0xff]
        %v1595 = vld [vmem:[#allocation2 + $0x1c] sm:$0xff]
        %1600 = vrot.lane.b32.xlu0 %v1592, 32
        %v1601 = vpop.permute.xlu0 %1600
        %1602 = vrot.lane.b32.xlu0 %v1593, 32
        %v1603 = vpop.permute.xlu0 %1602
        %1604 = vrot.lane.b32.xlu0 %v1594, 32
        %v1605 = vpop.permute.xlu0 %1604
        %1606 = vrot.lane.b32.xlu0 %v1595, 32
        %v1607 = vpop.permute.xlu0 %1606
        %vm1612 = vcmask 326912
        %1613 = vst.msk [vmem:[#allocation3] sm:$0xff] %vm1612, %v1601
        %1614 = vst.msk [vmem:[#allocation3 + $0x18] sm:$0xff] %vm1612, %v1603
        %1615 = vst.msk [vmem:[#allocation3 + $0x30] sm:$0xff] %vm1612, %v1605
        %1616 = vst.msk [vmem:[#allocation3 + $0x48] sm:$0xff] %vm1612, %v1607
        %v1617 = vld [vmem:[#allocation3] sm:$0xff]
        %v1618 = vld [vmem:[#allocation3 + $0x18] sm:$0xff]
        %v1619 = vld [vmem:[#allocation3 + $0x30] sm:$0xff]
        %v1620 = vld [vmem:[#allocation3 + $0x48] sm:$0xff]
        %v1621 = vld [vmem:[%s4] sm:$0xff]
        %v1622 = vld [vmem:[%s4 + $0x8] sm:$0xff]
        %v1623 = vld [vmem:[%s4 + $0x10] sm:$0xff]
        %v1624 = vld [vmem:[%s4 + $0x18] sm:$0xff]
        %v1625 = vld [vmem:[%s4 + $0x20] sm:$0xff]
        %vm1626 = vcmask 326656
        %v1628 = vsel %vm1626, %v1617, 0
        %v1631 = vsel %vm1626, %v1618, 0
        %v1634 = vsel %vm1626, %v1619, 0
        %v1637 = vsel %vm1626, %v1620, 0
        %1639 = vmatprep.subr.mxu0 0.0
        %1640 = vmatpush1.msra.mxu0 %v1621
        %1641 = vmatprep.subr.mxu0 0.0
        %1642 = vmatpush1.msra.mxu0 %v1622
        %1643 = vmatprep.subr.mxu0 0.0
        %1644 = vmatpush1.msra.mxu0 %v1623
        %1645 = vmatprep.subr.mxu0 0.0
        %1646 = vmatpush1.msra.mxu0 %v1624
        %1647 = vmatprep.subr.mxu0 0.0
        %1648 = vmatpush1.msra.mxu0 %v1625
        %1649 = vmatprep.subr.mxu0 0.0
        %1650 = vmatpush1.msra.mxu0 0.0
        %1651 = vmatprep.subr.mxu0 0.0
        %1652 = vmatpush1.msra.mxu0 0.0
        %1653 = vmatprep.subr.mxu0 0.0
        %1654 = vmatpush1.msra.mxu0 0.0
        %1655 = vmatprep.subr.mxu0 0.0
        %1656 = vmatpush1.msra.mxu0 0.0
        %1657 = vmatprep.subr.mxu0 0.0
        %1658 = vmatpush1.msra.mxu0 0.0
        %1659 = vmatprep.subr.mxu0 0.0
        %1660 = vmatpush1.msra.mxu0 0.0
        %1661 = vmatprep.subr.mxu0 0.0
        %1662 = vmatpush1.msra.mxu0 0.0
        %1663 = vmatprep.subr.mxu0 0.0
        %1664 = vmatpush1.msra.mxu0 0.0
        %1665 = vmatprep.subr.mxu0 0.0
        %1666 = vmatpush1.msra.mxu0 0.0
        %1667 = vmatprep.subr.mxu0 0.0
        %1668 = vmatpush1.msra.mxu0 0.0
        %1669 = vmatprep.subr.mxu0 0.0
        %1670 = vmatpush1.msra.mxu0 0.0
        %1671 = vmatprep.subr.mxu0 0.0
        %1672 = vmatpush1.msra.mxu0 0.0
        %1673 = vmatprep.subr.mxu0 0.0
        %1674 = vmatpush1.msra.mxu0 0.0
        %1675 = vmatprep.subr.mxu0 0.0
        %1676 = vmatpush1.msra.mxu0 0.0
        %1677 = vmatprep.subr.mxu0 0.0
        %1678 = vmatpush1.msra.mxu0 0.0
        %1679 = vmatprep.subr.mxu0 0.0
        %1680 = vmatpush1.msra.mxu0 0.0
        %1681 = vmatprep.subr.mxu0 0.0
        %1682 = vmatpush1.msra.mxu0 0.0
        %1683 = vmatprep.subr.mxu0 0.0
        %1684 = vmatpush1.msra.mxu0 0.0
        %1685 = vmatprep.subr.mxu0 0.0
        %1686 = vmatpush1.msra.mxu0 0.0
        %1687 = vmatprep.subr.mxu0 0.0
        %1688 = vmatpush1.msra.mxu0 0.0
        %1689 = vmatprep.subr.mxu0 0.0
        %1690 = vmatpush1.msra.mxu0 0.0
        %1691 = vmatprep.subr.mxu0 0.0
        %1692 = vmatpush1.msra.mxu0 0.0
        %1693 = vmatprep.subr.mxu0 0.0
        %1694 = vmatpush1.msra.mxu0 0.0
        %1695 = vmatprep.subr.mxu0 0.0
        %1696 = vmatpush1.msra.mxu0 0.0
        %1697 = vmatprep.subr.mxu0 0.0
        %1698 = vmatpush1.msra.mxu0 0.0
        %1699 = vmatprep.subr.mxu0 0.0
        %1700 = vmatpush1.msra.mxu0 0.0
        %1701 = vmatprep.subr.mxu0 0.0
        %1702 = vmatpush1.msra.mxu0 0.0
        %1703 = vmatprep.mubr.f32.mxu0 0.0
        %1704 = vmatmul.mubr.f32.gmra.mrb[0].mxu0 %v1628
        %v1705 = vpop.f32.mrb[0].mxu0
        %v1706 = vadd.f32 0.0, %v1705
        %v1707 = vpop.f32.mrb[0].mxu0
        %1708 = vmatprep.mubr.f32.mxu0 0.0
        %1709 = vmatmul.mubr.f32.gmra.mrb[0].mxu0 %v1631
        %v1710 = vpop.f32.mrb[0].mxu0
        %v1711 = vadd.f32 0.0, %v1710
        %v1712 = vpop.f32.mrb[0].mxu0
        %1713 = vmatprep.mubr.f32.mxu0 0.0
        %1714 = vmatmul.mubr.f32.gmra.mrb[0].mxu0 %v1634
        %v1715 = vpop.f32.mrb[0].mxu0
        %v1716 = vadd.f32 0.0, %v1715
        %v1717 = vpop.f32.mrb[0].mxu0
        %1718 = vmatprep.mubr.f32.mxu0 0.0
        %1719 = vmatmul.mubr.f32.gmra.mrb[0].mxu0 %v1637
        %v1720 = vpop.f32.mrb[0].mxu0
        %v1721 = vadd.f32 0.0, %v1720
        %v1722 = vpop.f32.mrb[0].mxu0
        %1723 = vdwg.mxu0
        %v1724 = vld [vmem:[%s5] sm:$0x1]
        %v1726 = vlaneseq
        %v1727 = vshrl.u32 %v1726, 7
        %v1728 = vsub.s32 0, %v1727
        %v1729 = vrot.slane %v1724, %v1728
        %v1731 = vmul.f32 %v1706, %v1729
        %v1732 = vmul.f32 %v1711, %v1729
        %v1733 = vmul.f32 %v1716, %v1729
        %v1734 = vmul.f32 %v1721, %v1729
        %v1735 = vld [vmem:[%s6] sm:$0x1]
        %v1737 = vlaneseq
        %v1738 = vshrl.u32 %v1737, 7
        %v1739 = vsub.s32 0, %v1738
        %v1740 = vrot.slane %v1735, %v1739
        %v1742 = vadd.f32 %v1731, %v1740
        %v1743 = vadd.f32 %v1732, %v1740
        %v1744 = vadd.f32 %v1733, %v1740
        %v1745 = vadd.f32 %v1734, %v1740
        %v1746 = vmax.f32 %v1742, 0.0
        %v1747 = vmax.f32 %v1743, 0.0
        %v1748 = vmax.f32 %v1744, 0.0
        %v1749 = vmax.f32 %v1745, 0.0
        %v1754 = vcombine.high %v1746, %v1746
        %v1756 = vunpack.c.l.s4 1983009808
        %v1757 = vunpack.c.0.s8 %v1756
        %v1758 = vlaneseq
        %v1759 = vshrl.u32 %v1758, 7
        %v1760 = vsub.s32 %v1757, %v1759
        %v1761 = vrot.slane %v1746, %v1760
        %v1763 = vunpack.c.l.s4 1983009808
        %v1764 = vunpack.c.0.s8 %v1763
        %v1765 = vlaneseq
        %v1766 = vshrl.u32 %v1765, 7
        %v1767 = vsub.s32 %v1764, %v1766
        %v1768 = vrot.slane %v1754, %v1767
        %v1769 = vcombine.high %v1761, %v1761
        %v1770 = vcombine.high %v1768, %v1768
        %v1771 = vcombine.high %v1747, %v1747
        %v1773 = vunpack.c.l.s4 1983009808
        %v1774 = vunpack.c.0.s8 %v1773
        %v1775 = vlaneseq
        %v1776 = vshrl.u32 %v1775, 7
        %v1777 = vsub.s32 %v1774, %v1776
        %v1778 = vrot.slane %v1747, %v1777
        %v1780 = vunpack.c.l.s4 1983009808
        %v1781 = vunpack.c.0.s8 %v1780
        %v1782 = vlaneseq
        %v1783 = vshrl.u32 %v1782, 7
        %v1784 = vsub.s32 %v1781, %v1783
        %v1785 = vrot.slane %v1771, %v1784
        %v1786 = vcombine.high %v1778, %v1778
        %v1787 = vcombine.high %v1785, %v1785
        %v1788 = vcombine.high %v1748, %v1748
        %v1790 = vunpack.c.l.s4 1983009808
        %v1791 = vunpack.c.0.s8 %v1790
        %v1792 = vlaneseq
        %v1793 = vshrl.u32 %v1792, 7
        %v1794 = vsub.s32 %v1791, %v1793
        %v1795 = vrot.slane %v1748, %v1794
        %v1797 = vunpack.c.l.s4 1983009808
        %v1798 = vunpack.c.0.s8 %v1797
        %v1799 = vlaneseq
        %v1800 = vshrl.u32 %v1799, 7
        %v1801 = vsub.s32 %v1798, %v1800
        %v1802 = vrot.slane %v1788, %v1801
        %v1803 = vcombine.high %v1795, %v1795
        %v1804 = vcombine.high %v1802, %v1802
        %v1805 = vcombine.high %v1749, %v1749
        %v1807 = vunpack.c.l.s4 1983009808
        %v1808 = vunpack.c.0.s8 %v1807
        %v1809 = vlaneseq
        %v1810 = vshrl.u32 %v1809, 7
        %v1811 = vsub.s32 %v1808, %v1810
        %v1812 = vrot.slane %v1749, %v1811
        %v1814 = vunpack.c.l.s4 1983009808
        %v1815 = vunpack.c.0.s8 %v1814
        %v1816 = vlaneseq
        %v1817 = vshrl.u32 %v1816, 7
        %v1818 = vsub.s32 %v1815, %v1817
        %v1819 = vrot.slane %v1805, %v1818
        %v1820 = vcombine.high %v1812, %v1812
        %v1821 = vcombine.high %v1819, %v1819
        %vm1838 = vcmask 123904
        %v1839 = vsel %vm1838, %v1761, -inf
        %v1840 = vrot.slane %v1839, 4
        %v1841 = vmax.f32 %v1839, %v1840
        %v1842 = vrot.slane %v1841, 2
        %v1843 = vmax.f32 %v1841, %v1842
        %v1844 = vrot.slane %v1843, 1
        %v1845 = vmax.f32 %v1843, %v1844
        %v1846 = vsel %vm1838, %v1769, -inf
        %v1847 = vrot.slane %v1846, 4
        %v1848 = vmax.f32 %v1846, %v1847
        %v1849 = vrot.slane %v1848, 2
        %v1850 = vmax.f32 %v1848, %v1849
        %v1851 = vrot.slane %v1850, 1
        %v1852 = vmax.f32 %v1850, %v1851
        %v1853 = vsel %vm1838, %v1768, -inf
        %v1854 = vrot.slane %v1853, 4
        %v1855 = vmax.f32 %v1853, %v1854
        %v1856 = vrot.slane %v1855, 2
        %v1857 = vmax.f32 %v1855, %v1856
        %v1858 = vrot.slane %v1857, 1
        %v1859 = vmax.f32 %v1857, %v1858
        %v1860 = vsel %vm1838, %v1770, -inf
        %v1861 = vrot.slane %v1860, 4
        %v1862 = vmax.f32 %v1860, %v1861
        %v1863 = vrot.slane %v1862, 2
        %v1864 = vmax.f32 %v1862, %v1863
        %v1865 = vrot.slane %v1864, 1
        %v1866 = vmax.f32 %v1864, %v1865
        %v1867 = vsel %vm1838, %v1778, -inf
        %v1868 = vrot.slane %v1867, 4
        %v1869 = vmax.f32 %v1867, %v1868
        %v1870 = vrot.slane %v1869, 2
        %v1871 = vmax.f32 %v1869, %v1870
        %v1872 = vrot.slane %v1871, 1
        %v1873 = vmax.f32 %v1871, %v1872
        %v1874 = vsel %vm1838, %v1786, -inf
        %v1875 = vrot.slane %v1874, 4
        %v1876 = vmax.f32 %v1874, %v1875
        %v1877 = vrot.slane %v1876, 2
        %v1878 = vmax.f32 %v1876, %v1877
        %v1879 = vrot.slane %v1878, 1
        %v1880 = vmax.f32 %v1878, %v1879
        %v1881 = vsel %vm1838, %v1785, -inf
        %v1882 = vrot.slane %v1881, 4
        %v1883 = vmax.f32 %v1881, %v1882
        %v1884 = vrot.slane %v1883, 2
        %v1885 = vmax.f32 %v1883, %v1884
        %v1886 = vrot.slane %v1885, 1
        %v1887 = vmax.f32 %v1885, %v1886
        %v1888 = vsel %vm1838, %v1787, -inf
        %v1889 = vrot.slane %v1888, 4
        %v1890 = vmax.f32 %v1888, %v1889
        %v1891 = vrot.slane %v1890, 2
        %v1892 = vmax.f32 %v1890, %v1891
        %v1893 = vrot.slane %v1892, 1
        %v1894 = vmax.f32 %v1892, %v1893
        %v1895 = vsel %vm1838, %v1795, -inf
        %v1896 = vrot.slane %v1895, 4
        %v1897 = vmax.f32 %v1895, %v1896
        %v1898 = vrot.slane %v1897, 2
        %v1899 = vmax.f32 %v1897, %v1898
        %v1900 = vrot.slane %v1899, 1
        %v1901 = vmax.f32 %v1899, %v1900
        %v1902 = vsel %vm1838, %v1803, -inf
        %v1903 = vrot.slane %v1902, 4
        %v1904 = vmax.f32 %v1902, %v1903
        %v1905 = vrot.slane %v1904, 2
        %v1906 = vmax.f32 %v1904, %v1905
        %v1907 = vrot.slane %v1906, 1
        %v1908 = vmax.f32 %v1906, %v1907
        %v1909 = vsel %vm1838, %v1802, -inf
        %v1910 = vrot.slane %v1909, 4
        %v1911 = vmax.f32 %v1909, %v1910
        %v1912 = vrot.slane %v1911, 2
        %v1913 = vmax.f32 %v1911, %v1912
        %v1914 = vrot.slane %v1913, 1
        %v1915 = vmax.f32 %v1913, %v1914
        %v1916 = vsel %vm1838, %v1804, -inf
        %v1917 = vrot.slane %v1916, 4
        %v1918 = vmax.f32 %v1916, %v1917
        %v1919 = vrot.slane %v1918, 2
        %v1920 = vmax.f32 %v1918, %v1919
        %v1921 = vrot.slane %v1920, 1
        %v1922 = vmax.f32 %v1920, %v1921
        %v1923 = vsel %vm1838, %v1812, -inf
        %v1924 = vrot.slane %v1923, 4
        %v1925 = vmax.f32 %v1923, %v1924
        %v1926 = vrot.slane %v1925, 2
        %v1927 = vmax.f32 %v1925, %v1926
        %v1928 = vrot.slane %v1927, 1
        %v1929 = vmax.f32 %v1927, %v1928
        %v1930 = vsel %vm1838, %v1820, -inf
        %v1931 = vrot.slane %v1930, 4
        %v1932 = vmax.f32 %v1930, %v1931
        %v1933 = vrot.slane %v1932, 2
        %v1934 = vmax.f32 %v1932, %v1933
        %v1935 = vrot.slane %v1934, 1
        %v1936 = vmax.f32 %v1934, %v1935
        %v1937 = vsel %vm1838, %v1819, -inf
        %v1938 = vrot.slane %v1937, 4
        %v1939 = vmax.f32 %v1937, %v1938
        %v1940 = vrot.slane %v1939, 2
        %v1941 = vmax.f32 %v1939, %v1940
        %v1942 = vrot.slane %v1941, 1
        %v1943 = vmax.f32 %v1941, %v1942
        %v1944 = vsel %vm1838, %v1821, -inf
        %v1945 = vrot.slane %v1944, 4
        %v1946 = vmax.f32 %v1944, %v1945
        %v1947 = vrot.slane %v1946, 2
        %v1948 = vmax.f32 %v1946, %v1947
        %v1949 = vrot.slane %v1948, 1
        %v1950 = vmax.f32 %v1948, %v1949
        %1951 = vst.msk [vmem:[#allocation2] sm:$0x3] %vm1838, 0.0
        %1952 = vst.msk [vmem:[#allocation2 + $0x12] sm:$0x3] %vm1838, 0.0
        %v1969 = vsel %vm1465, %v1852, %v1845
        %v1970 = vsel %vm1467, %v1859, %v1969
        %v1971 = vsel %vm1469, %v1866, %v1970
        %v1972 = vsel %vm1471, %v1873, %v1971
        %v1973 = vsel %vm1473, %v1880, %v1972
        %v1974 = vsel %vm1475, %v1887, %v1973
        %v1975 = vsel %vm1477, %v1894, %v1974
        %v1976 = vsel %vm1465, %v1908, %v1901
        %v1977 = vsel %vm1467, %v1915, %v1976
        %v1978 = vsel %vm1469, %v1922, %v1977
        %v1979 = vsel %vm1471, %v1929, %v1978
        %v1980 = vsel %vm1473, %v1936, %v1979
        %v1981 = vsel %vm1475, %v1943, %v1980
        %v1982 = vsel %vm1477, %v1950, %v1981
        %vm1985 = vcmask 130048
        %1986 = vst.msk [vmem:[#allocation2 + $0x2] sm:$0xff] %vm1985, %v1975
        %1987 = vst.msk [vmem:[#allocation2 + $0xa] sm:$0xff] %vm1985, %v1982
        %v1988 = vld [vmem:[#allocation2] sm:$0xff]
        %v1989 = vld [vmem:[#allocation2 + $0x8] sm:$0xff]
        %1990 = vst.msk [vmem:[#allocation3] sm:$0xff] %vm1985, %v1988
        %1991 = vst.msk [vmem:[#allocation3 + $0x18] sm:$0xff] %vm1985, %v1989
        %v1992 = vld [vmem:[#allocation2 + $0x1] sm:$0xff]
        %v1993 = vld [vmem:[#allocation2 + $0x9] sm:$0xff]
        %1996 = vrot.lane.b32.xlu0 %v1992, 16
        %v1997 = vpop.permute.xlu0 %1996
        %1998 = vrot.lane.b32.xlu0 %v1993, 16
        %v1999 = vpop.permute.xlu0 %1998
        %vm2002 = vcmask 261248
        %2003 = vst.msk [vmem:[#allocation3] sm:$0xff] %vm2002, %v1997
        %2004 = vst.msk [vmem:[#allocation3 + $0x18] sm:$0xff] %vm2002, %v1999
        %v2005 = vld [vmem:[#allocation2 + $0x2] sm:$0xff]
        %v2006 = vld [vmem:[#allocation2 + $0xa] sm:$0xff]
        %2009 = vrot.lane.b32.xlu0 %v2005, 32
        %v2010 = vpop.permute.xlu0 %2009
        %2011 = vrot.lane.b32.xlu0 %v2006, 32
        %v2012 = vpop.permute.xlu0 %2011
        %vm2015 = vcmask 392448
        %2016 = vst.msk [vmem:[#allocation3] sm:$0xff] %vm2015, %v2010
        %2017 = vst.msk [vmem:[#allocation3 + $0x18] sm:$0xff] %vm2015, %v2012
        %v2018 = vld [vmem:[#allocation2 + $0x3] sm:$0xff]
        %v2019 = vld [vmem:[#allocation2 + $0xb] sm:$0xff]
        %2022 = vrot.lane.b32.xlu0 %v2018, 48
        %v2023 = vpop.permute.xlu0 %2022
        %2024 = vrot.lane.b32.xlu0 %v2019, 48
        %v2025 = vpop.permute.xlu0 %2024
        %vm2028 = vcmask 523648
        %2029 = vst.msk [vmem:[#allocation3] sm:$0xff] %vm2028, %v2023
        %2030 = vst.msk [vmem:[#allocation3 + $0x18] sm:$0xff] %vm2028, %v2025
        %v2031 = vld [vmem:[#allocation2 + $0x4] sm:$0xff]
        %v2032 = vld [vmem:[#allocation2 + $0xc] sm:$0xff]
        %2035 = vrot.lane.b32.xlu0 %v2031, 64
        %v2036 = vpop.permute.xlu0 %2035
        %2037 = vrot.lane.b32.xlu0 %v2032, 64
        %v2038 = vpop.permute.xlu0 %2037
        %vm2041 = vcmask 654848
        %2042 = vst.msk [vmem:[#allocation3] sm:$0xff] %vm2041, %v2036
        %2043 = vst.msk [vmem:[#allocation3 + $0x18] sm:$0xff] %vm2041, %v2038
        %v2044 = vld [vmem:[#allocation3] sm:$0xff]
        %v2045 = vld [vmem:[#allocation3 + $0x18] sm:$0xff]
        %v2046 = vld [vmem:[%s7] sm:$0xff]
        %v2047 = vld [vmem:[%s7 + $0x8] sm:$0xff]
        %v2048 = vld [vmem:[%s7 + $0x10] sm:$0xff]
        %v2049 = vld [vmem:[%s7 + $0x18] sm:$0xff]
        %v2050 = vld [vmem:[%s7 + $0x20] sm:$0xff]
        %v2051 = vld [vmem:[%s7 + $0x28] sm:$0xff]
        %v2052 = vld [vmem:[%s7 + $0x30] sm:$0xff]
        %v2053 = vld [vmem:[%s7 + $0x38] sm:$0xff]
        %v2054 = vld [vmem:[%s7 + $0x40] sm:$0xff]
        %v2055 = vld [vmem:[%s7 + $0x48] sm:$0xff]
        %vm2056 = vcmask 654336
        %v2058 = vsel %vm2056, %v2044, 0
        %v2061 = vsel %vm2056, %v2045, 0
        %2063 = vmatprep.subr.mxu0 0.0
        %2064 = vmatpush1.msra.mxu0 %v2046
        %2065 = vmatprep.subr.mxu0 0.0
        %2066 = vmatpush1.msra.mxu0 %v2047
        %2067 = vmatprep.subr.mxu0 0.0
        %2068 = vmatpush1.msra.mxu0 %v2048
        %2069 = vmatprep.subr.mxu0 0.0
        %2070 = vmatpush1.msra.mxu0 %v2049
        %2071 = vmatprep.subr.mxu0 0.0
        %2072 = vmatpush1.msra.mxu0 %v2050
        %2073 = vmatprep.subr.mxu0 0.0
        %2074 = vmatpush1.msra.mxu0 %v2051
        %2075 = vmatprep.subr.mxu0 0.0
        %2076 = vmatpush1.msra.mxu0 %v2052
        %2077 = vmatprep.subr.mxu0 0.0
        %2078 = vmatpush1.msra.mxu0 %v2053
        %2079 = vmatprep.subr.mxu0 0.0
        %2080 = vmatpush1.msra.mxu0 %v2054
        %2081 = vmatprep.subr.mxu0 0.0
        %2082 = vmatpush1.msra.mxu0 %v2055
        %2083 = vmatprep.subr.mxu0 0.0
        %2084 = vmatpush1.msra.mxu0 0.0
        %2085 = vmatprep.subr.mxu0 0.0
        %2086 = vmatpush1.msra.mxu0 0.0
        %2087 = vmatprep.subr.mxu0 0.0
        %2088 = vmatpush1.msra.mxu0 0.0
        %2089 = vmatprep.subr.mxu0 0.0
        %2090 = vmatpush1.msra.mxu0 0.0
        %2091 = vmatprep.subr.mxu0 0.0
        %2092 = vmatpush1.msra.mxu0 0.0
        %2093 = vmatprep.subr.mxu0 0.0
        %2094 = vmatpush1.msra.mxu0 0.0
        %2095 = vmatprep.subr.mxu0 0.0
        %2096 = vmatpush1.msra.mxu0 0.0
        %2097 = vmatprep.subr.mxu0 0.0
        %2098 = vmatpush1.msra.mxu0 0.0
        %2099 = vmatprep.subr.mxu0 0.0
        %2100 = vmatpush1.msra.mxu0 0.0
        %2101 = vmatprep.subr.mxu0 0.0
        %2102 = vmatpush1.msra.mxu0 0.0
        %2103 = vmatprep.subr.mxu0 0.0
        %2104 = vmatpush1.msra.mxu0 0.0
        %2105 = vmatprep.subr.mxu0 0.0
        %2106 = vmatpush1.msra.mxu0 0.0
        %2107 = vmatprep.subr.mxu0 0.0
        %2108 = vmatpush1.msra.mxu0 0.0
        %2109 = vmatprep.subr.mxu0 0.0
        %2110 = vmatpush1.msra.mxu0 0.0
        %2111 = vmatprep.subr.mxu0 0.0
        %2112 = vmatpush1.msra.mxu0 0.0
        %2113 = vmatprep.subr.mxu0 0.0
        %2114 = vmatpush1.msra.mxu0 0.0
        %2115 = vmatprep.subr.mxu0 0.0
        %2116 = vmatpush1.msra.mxu0 0.0
        %2117 = vmatprep.subr.mxu0 0.0
        %2118 = vmatpush1.msra.mxu0 0.0
        %2119 = vmatprep.subr.mxu0 0.0
        %2120 = vmatpush1.msra.mxu0 0.0
        %2121 = vmatprep.subr.mxu0 0.0
        %2122 = vmatpush1.msra.mxu0 0.0
        %2123 = vmatprep.subr.mxu0 0.0
        %2124 = vmatpush1.msra.mxu0 0.0
        %2125 = vmatprep.subr.mxu0 0.0
        %2126 = vmatpush1.msra.mxu0 0.0
        %2127 = vmatprep.mubr.f32.mxu0 0.0
        %2128 = vmatmul.mubr.f32.gmra.mrb[0].mxu0 %v2058
        %v2129 = vpop.f32.mrb[0].mxu0
        %v2130 = vadd.f32 0.0, %v2129
        %v2131 = vpop.f32.mrb[0].mxu0
        %2132 = vmatprep.mubr.f32.mxu0 0.0
        %2133 = vmatmul.mubr.f32.gmra.mrb[0].mxu0 %v2061
        %v2134 = vpop.f32.mrb[0].mxu0
        %v2135 = vadd.f32 0.0, %v2134
        %v2136 = vpop.f32.mrb[0].mxu0
        %2137 = vdwg.mxu0
        %v2138 = vld [vmem:[%s8] sm:$0x1]
        %v2140 = vlaneseq
        %v2141 = vshrl.u32 %v2140, 7
        %v2142 = vsub.s32 0, %v2141
        %v2143 = vrot.slane %v2138, %v2142
        %v2145 = vmul.f32 %v2130, %v2143
        %v2146 = vmul.f32 %v2135, %v2143
        %v2147 = vld [vmem:[%s9] sm:$0x1]
        %v2149 = vlaneseq
        %v2150 = vshrl.u32 %v2149, 7
        %v2151 = vsub.s32 0, %v2150
        %v2152 = vrot.slane %v2147, %v2151
        %v2154 = vadd.f32 %v2145, %v2152
        %v2155 = vadd.f32 %v2146, %v2152
        %v2156 = vmax.f32 %v2154, 0.0
        %v2157 = vmax.f32 %v2155, 0.0
        %v2160 = vcombine.high %v2156, %v2156
        %v2162 = vunpack.c.l.s4 1983009808
        %v2163 = vunpack.c.0.s8 %v2162
        %v2164 = vlaneseq
        %v2165 = vshrl.u32 %v2164, 7
        %v2166 = vsub.s32 %v2163, %v2165
        %v2167 = vrot.slane %v2156, %v2166
        %v2169 = vunpack.c.l.s4 1983009808
        %v2170 = vunpack.c.0.s8 %v2169
        %v2171 = vlaneseq
        %v2172 = vshrl.u32 %v2171, 7
        %v2173 = vsub.s32 %v2170, %v2172
        %v2174 = vrot.slane %v2160, %v2173
        %v2175 = vcombine.high %v2167, %v2167
        %v2176 = vcombine.high %v2174, %v2174
        %v2177 = vcombine.high %v2157, %v2157
        %v2179 = vunpack.c.l.s4 1983009808
        %v2180 = vunpack.c.0.s8 %v2179
        %v2181 = vlaneseq
        %v2182 = vshrl.u32 %v2181, 7
        %v2183 = vsub.s32 %v2180, %v2182
        %v2184 = vrot.slane %v2157, %v2183
        %v2186 = vunpack.c.l.s4 1983009808
        %v2187 = vunpack.c.0.s8 %v2186
        %v2188 = vlaneseq
        %v2189 = vshrl.u32 %v2188, 7
        %v2190 = vsub.s32 %v2187, %v2189
        %v2191 = vrot.slane %v2177, %v2190
        %v2192 = vcombine.high %v2184, %v2184
        %v2193 = vcombine.high %v2191, %v2191
        %vm2202 = vcmask 254976
        %v2203 = vsel %vm2202, %v2167, -inf
        %v2204 = vrot.slane %v2203, 4
        %v2205 = vmax.f32 %v2203, %v2204
        %v2206 = vrot.slane %v2205, 2
        %v2207 = vmax.f32 %v2205, %v2206
        %v2208 = vrot.slane %v2207, 1
        %v2209 = vmax.f32 %v2207, %v2208
        %v2210 = vsel %vm2202, %v2175, -inf
        %v2211 = vrot.slane %v2210, 4
        %v2212 = vmax.f32 %v2210, %v2211
        %v2213 = vrot.slane %v2212, 2
        %v2214 = vmax.f32 %v2212, %v2213
        %v2215 = vrot.slane %v2214, 1
        %v2216 = vmax.f32 %v2214, %v2215
        %v2217 = vsel %vm2202, %v2174, -inf
        %v2218 = vrot.slane %v2217, 4
        %v2219 = vmax.f32 %v2217, %v2218
        %v2220 = vrot.slane %v2219, 2
        %v2221 = vmax.f32 %v2219, %v2220
        %v2222 = vrot.slane %v2221, 1
        %v2223 = vmax.f32 %v2221, %v2222
        %v2224 = vsel %vm2202, %v2176, -inf
        %v2225 = vrot.slane %v2224, 4
        %v2226 = vmax.f32 %v2224, %v2225
        %v2227 = vrot.slane %v2226, 2
        %v2228 = vmax.f32 %v2226, %v2227
        %v2229 = vrot.slane %v2228, 1
        %v2230 = vmax.f32 %v2228, %v2229
        %v2231 = vsel %vm2202, %v2184, -inf
        %v2232 = vrot.slane %v2231, 4
        %v2233 = vmax.f32 %v2231, %v2232
        %v2234 = vrot.slane %v2233, 2
        %v2235 = vmax.f32 %v2233, %v2234
        %v2236 = vrot.slane %v2235, 1
        %v2237 = vmax.f32 %v2235, %v2236
        %v2238 = vsel %vm2202, %v2192, -inf
        %v2239 = vrot.slane %v2238, 4
        %v2240 = vmax.f32 %v2238, %v2239
        %v2241 = vrot.slane %v2240, 2
        %v2242 = vmax.f32 %v2240, %v2241
        %v2243 = vrot.slane %v2242, 1
        %v2244 = vmax.f32 %v2242, %v2243
        %v2245 = vsel %vm2202, %v2191, -inf
        %v2246 = vrot.slane %v2245, 4
        %v2247 = vmax.f32 %v2245, %v2246
        %v2248 = vrot.slane %v2247, 2
        %v2249 = vmax.f32 %v2247, %v2248
        %v2250 = vrot.slane %v2249, 1
        %v2251 = vmax.f32 %v2249, %v2250
        %v2252 = vsel %vm2202, %v2193, -inf
        %v2253 = vrot.slane %v2252, 4
        %v2254 = vmax.f32 %v2252, %v2253
        %v2255 = vrot.slane %v2254, 2
        %v2256 = vmax.f32 %v2254, %v2255
        %v2257 = vrot.slane %v2256, 1
        %v2258 = vmax.f32 %v2256, %v2257
        %2259 = vst.msk [vmem:[#allocation2] sm:$0x3] %vm2202, 0.0
        %2260 = vst.msk [vmem:[#allocation2 + $0xa] sm:$0x3] %vm2202, 0.0
        %v2269 = vsel %vm1465, %v2216, %v2209
        %v2270 = vsel %vm1467, %v2223, %v2269
        %v2271 = vsel %vm1469, %v2230, %v2270
        %v2272 = vsel %vm1471, %v2237, %v2271
        %v2273 = vsel %vm1473, %v2244, %v2272
        %v2274 = vsel %vm1475, %v2251, %v2273
        %v2275 = vsel %vm1477, %v2258, %v2274
        %vm2277 = vcmask 261120
        %2278 = vst.msk [vmem:[#allocation2 + $0x2] sm:$0xff] %vm2277, %v2275
        %v2279 = vld [vmem:[#allocation2] sm:$0xff]
        %2280 = vst.msk [vmem:[#allocation3] sm:$0xff] %vm2277, %v2279
        %v2281 = vld [vmem:[#allocation2 + $0x1] sm:$0xff]
        %2283 = vrot.lane.b32.xlu0 %v2281, 32
        %v2284 = vpop.permute.xlu0 %2283
        %vm2286 = vcmask 523520
        %2287 = vst.msk [vmem:[#allocation3] sm:$0xff] %vm2286, %v2284
        %v2288 = vld [vmem:[#allocation2 + $0x2] sm:$0xff]
        %2290 = vrot.lane.b32.xlu0 %v2288, 64
        %v2291 = vpop.permute.xlu0 %2290
        %vm2293 = vcmask 785920
        %2294 = vst.msk [vmem:[#allocation3] sm:$0xff] %vm2293, %v2291
        %v2295 = vld [vmem:[#allocation2 + $0x3] sm:$0xff]
        %2297 = vrot.lane.b32.xlu0 %v2295, 96
        %v2298 = vpop.permute.xlu0 %2297
        %vm2300 = vcmask 1048320
        %2301 = vst.msk [vmem:[#allocation3] sm:$0xff] %vm2300, %v2298
        %v2302 = vld [vmem:[#allocation2 + $0x4] sm:$0xff]
        %2303 = vst.msk [vmem:[#allocation3 + $0x8] sm:$0xff] %vm2277, %v2302
        %v2304 = vld [vmem:[#allocation3] sm:$0xff]
        %v2305 = vld [vmem:[#allocation3 + $0x8] sm:$0xff]
        %v2306 = vld [vmem:[%s10] sm:$0xff]
        %v2307 = vld [vmem:[%s10 + $0x8] sm:$0xff]
        %v2308 = vld [vmem:[%s10 + $0x10] sm:$0xff]
        %v2309 = vld [vmem:[%s10 + $0x18] sm:$0xff]
        %v2310 = vld [vmem:[%s10 + $0x20] sm:$0xff]
        %v2311 = vld [vmem:[%s10 + $0x28] sm:$0xff]
        %v2312 = vld [vmem:[%s10 + $0x30] sm:$0xff]
        %v2313 = vld [vmem:[%s10 + $0x38] sm:$0xff]
        %v2314 = vld [vmem:[%s10 + $0x40] sm:$0xff]
        %v2315 = vld [vmem:[%s10 + $0x48] sm:$0xff]
        %v2316 = vld [vmem:[%s10 + $0x50] sm:$0xff]
        %v2317 = vld [vmem:[%s10 + $0x58] sm:$0xff]
        %v2318 = vld [vmem:[%s10 + $0x60] sm:$0xff]
        %v2319 = vld [vmem:[%s10 + $0x68] sm:$0xff]
        %v2320 = vld [vmem:[%s10 + $0x70] sm:$0xff]
        %v2321 = vld [vmem:[%s10 + $0x78] sm:$0xff]
        %v2322 = vld [vmem:[%s10 + $0x80] sm:$0xff]
        %v2323 = vld [vmem:[%s10 + $0x88] sm:$0xff]
        %v2324 = vld [vmem:[%s10 + $0x90] sm:$0xff]
        %v2325 = vld [vmem:[%s10 + $0x98] sm:$0xff]
        %v2327 = vsel %vm2277, %v2305, 0
        %2329 = vmatprep.subr.mxu0 0.0
        %2330 = vmatpush1.msra.mxu0 %v2306
        %2331 = vmatprep.subr.mxu0 0.0
        %2332 = vmatpush1.msra.mxu0 %v2307
        %2333 = vmatprep.subr.mxu0 0.0
        %2334 = vmatpush1.msra.mxu0 %v2308
        %2335 = vmatprep.subr.mxu0 0.0
        %2336 = vmatpush1.msra.mxu0 %v2309
        %2337 = vmatprep.subr.mxu0 0.0
        %2338 = vmatpush1.msra.mxu0 %v2310
        %2339 = vmatprep.subr.mxu0 0.0
        %2340 = vmatpush1.msra.mxu0 %v2311
        %2341 = vmatprep.subr.mxu0 0.0
        %2342 = vmatpush1.msra.mxu0 %v2312
        %2343 = vmatprep.subr.mxu0 0.0
        %2344 = vmatpush1.msra.mxu0 %v2313
        %2345 = vmatprep.subr.mxu0 0.0
        %2346 = vmatpush1.msra.mxu0 %v2314
        %2347 = vmatprep.subr.mxu0 0.0
        %2348 = vmatpush1.msra.mxu0 %v2315
        %2349 = vmatprep.subr.mxu0 0.0
        %2350 = vmatpush1.msra.mxu0 %v2316
        %2351 = vmatprep.subr.mxu0 0.0
        %2352 = vmatpush1.msra.mxu0 %v2317
        %2353 = vmatprep.subr.mxu0 0.0
        %2354 = vmatpush1.msra.mxu0 %v2318
        %2355 = vmatprep.subr.mxu0 0.0
        %2356 = vmatpush1.msra.mxu0 %v2319
        %2357 = vmatprep.subr.mxu0 0.0
        %2358 = vmatpush1.msra.mxu0 %v2320
        %2359 = vmatprep.subr.mxu0 0.0
        %2360 = vmatpush1.msra.mxu0 %v2321
        %2361 = vmatprep.subr.mxu0 0.0
        %2362 = vmatpush1.msra.mxu0 %v2322
        %2363 = vmatprep.subr.mxu0 0.0
        %2364 = vmatpush1.msra.mxu0 %v2323
        %2365 = vmatprep.subr.mxu0 0.0
        %2366 = vmatpush1.msra.mxu0 %v2324
        %2367 = vmatprep.subr.mxu0 0.0
        %2368 = vmatpush1.msra.mxu0 %v2325
        %2369 = vmatprep.subr.mxu0 0.0
        %2370 = vmatpush1.msra.mxu0 0.0
        %2371 = vmatprep.subr.mxu0 0.0
        %2372 = vmatpush1.msra.mxu0 0.0
        %2373 = vmatprep.subr.mxu0 0.0
        %2374 = vmatpush1.msra.mxu0 0.0
        %2375 = vmatprep.subr.mxu0 0.0
        %2376 = vmatpush1.msra.mxu0 0.0
        %2377 = vmatprep.subr.mxu0 0.0
        %2378 = vmatpush1.msra.mxu0 0.0
        %2379 = vmatprep.subr.mxu0 0.0
        %2380 = vmatpush1.msra.mxu0 0.0
        %2381 = vmatprep.subr.mxu0 0.0
        %2382 = vmatpush1.msra.mxu0 0.0
        %2383 = vmatprep.subr.mxu0 0.0
        %2384 = vmatpush1.msra.mxu0 0.0
        %2385 = vmatprep.subr.mxu0 0.0
        %2386 = vmatpush1.msra.mxu0 0.0
        %2387 = vmatprep.subr.mxu0 0.0
        %2388 = vmatpush1.msra.mxu0 0.0
        %2389 = vmatprep.subr.mxu0 0.0
        %2390 = vmatpush1.msra.mxu0 0.0
        %2391 = vmatprep.subr.mxu0 0.0
        %2392 = vmatpush1.msra.mxu0 0.0
        %2393 = vmatprep.mubr.f32.mxu0 %v2327
        %2394 = vmatmul.mubr.f32.gmra.mrb[0].mxu0 %v2304
        %v2395 = vpop.f32.mrb[0].mxu0
        %v2396 = vadd.f32 0.0, %v2395
        %v2397 = vpop.f32.mrb[0].mxu0
        %2398 = vdwg.mxu0
        %v2399 = vld [vmem:[%s11] sm:$0x1]
        %v2401 = vlaneseq
        %v2402 = vshrl.u32 %v2401, 7
        %v2403 = vsub.s32 0, %v2402
        %v2404 = vrot.slane %v2399, %v2403
        %v2406 = vmul.f32 %v2396, %v2404
        %v2407 = vld [vmem:[%s12] sm:$0x1]
        %v2409 = vlaneseq
        %v2410 = vshrl.u32 %v2409, 7
        %v2411 = vsub.s32 0, %v2410
        %v2412 = vrot.slane %v2407, %v2411
        %v2414 = vadd.f32 %v2406, %v2412
        %v2415 = vmax.f32 %v2414, 0.0
        %v2417 = vcombine.high %v2415, %v2415
        %v2419 = vunpack.c.l.s4 1983009808
        %v2420 = vunpack.c.0.s8 %v2419
        %v2421 = vlaneseq
        %v2422 = vshrl.u32 %v2421, 7
        %v2423 = vsub.s32 %v2420, %v2422
        %v2424 = vrot.slane %v2415, %v2423
        %v2426 = vunpack.c.l.s4 1983009808
        %v2427 = vunpack.c.0.s8 %v2426
        %v2428 = vlaneseq
        %v2429 = vshrl.u32 %v2428, 7
        %v2430 = vsub.s32 %v2427, %v2429
        %v2431 = vrot.slane %v2417, %v2430
        %v2432 = vcombine.high %v2424, %v2424
        %v2433 = vcombine.high %v2431, %v2431
        %vm2438 = vcmask 517120
        %v2439 = vsel %vm2438, %v2424, -inf
        %v2440 = vrot.slane %v2439, 4
        %v2441 = vmax.f32 %v2439, %v2440
        %v2442 = vrot.slane %v2441, 2
        %v2443 = vmax.f32 %v2441, %v2442
        %v2444 = vrot.slane %v2443, 1
        %v2445 = vmax.f32 %v2443, %v2444
        %v2446 = vsel %vm2438, %v2432, -inf
        %v2447 = vrot.slane %v2446, 4
        %v2448 = vmax.f32 %v2446, %v2447
        %v2449 = vrot.slane %v2448, 2
        %v2450 = vmax.f32 %v2448, %v2449
        %v2451 = vrot.slane %v2450, 1
        %v2452 = vmax.f32 %v2450, %v2451
        %v2453 = vsel %vm2438, %v2431, -inf
        %v2454 = vrot.slane %v2453, 4
        %v2455 = vmax.f32 %v2453, %v2454
        %v2456 = vrot.slane %v2455, 2
        %v2457 = vmax.f32 %v2455, %v2456
        %v2458 = vrot.slane %v2457, 1
        %v2459 = vmax.f32 %v2457, %v2458
        %v2460 = vsel %vm2438, %v2433, -inf
        %v2461 = vrot.slane %v2460, 4
        %v2462 = vmax.f32 %v2460, %v2461
        %v2463 = vrot.slane %v2462, 2
        %v2464 = vmax.f32 %v2462, %v2463
        %v2465 = vrot.slane %v2464, 1
        %v2466 = vmax.f32 %v2464, %v2465
        %2467 = vst.msk [vmem:[#allocation2] sm:$0x3] %vm2438, 0.0
        %2468 = vst.msk [vmem:[#allocation2 + $0x6] sm:$0x3] %vm2438, 0.0
        %v2473 = vsel %vm1465, %v2452, %v2445
        %v2474 = vsel %vm1467, %v2459, %v2473
        %v2475 = vsel %vm1469, %v2466, %v2474
        %vm2477 = vcmask 519168
        %2478 = vst.msk [vmem:[#allocation2 + $0x2] sm:$0xf] %vm2477, %v2475
        %v2479 = vld [vmem:[#allocation2] sm:$0xf]
        %2480 = vst.msk [vmem:[#allocation3] sm:$0xf] %vm2477, %v2479
        %v2481 = vld [vmem:[#allocation2 + $0x1] sm:$0xf]
        %2483 = vrot.lane.b32.xlu0 %v2481, 64
        %v2484 = vpop.permute.xlu0 %2483
        %vm2486 = vcmask 1043968
        %2487 = vst.msk [vmem:[#allocation3] sm:$0xf] %vm2486, %v2484
        %v2488 = vld [vmem:[#allocation2 + $0x2] sm:$0xf]
        %2489 = vst.msk [vmem:[#allocation3 + $0x8] sm:$0xf] %vm2477, %v2488
        %v2490 = vld [vmem:[#allocation2 + $0x3] sm:$0xf]
        %2492 = vrot.lane.b32.xlu0 %v2490, 64
        %v2493 = vpop.permute.xlu0 %2492
        %2495 = vst.msk [vmem:[#allocation3 + $0x8] sm:$0xf] %vm2486, %v2493
        %v2496 = vld [vmem:[#allocation2 + $0x4] sm:$0xf]
        %2497 = vst.msk [vmem:[#allocation3 + $0x10] sm:$0xf] %vm2477, %v2496
        %v2498 = vld [vmem:[#allocation3] sm:$0xf]
        %v2499 = vld [vmem:[#allocation3 + $0x8] sm:$0xf]
        %v2500 = vld [vmem:[#allocation3 + $0x10] sm:$0xf]
        %v2501 = vld [vmem:[%s13] sm:$0xff]
        %v2502 = vld [vmem:[%s13 + $0x8] sm:$0xff]
        %v2503 = vld [vmem:[%s13 + $0x10] sm:$0xff]
        %v2504 = vld [vmem:[%s13 + $0x18] sm:$0xff]
        %v2505 = vld [vmem:[%s13 + $0x20] sm:$0xff]
        %v2506 = vld [vmem:[%s13 + $0x28] sm:$0xff]
        %v2507 = vld [vmem:[%s13 + $0x30] sm:$0xff]
        %v2508 = vld [vmem:[%s13 + $0x38] sm:$0xff]
        %v2509 = vld [vmem:[%s13 + $0x40] sm:$0xff]
        %v2510 = vld [vmem:[%s13 + $0x48] sm:$0xff]
        %v2511 = vld [vmem:[%s13 + $0x50] sm:$0xff]
        %v2512 = vld [vmem:[%s13 + $0x58] sm:$0xff]
        %v2513 = vld [vmem:[%s13 + $0x60] sm:$0xff]
        %v2514 = vld [vmem:[%s13 + $0x68] sm:$0xff]
        %v2515 = vld [vmem:[%s13 + $0x70] sm:$0xff]
        %v2516 = vld [vmem:[%s13 + $0x78] sm:$0xff]
        %v2517 = vld [vmem:[%s13 + $0x80] sm:$0xff]
        %v2518 = vld [vmem:[%s13 + $0x88] sm:$0xff]
        %v2519 = vld [vmem:[%s13 + $0x90] sm:$0xff]
        %v2520 = vld [vmem:[%s13 + $0x98] sm:$0xff]
        %v2521 = vld [vmem:[%s13 + $0xa0] sm:$0xff]
        %v2522 = vld [vmem:[%s13 + $0xa8] sm:$0xff]
        %v2523 = vld [vmem:[%s13 + $0xb0] sm:$0xff]
        %v2524 = vld [vmem:[%s13 + $0xb8] sm:$0xff]
        %v2525 = vld [vmem:[%s13 + $0xc0] sm:$0xff]
        %v2526 = vld [vmem:[%s13 + $0xc8] sm:$0xff]
        %v2527 = vld [vmem:[%s13 + $0xd0] sm:$0xff]
        %v2528 = vld [vmem:[%s13 + $0xd8] sm:$0xff]
        %v2529 = vld [vmem:[%s13 + $0xe0] sm:$0xff]
        %v2530 = vld [vmem:[%s13 + $0xe8] sm:$0xff]
        %v2531 = vld [vmem:[%s13 + $0xf0] sm:$0xff]
        %v2532 = vld [vmem:[%s13 + $0xf8] sm:$0xff]
        %v2533 = vld [vmem:[%s13 + $0x100] sm:$0xff]
        %v2534 = vld [vmem:[%s13 + $0x108] sm:$0xff]
        %v2535 = vld [vmem:[%s13 + $0x110] sm:$0xff]
        %v2536 = vld [vmem:[%s13 + $0x118] sm:$0xff]
        %v2537 = vld [vmem:[%s13 + $0x120] sm:$0xff]
        %v2538 = vld [vmem:[%s13 + $0x128] sm:$0xff]
        %v2539 = vld [vmem:[%s13 + $0x130] sm:$0xff]
        %v2540 = vld [vmem:[%s13 + $0x138] sm:$0xff]
        %vm2541 = vcmask 523264
        %v2543 = vsel %vm2541, %v2500, 0
        %2545 = vmatprep.subr.mxu0 0.0
        %2546 = vmatpush1.msra.mxu0 %v2501
        %2547 = vmatprep.subr.mxu0 0.0
        %2548 = vmatpush1.msra.mxu0 %v2502
        %2549 = vmatprep.subr.mxu0 0.0
        %2550 = vmatpush1.msra.mxu0 %v2503
        %2551 = vmatprep.subr.mxu0 0.0
        %2552 = vmatpush1.msra.mxu0 %v2504
        %2553 = vmatprep.subr.mxu0 0.0
        %2554 = vmatpush1.msra.mxu0 %v2505
        %2555 = vmatprep.subr.mxu0 0.0
        %2556 = vmatpush1.msra.mxu0 %v2506
        %2557 = vmatprep.subr.mxu0 0.0
        %2558 = vmatpush1.msra.mxu0 %v2507
        %2559 = vmatprep.subr.mxu0 0.0
        %2560 = vmatpush1.msra.mxu0 %v2508
        %2561 = vmatprep.subr.mxu0 0.0
        %2562 = vmatpush1.msra.mxu0 %v2509
        %2563 = vmatprep.subr.mxu0 0.0
        %2564 = vmatpush1.msra.mxu0 %v2510
        %2565 = vmatprep.subr.mxu0 0.0
        %2566 = vmatpush1.msra.mxu0 %v2511
        %2567 = vmatprep.subr.mxu0 0.0
        %2568 = vmatpush1.msra.mxu0 %v2512
        %2569 = vmatprep.subr.mxu0 0.0
        %2570 = vmatpush1.msra.mxu0 %v2513
        %2571 = vmatprep.subr.mxu0 0.0
        %2572 = vmatpush1.msra.mxu0 %v2514
        %2573 = vmatprep.subr.mxu0 0.0
        %2574 = vmatpush1.msra.mxu0 %v2515
        %2575 = vmatprep.subr.mxu0 0.0
        %2576 = vmatpush1.msra.mxu0 %v2516
        %2577 = vmatprep.subr.mxu0 0.0
        %2578 = vmatpush1.msra.mxu0 %v2517
        %2579 = vmatprep.subr.mxu0 0.0
        %2580 = vmatpush1.msra.mxu0 %v2518
        %2581 = vmatprep.subr.mxu0 0.0
        %2582 = vmatpush1.msra.mxu0 %v2519
        %2583 = vmatprep.subr.mxu0 0.0
        %2584 = vmatpush1.msra.mxu0 %v2520
        %2585 = vmatprep.subr.mxu0 0.0
        %2586 = vmatpush1.msra.mxu0 %v2521
        %2587 = vmatprep.subr.mxu0 0.0
        %2588 = vmatpush1.msra.mxu0 %v2522
        %2589 = vmatprep.subr.mxu0 0.0
        %2590 = vmatpush1.msra.mxu0 %v2523
        %2591 = vmatprep.subr.mxu0 0.0
        %2592 = vmatpush1.msra.mxu0 %v2524
        %2593 = vmatprep.subr.mxu0 0.0
        %2594 = vmatpush1.msra.mxu0 %v2525
        %2595 = vmatprep.subr.mxu0 0.0
        %2596 = vmatpush1.msra.mxu0 %v2526
        %2597 = vmatprep.subr.mxu0 0.0
        %2598 = vmatpush1.msra.mxu0 %v2527
        %2599 = vmatprep.subr.mxu0 0.0
        %2600 = vmatpush1.msra.mxu0 %v2528
        %2601 = vmatprep.subr.mxu0 0.0
        %2602 = vmatpush1.msra.mxu0 %v2529
        %2603 = vmatprep.subr.mxu0 0.0
        %2604 = vmatpush1.msra.mxu0 %v2530
        %2605 = vmatprep.subr.mxu0 0.0
        %2606 = vmatpush1.msra.mxu0 %v2531
        %2607 = vmatprep.subr.mxu0 0.0
        %2608 = vmatpush1.msra.mxu0 %v2532
        %2609 = vmatprep.mubr.f32.mxu0 %v2499
        %2610 = vmatmul.mubr.f32.gmra.mrb[0].mxu0 %v2498
        %v2611 = vpop.f32.mrb[0].mxu0
        %v2612 = vadd.f32 0.0, %v2611
        %v2613 = vpop.f32.mrb[0].mxu0
        %2614 = vdwg.mxu0
        %2615 = vmatprep.subr.mxu0 0.0
        %2616 = vmatpush1.msra.mxu0 %v2533
        %2617 = vmatprep.subr.mxu0 0.0
        %2618 = vmatpush1.msra.mxu0 %v2534
        %2619 = vmatprep.subr.mxu0 0.0
        %2620 = vmatpush1.msra.mxu0 %v2535
        %2621 = vmatprep.subr.mxu0 0.0
        %2622 = vmatpush1.msra.mxu0 %v2536
        %2623 = vmatprep.subr.mxu0 0.0
        %2624 = vmatpush1.msra.mxu0 %v2537
        %2625 = vmatprep.subr.mxu0 0.0
        %2626 = vmatpush1.msra.mxu0 %v2538
        %2627 = vmatprep.subr.mxu0 0.0
        %2628 = vmatpush1.msra.mxu0 %v2539
        %2629 = vmatprep.subr.mxu0 0.0
        %2630 = vmatpush1.msra.mxu0 %v2540
        %2631 = vmatprep.subr.mxu0 0.0
        %2632 = vmatpush1.msra.mxu0 0.0
        %2633 = vmatprep.subr.mxu0 0.0
        %2634 = vmatpush1.msra.mxu0 0.0
        %2635 = vmatprep.subr.mxu0 0.0
        %2636 = vmatpush1.msra.mxu0 0.0
        %2637 = vmatprep.subr.mxu0 0.0
        %2638 = vmatpush1.msra.mxu0 0.0
        %2639 = vmatprep.subr.mxu0 0.0
        %2640 = vmatpush1.msra.mxu0 0.0
        %2641 = vmatprep.subr.mxu0 0.0
        %2642 = vmatpush1.msra.mxu0 0.0
        %2643 = vmatprep.subr.mxu0 0.0
        %2644 = vmatpush1.msra.mxu0 0.0
        %2645 = vmatprep.subr.mxu0 0.0
        %2646 = vmatpush1.msra.mxu0 0.0
        %2647 = vmatprep.subr.mxu0 0.0
        %2648 = vmatpush1.msra.mxu0 0.0
        %2649 = vmatprep.subr.mxu0 0.0
        %2650 = vmatpush1.msra.mxu0 0.0
        %2651 = vmatprep.subr.mxu0 0.0
        %2652 = vmatpush1.msra.mxu0 0.0
        %2653 = vmatprep.subr.mxu0 0.0
        %2654 = vmatpush1.msra.mxu0 0.0
        %2655 = vmatprep.subr.mxu0 0.0
        %2656 = vmatpush1.msra.mxu0 0.0
        %2657 = vmatprep.subr.mxu0 0.0
        %2658 = vmatpush1.msra.mxu0 0.0
        %2659 = vmatprep.subr.mxu0 0.0
        %2660 = vmatpush1.msra.mxu0 0.0
        %2661 = vmatprep.subr.mxu0 0.0
        %2662 = vmatpush1.msra.mxu0 0.0
        %2663 = vmatprep.subr.mxu0 0.0
        %2664 = vmatpush1.msra.mxu0 0.0
        %2665 = vmatprep.subr.mxu0 0.0
        %2666 = vmatpush1.msra.mxu0 0.0
        %2667 = vmatprep.subr.mxu0 0.0
        %2668 = vmatpush1.msra.mxu0 0.0
        %2669 = vmatprep.subr.mxu0 0.0
        %2670 = vmatpush1.msra.mxu0 0.0
        %2671 = vmatprep.subr.mxu0 0.0
        %2672 = vmatpush1.msra.mxu0 0.0
        %2673 = vmatprep.subr.mxu0 0.0
        %2674 = vmatpush1.msra.mxu0 0.0
        %2675 = vmatprep.subr.mxu0 0.0
        %2676 = vmatpush1.msra.mxu0 0.0
        %2677 = vmatprep.subr.mxu0 0.0
        %2678 = vmatpush1.msra.mxu0 0.0
        %2679 = vmatprep.mubr.f32.mxu0 0.0
        %2680 = vmatmul.mubr.f32.gmra.mrb[0].mxu0 %v2543
        %v2681 = vpop.f32.mrb[0].mxu0
        %v2682 = vadd.f32 %v2612, %v2681
        %v2683 = vpop.f32.mrb[0].mxu0
        %2684 = vdwg.mxu0
        %v2685 = vld [vmem:[%s14] sm:$0x1]
        %v2687 = vlaneseq
        %v2688 = vshrl.u32 %v2687, 7
        %v2689 = vsub.s32 0, %v2688
        %v2690 = vrot.slane %v2685, %v2689
        %v2692 = vmul.f32 %v2682, %v2690
        %v2693 = vld [vmem:[%s15] sm:$0x1]
        %v2695 = vlaneseq
        %v2696 = vshrl.u32 %v2695, 7
        %v2697 = vsub.s32 0, %v2696
        %v2698 = vrot.slane %v2693, %v2697
        %v2700 = vadd.f32 %v2692, %v2698
        %v2701 = vmax.f32 %v2700, 0.0
        %v2704 = vunpack.c.l.s4 1983009808
        %v2705 = vunpack.c.0.s8 %v2704
        %v2706 = vlaneseq
        %v2707 = vshrl.u32 %v2706, 7
        %v2708 = vsub.s32 %v2705, %v2707
        %v2709 = vrot.slane %v2701, %v2708
        %v2710 = vcombine.high %v2709, %v2709
        %vm2713 = vcmask 1041408
        %v2714 = vsel %vm2713, %v2709, -inf
        %v2715 = vrot.slane %v2714, 4
        %v2716 = vmax.f32 %v2714, %v2715
        %v2717 = vrot.slane %v2716, 2
        %v2718 = vmax.f32 %v2716, %v2717
        %v2719 = vrot.slane %v2718, 1
        %v2720 = vmax.f32 %v2718, %v2719
        %v2721 = vsel %vm2713, %v2710, -inf
        %v2722 = vrot.slane %v2721, 4
        %v2723 = vmax.f32 %v2721, %v2722
        %v2724 = vrot.slane %v2723, 2
        %v2725 = vmax.f32 %v2723, %v2724
        %v2726 = vrot.slane %v2725, 1
        %v2727 = vmax.f32 %v2725, %v2726
        %v2728 = vld [vmem:[%s17] sm:$0x1]
        %v2729 = vld [vmem:[%s16] sm:$0xff]
        %v2730 = vld [vmem:[%s16 + $0x8] sm:$0xff]
        %v2731 = vld [vmem:[%s16 + $0x10] sm:$0xff]
        %v2732 = vld [vmem:[%s16 + $0x18] sm:$0xff]
        %v2733 = vld [vmem:[%s16 + $0x20] sm:$0xff]
        %v2734 = vld [vmem:[%s16 + $0x28] sm:$0xff]
        %v2735 = vld [vmem:[%s16 + $0x30] sm:$0xff]
        %v2736 = vld [vmem:[%s16 + $0x38] sm:$0xff]
        %v2737 = vld [vmem:[%s16 + $0x40] sm:$0xff]
        %v2738 = vld [vmem:[%s16 + $0x48] sm:$0xff]
        %v2739 = vld [vmem:[%s16 + $0x50] sm:$0xff]
        %v2740 = vld [vmem:[%s16 + $0x58] sm:$0xff]
        %v2741 = vld [vmem:[%s16 + $0x60] sm:$0xff]
        %v2742 = vld [vmem:[%s16 + $0x68] sm:$0xff]
        %v2743 = vld [vmem:[%s16 + $0x70] sm:$0xff]
        %v2744 = vld [vmem:[%s16 + $0x78] sm:$0xff]
        %2745 = vmatprep.subr.mxu0 0.0
        %2746 = vmatpush1.msra.mxu0 %v2729
        %2747 = vmatprep.subr.mxu0 0.0
        %2748 = vmatpush1.msra.mxu0 %v2730
        %2749 = vmatprep.subr.mxu0 0.0
        %2750 = vmatpush1.msra.mxu0 %v2731
        %2751 = vmatprep.subr.mxu0 0.0
        %2752 = vmatpush1.msra.mxu0 %v2732
        %2753 = vmatprep.subr.mxu0 0.0
        %2754 = vmatpush1.msra.mxu0 %v2733
        %2755 = vmatprep.subr.mxu0 0.0
        %2756 = vmatpush1.msra.mxu0 %v2734
        %2757 = vmatprep.subr.mxu0 0.0
        %2758 = vmatpush1.msra.mxu0 %v2735
        %2759 = vmatprep.subr.mxu0 0.0
        %2760 = vmatpush1.msra.mxu0 %v2736
        %2761 = vmatprep.subr.mxu0 0.0
        %2762 = vmatpush1.msra.mxu0 %v2737
        %2763 = vmatprep.subr.mxu0 0.0
        %2764 = vmatpush1.msra.mxu0 %v2738
        %2765 = vmatprep.subr.mxu0 0.0
        %2766 = vmatpush1.msra.mxu0 %v2739
        %2767 = vmatprep.subr.mxu0 0.0
        %2768 = vmatpush1.msra.mxu0 %v2740
        %2769 = vmatprep.subr.mxu0 0.0
        %2770 = vmatpush1.msra.mxu0 %v2741
        %2771 = vmatprep.subr.mxu0 0.0
        %2772 = vmatpush1.msra.mxu0 %v2742
        %2773 = vmatprep.subr.mxu0 0.0
        %2774 = vmatpush1.msra.mxu0 %v2743
        %2775 = vmatprep.subr.mxu0 0.0
        %2776 = vmatpush1.msra.mxu0 %v2744
        %2777 = vmatprep.subr.mxu0 0.0
        %2778 = vmatpush1.msra.mxu0 0.0
        %2779 = vmatprep.subr.mxu0 0.0
        %2780 = vmatpush1.msra.mxu0 0.0
        %2781 = vmatprep.subr.mxu0 0.0
        %2782 = vmatpush1.msra.mxu0 0.0
        %2783 = vmatprep.subr.mxu0 0.0
        %2784 = vmatpush1.msra.mxu0 0.0
        %2785 = vmatprep.subr.mxu0 0.0
        %2786 = vmatpush1.msra.mxu0 0.0
        %2787 = vmatprep.subr.mxu0 0.0
        %2788 = vmatpush1.msra.mxu0 0.0
        %2789 = vmatprep.subr.mxu0 0.0
        %2790 = vmatpush1.msra.mxu0 0.0
        %2791 = vmatprep.subr.mxu0 0.0
        %2792 = vmatpush1.msra.mxu0 0.0
        %2793 = vmatprep.subr.mxu0 0.0
        %2794 = vmatpush1.msra.mxu0 0.0
        %2795 = vmatprep.subr.mxu0 0.0
        %2796 = vmatpush1.msra.mxu0 0.0
        %2797 = vmatprep.subr.mxu0 0.0
        %2798 = vmatpush1.msra.mxu0 0.0
        %2799 = vmatprep.subr.mxu0 0.0
        %2800 = vmatpush1.msra.mxu0 0.0
        %2801 = vmatprep.subr.mxu0 0.0
        %2802 = vmatpush1.msra.mxu0 0.0
        %2803 = vmatprep.subr.mxu0 0.0
        %2804 = vmatpush1.msra.mxu0 0.0
        %2805 = vmatprep.subr.mxu0 0.0
        %2806 = vmatpush1.msra.mxu0 0.0
        %2807 = vmatprep.subr.mxu0 0.0
        %2808 = vmatpush1.msra.mxu0 0.0
        %2809 = vmatprep.mubr.f32.mxu0 0.0
        %2810 = vmatmul.mubr.f32.gmra.mrb[0].mxu0 %v2720
        %v2811 = vpop.f32.mrb[0].mxu0
        %v2812 = vadd.f32 0.0, %v2811
        %v2813 = vpop.f32.mrb[0].mxu0
        %2814 = vdwg.mxu0
        %v2815 = vadd.f32 %v2728, %v2812
        %s2816 = scalar_lea.vmem %s16, 128
        %v2817 = vld [vmem:[%s2816] sm:$0xff]
        %v2818 = vld [vmem:[%s2816 + $0x8] sm:$0xff]
        %v2819 = vld [vmem:[%s2816 + $0x10] sm:$0xff]
        %v2820 = vld [vmem:[%s2816 + $0x18] sm:$0xff]
        %v2821 = vld [vmem:[%s2816 + $0x20] sm:$0xff]
        %v2822 = vld [vmem:[%s2816 + $0x28] sm:$0xff]
        %v2823 = vld [vmem:[%s2816 + $0x30] sm:$0xff]
        %v2824 = vld [vmem:[%s2816 + $0x38] sm:$0xff]
        %v2825 = vld [vmem:[%s2816 + $0x40] sm:$0xff]
        %v2826 = vld [vmem:[%s2816 + $0x48] sm:$0xff]
        %v2827 = vld [vmem:[%s2816 + $0x50] sm:$0xff]
        %v2828 = vld [vmem:[%s2816 + $0x58] sm:$0xff]
        %v2829 = vld [vmem:[%s2816 + $0x60] sm:$0xff]
        %v2830 = vld [vmem:[%s2816 + $0x68] sm:$0xff]
        %v2831 = vld [vmem:[%s2816 + $0x70] sm:$0xff]
        %v2832 = vld [vmem:[%s2816 + $0x78] sm:$0xff]
        %2833 = vmatprep.subr.mxu0 0.0
        %2834 = vmatpush1.msra.mxu0 %v2817
        %2835 = vmatprep.subr.mxu0 0.0
        %2836 = vmatpush1.msra.mxu0 %v2818
        %2837 = vmatprep.subr.mxu0 0.0
        %2838 = vmatpush1.msra.mxu0 %v2819
        %2839 = vmatprep.subr.mxu0 0.0
        %2840 = vmatpush1.msra.mxu0 %v2820
        %2841 = vmatprep.subr.mxu0 0.0
        %2842 = vmatpush1.msra.mxu0 %v2821
        %2843 = vmatprep.subr.mxu0 0.0
        %2844 = vmatpush1.msra.mxu0 %v2822
        %2845 = vmatprep.subr.mxu0 0.0
        %2846 = vmatpush1.msra.mxu0 %v2823
        %2847 = vmatprep.subr.mxu0 0.0
        %2848 = vmatpush1.msra.mxu0 %v2824
        %2849 = vmatprep.subr.mxu0 0.0
        %2850 = vmatpush1.msra.mxu0 %v2825
        %2851 = vmatprep.subr.mxu0 0.0
        %2852 = vmatpush1.msra.mxu0 %v2826
        %2853 = vmatprep.subr.mxu0 0.0
        %2854 = vmatpush1.msra.mxu0 %v2827
        %2855 = vmatprep.subr.mxu0 0.0
        %2856 = vmatpush1.msra.mxu0 %v2828
        %2857 = vmatprep.subr.mxu0 0.0
        %2858 = vmatpush1.msra.mxu0 %v2829
        %2859 = vmatprep.subr.mxu0 0.0
        %2860 = vmatpush1.msra.mxu0 %v2830
        %2861 = vmatprep.subr.mxu0 0.0
        %2862 = vmatpush1.msra.mxu0 %v2831
        %2863 = vmatprep.subr.mxu0 0.0
        %2864 = vmatpush1.msra.mxu0 %v2832
        %2865 = vmatprep.subr.mxu0 0.0
        %2866 = vmatpush1.msra.mxu0 0.0
        %2867 = vmatprep.subr.mxu0 0.0
        %2868 = vmatpush1.msra.mxu0 0.0
        %2869 = vmatprep.subr.mxu0 0.0
        %2870 = vmatpush1.msra.mxu0 0.0
        %2871 = vmatprep.subr.mxu0 0.0
        %2872 = vmatpush1.msra.mxu0 0.0
        %2873 = vmatprep.subr.mxu0 0.0
        %2874 = vmatpush1.msra.mxu0 0.0
        %2875 = vmatprep.subr.mxu0 0.0
        %2876 = vmatpush1.msra.mxu0 0.0
        %2877 = vmatprep.subr.mxu0 0.0
        %2878 = vmatpush1.msra.mxu0 0.0
        %2879 = vmatprep.subr.mxu0 0.0
        %2880 = vmatpush1.msra.mxu0 0.0
        %2881 = vmatprep.subr.mxu0 0.0
        %2882 = vmatpush1.msra.mxu0 0.0
        %2883 = vmatprep.subr.mxu0 0.0
        %2884 = vmatpush1.msra.mxu0 0.0
        %2885 = vmatprep.subr.mxu0 0.0
        %2886 = vmatpush1.msra.mxu0 0.0
        %2887 = vmatprep.subr.mxu0 0.0
        %2888 = vmatpush1.msra.mxu0 0.0
        %2889 = vmatprep.subr.mxu0 0.0
        %2890 = vmatpush1.msra.mxu0 0.0
        %2891 = vmatprep.subr.mxu0 0.0
        %2892 = vmatpush1.msra.mxu0 0.0
        %2893 = vmatprep.subr.mxu0 0.0
        %2894 = vmatpush1.msra.mxu0 0.0
        %2895 = vmatprep.subr.mxu0 0.0
        %2896 = vmatpush1.msra.mxu0 0.0
        %2897 = vmatprep.mubr.f32.mxu0 0.0
        %2898 = vmatmul.mubr.f32.gmra.mrb[0].mxu0 %v2727
        %v2899 = vpop.f32.mrb[0].mxu0
        %v2900 = vadd.f32 0.0, %v2899
        %v2901 = vpop.f32.mrb[0].mxu0
        %2902 = vdwg.mxu0
        %v2903 = vadd.f32 %v2815, %v2900
        %v2904 = vld [vmem:[%s18] sm:$0xff]
        %v2905 = vld [vmem:[%s18 + $0x8] sm:$0xff]
        %v2906 = vld [vmem:[%s18 + $0x10] sm:$0xff]
        %v2907 = vld [vmem:[%s18 + $0x18] sm:$0xff]
        %v2908 = vld [vmem:[%s18 + $0x20] sm:$0xff]
        %v2909 = vld [vmem:[%s18 + $0x28] sm:$0xff]
        %v2910 = vld [vmem:[%s18 + $0x30] sm:$0xff]
        %v2911 = vld [vmem:[%s18 + $0x38] sm:$0xff]
        %v2912 = vld [vmem:[%s19] sm:$0x1]
        %v2914 = vsel %vm2541, %v2903, 0
        %2916 = vmatprep.subr.mxu0 0.0
        %2917 = vmatpush1.msra.mxu0 %v2904
        %2918 = vmatprep.subr.mxu0 0.0
        %2919 = vmatpush1.msra.mxu0 %v2905
        %2920 = vmatprep.subr.mxu0 0.0
        %2921 = vmatpush1.msra.mxu0 %v2906
        %2922 = vmatprep.subr.mxu0 0.0
        %2923 = vmatpush1.msra.mxu0 %v2907
        %2924 = vmatprep.subr.mxu0 0.0
        %2925 = vmatpush1.msra.mxu0 %v2908
        %2926 = vmatprep.subr.mxu0 0.0
        %2927 = vmatpush1.msra.mxu0 %v2909
        %2928 = vmatprep.subr.mxu0 0.0
        %2929 = vmatpush1.msra.mxu0 %v2910
        %2930 = vmatprep.subr.mxu0 0.0
        %2931 = vmatpush1.msra.mxu0 %v2911
        %2932 = vmatprep.subr.mxu0 0.0
        %2933 = vmatpush1.msra.mxu0 0.0
        %2934 = vmatprep.subr.mxu0 0.0
        %2935 = vmatpush1.msra.mxu0 0.0
        %2936 = vmatprep.subr.mxu0 0.0
        %2937 = vmatpush1.msra.mxu0 0.0
        %2938 = vmatprep.subr.mxu0 0.0
        %2939 = vmatpush1.msra.mxu0 0.0
        %2940 = vmatprep.subr.mxu0 0.0
        %2941 = vmatpush1.msra.mxu0 0.0
        %2942 = vmatprep.subr.mxu0 0.0
        %2943 = vmatpush1.msra.mxu0 0.0
        %2944 = vmatprep.subr.mxu0 0.0
        %2945 = vmatpush1.msra.mxu0 0.0
        %2946 = vmatprep.subr.mxu0 0.0
        %2947 = vmatpush1.msra.mxu0 0.0
        %2948 = vmatprep.subr.mxu0 0.0
        %2949 = vmatpush1.msra.mxu0 0.0
        %2950 = vmatprep.subr.mxu0 0.0
        %2951 = vmatpush1.msra.mxu0 0.0
        %2952 = vmatprep.subr.mxu0 0.0
        %2953 = vmatpush1.msra.mxu0 0.0
        %2954 = vmatprep.subr.mxu0 0.0
        %2955 = vmatpush1.msra.mxu0 0.0
        %2956 = vmatprep.subr.mxu0 0.0
        %2957 = vmatpush1.msra.mxu0 0.0
        %2958 = vmatprep.subr.mxu0 0.0
        %2959 = vmatpush1.msra.mxu0 0.0
        %2960 = vmatprep.subr.mxu0 0.0
        %2961 = vmatpush1.msra.mxu0 0.0
        %2962 = vmatprep.subr.mxu0 0.0
        %2963 = vmatpush1.msra.mxu0 0.0
        %2964 = vmatprep.subr.mxu0 0.0
        %2965 = vmatpush1.msra.mxu0 0.0
        %2966 = vmatprep.subr.mxu0 0.0
        %2967 = vmatpush1.msra.mxu0 0.0
        %2968 = vmatprep.subr.mxu0 0.0
        %2969 = vmatpush1.msra.mxu0 0.0
        %2970 = vmatprep.subr.mxu0 0.0
        %2971 = vmatpush1.msra.mxu0 0.0
        %2972 = vmatprep.subr.mxu0 0.0
        %2973 = vmatpush1.msra.mxu0 0.0
        %2974 = vmatprep.subr.mxu0 0.0
        %2975 = vmatpush1.msra.mxu0 0.0
        %2976 = vmatprep.subr.mxu0 0.0
        %2977 = vmatpush1.msra.mxu0 0.0
        %2978 = vmatprep.subr.mxu0 0.0
        %2979 = vmatpush1.msra.mxu0 0.0
        %2980 = vmatprep.mubr.f32.mxu0 0.0
        %2981 = vmatmul.mubr.f32.gmra.mrb[0].mxu0 %v2914
        %v2982 = vpop.f32.mrb[0].mxu0
        %v2983 = vadd.f32 %v2912, %v2982
        %v2984 = vpop.f32.mrb[0].mxu0
        %2985 = vdwg.mxu0
        %vm2986 = vcmask 73728
        %2987 = vst.msk [vmem:[%s621] sm:$0x1] %vm2986, %v2983
        %s2988 = sand.u32 %s467, 1
        %s2989 = scalar_lea.sflag [#allocation5], %s2988
        %s2990 = sand.u32 %s467, 1
        %s2991 = scalar_lea.vmem [#allocation4], %s2990
        // Predicated region
        $region101: #{complex_cnn_forward.1} parent=99 // pred_check
          %p2992 = pneg %p477
        $region102: #{complex_cnn_forward.1} parent=99 // pred_check_branch
          %2994 = sbr.rel (%p2992) target = $region104
        $region103: #{complex_cnn_forward.1} parent=99 // pred_region
          %s2996 = ssub.s32 16, 16
          %2997 = vsyncadd %s2989, %s2996
          %s2998 = smul.addr %s34, 16
          %s2999 = scalar_lea.hbm %s20, %s2998
          %s3001 = sshll.u32 %s2991, 4
          %s3002 = int_to_ptr.vmem [resolvable:$true] %s3001
          %3004 = dma.vmem_to_hbm [thread:$0]  %s3002, 16, %s2999, %s2989
        $region104: #{complex_cnn_forward.1} parent=99 // pred_fallthru
          _
      $region100: #{complex_cnn_forward.1} parent=5 // pred_fallthru
        _
      %p3005 = scmp.le.s32.totalorder 2, %s29
      // Predicated region
      $region105: #{complex_cnn_forward.1} parent=5 // pred_check
        %p3006 = pneg %p3005
      $region106: #{complex_cnn_forward.1} parent=5 // pred_check_branch
        %3008 = sbr.rel (%p3006) target = $region108
      $region107: #{complex_cnn_forward.1} parent=5 // pred_region
        %s3009 = ssub.s32 %s29, 2
        // Predicated region
        $region109: #{complex_cnn_forward.1} parent=107 // pred_check
          %p3010 = pneg %p483
        $region110: #{complex_cnn_forward.1} parent=107 // pred_check_branch
          %3012 = sbr.rel (%p3010) target = $region112
        $region111: #{complex_cnn_forward.1} parent=107 // pred_region
          %s3013 = sand.u32 %s468, 1
          %s3014 = scalar_lea.sflag [#allocation5], %s3013
          %s3015 = sand.u32 %s468, 1
          %s3016 = scalar_lea.vmem [#allocation4], %s3015
          %3017 = dma.done %s3014, 16
        $region112: #{complex_cnn_forward.1} parent=107 // pred_fallthru
          _
      $region108: #{complex_cnn_forward.1} parent=5 // pred_fallthru
        _
    $region6: #{complex_cnn_forward.1} parent=1 // loop_footer
      %s33 = sadd.s32 1, %s29
    $region7: #{complex_cnn_forward.1} parent=1 // loop_footer_branch
      %28 = sbr.rel target = $region3
    $region8: #{complex_cnn_forward.1} parent=1 // loop_exit
      _
    %3018 = vsyncpa [#allocation5], 1
    %s3019 = scalar_lea.sflag [#allocation5], 1
    %3020 = vsyncpa %s3019, 1

</llo_original>
